<compile_context>
chip_gen: v7x
topology: tpu7x:2x2x1
jax: 0.10.0
libtpu: 0.0.40
codegen_flags: <defaults>
</compile_context>

<pallas_src>
import functools

import numpy as np
import jax
import jax.numpy as jnp
from jax.experimental import pallas as pl
from jax.experimental.pallas import tpu as pltpu


_NN_VMEM_LIMIT = 48 * 1024 * 1024


def _full_spec(shape):
    n = len(shape)
    return pl.BlockSpec(shape, lambda i, _n=n: (0,) * _n)


def _pick_block(total, candidates):
    for c in candidates:
        if c <= total and total % c == 0:
            return c
    return total


# ----------------------------------------------------------------------------
# Kernel 1: fused conv3x3(stride s, pad 1) + bias + AvgPool2d(3, 1, 1)
# ----------------------------------------------------------------------------
def _conv_pool_kernel(a_ref, w_ref, b_ref, o_ref, pad_sc, *, B, Ho, Wo, Cout):
    # a_ref: [B*Ho*Wo, 9*Cin] im2col patches, w_ref: [9*Cin, Cout], b_ref: [1, Cout]
    conv = jnp.dot(a_ref[...], w_ref[...], preferred_element_type=jnp.float32)
    conv = conv + b_ref[...]                                   # [B*Ho*Wo, Cout]
    conv4 = conv.reshape(B, Ho, Wo, Cout)                      # leading-dim split only

    # Zero-padded conv output lives in a VMEM scratch so the 3x3 average pool
    # (count_include_pad=True) can be done as 9 shifted reads, all in-kernel.
    # One big windowed store per batch element (not per row).
    pad_sc[...] = jnp.zeros_like(pad_sc)
    for b in range(B):
        pad_sc[b, 1:Ho + 1, 1:Wo + 1, :] = conv4[b]

    acc = jnp.zeros((B, Ho, Wo, Cout), jnp.float32)
    for dy in range(3):
        for dx in range(3):
            acc = acc + pad_sc[:, dy:dy + Ho, dx:dx + Wo, :]
    o_ref[...] = acc * (1.0 / 9.0)


def conv3x3_bias_avgpool(x, w, b, stride):
    """AvgPool2d(3,1,1)(Conv2d(Cin,Cout,3,stride,padding=1)(x)), NHWC input."""
    B, H, W, Cin = x.shape
    Cout = w.shape[-1]
    Ho = (H + 2 - 3) // stride + 1
    Wo = (W + 2 - 3) // stride + 1

    # im2col (strided tap extraction) stays in XLA; the matmul, bias and the
    # pooling epilogue are fused in a single Pallas call.
    xp = jnp.pad(x, ((0, 0), (1, 1), (1, 1), (0, 0)))
    taps = []
    for dy in range(3):
        for dx in range(3):
            taps.append(xp[:, dy:dy + stride * (Ho - 1) + 1:stride,
                           dx:dx + stride * (Wo - 1) + 1:stride, :])
    patches = jnp.concatenate(taps, axis=-1).reshape(B * Ho * Wo, 9 * Cin)
    wm = w.reshape(9 * Cin, Cout)                               # (dy, dx, cin) order

    kernel = functools.partial(_conv_pool_kernel, B=B, Ho=Ho, Wo=Wo, Cout=Cout)
    return pl.pallas_call(
        kernel,
        out_shape=jax.ShapeDtypeStruct((B, Ho, Wo, Cout), jnp.float32),
        grid=(1,),
        in_specs=[_full_spec(patches.shape), _full_spec(wm.shape),
                  _full_spec((1, Cout))],
        out_specs=_full_spec((B, Ho, Wo, Cout)),
        scratch_shapes=[pltpu.VMEM((B, Ho + 2, Wo + 2, Cout), jnp.float32)],
    )(patches, wm, b.reshape(1, Cout))


# ----------------------------------------------------------------------------
# Kernel 2: streamed 1-NN search (running min/argmin on squared distances)
# ----------------------------------------------------------------------------
def _nn_min_kernel(e_ref, m_ref, e2_ref, m2_ref, s_ref, l_ref,
                   min_sc, arg_sc, *, bm):
    j = pl.program_id(1)

    @pl.when(j == 0)
    def _():
        min_sc[...] = jnp.full_like(min_sc, jnp.inf)
        arg_sc[...] = jnp.zeros_like(arg_sc)

    # bf16 cross term on the MXU, f32 accumulation.
    cross = jax.lax.dot_general(
        e_ref[...], m_ref[...], (((1,), (1,)), ((), ())),
        preferred_element_type=jnp.float32)                    # [bn, bm]
    d2 = jnp.maximum(e2_ref[...] + m2_ref[...] - 2.0 * cross, 0.0)

    blk_min = jnp.min(d2, axis=1, keepdims=True)               # [bn, 1]
    col = jax.lax.broadcasted_iota(jnp.int32, d2.shape, 1) + j * bm
    big = jnp.int32(np.iinfo(np.int32).max)
    blk_arg = jnp.min(jnp.where(d2 <= blk_min, col, big), axis=1, keepdims=True)

    better = blk_min < min_sc[...]
    arg_sc[...] = jnp.where(better, blk_arg, arg_sc[...])
    min_sc[...] = jnp.where(better, blk_min, min_sc[...])

    @pl.when(j == pl.num_programs(1) - 1)
    def _():
        s_ref[...] = jnp.sqrt(min_sc[...])                     # sqrt only of [bn,1]
        l_ref[...] = arg_sc[...]


def nearest_neighbor_min(embedding, memory_bank_bf16, m2):
    """Euclidean 1-NN of each embedding row vs the bank. Returns (dist[N], idx[N])."""
    n, d = embedding.shape
    m = memory_bank_bf16.shape[0]
    e2 = jnp.sum(embedding * embedding, axis=1, keepdims=True)  # [N, 1] f32
    e_bf = embedding.astype(jnp.bfloat16)

    bn = _pick_block(n, (512, 256, 128, 64, 32, 16, 8))
    bm = _pick_block(m, (1024, 512, 256, 128))
    kernel = functools.partial(_nn_min_kernel, bm=bm)
    scores, locs = pl.pallas_call(
        kernel,
        out_shape=(jax.ShapeDtypeStruct((n, 1), jnp.float32),
                   jax.ShapeDtypeStruct((n, 1), jnp.int32)),
        grid=(n // bn, m // bm),
        in_specs=[pl.BlockSpec((bn, d), lambda i, j: (i, 0)),
                  pl.BlockSpec((bm, d), lambda i, j: (j, 0)),
                  pl.BlockSpec((bn, 1), lambda i, j: (i, 0)),
                  pl.BlockSpec((1, bm), lambda i, j: (0, j))],
        out_specs=(pl.BlockSpec((bn, 1), lambda i, j: (i, 0)),
                   pl.BlockSpec((bn, 1), lambda i, j: (i, 0))),
        scratch_shapes=[pltpu.VMEM((bn, 1), jnp.float32),
                        pltpu.VMEM((bn, 1), jnp.int32)],
        compiler_params=pltpu.CompilerParams(
            dimension_semantics=("parallel", "arbitrary"),
            vmem_limit_bytes=_NN_VMEM_LIMIT),
    )(e_bf, memory_bank_bf16, e2, m2)
    return scores[:, 0], locs[:, 0]


# ----------------------------------------------------------------------------
# Kernel 3: streamed top-k (smallest) neighbour indices for anomaly scoring
# ----------------------------------------------------------------------------
def _nn_topk_kernel(q_ref, m_ref, q2_ref, m2_ref, idx_ref,
                    candv_sc, candi_sc, *, bm, k):
    j = pl.program_id(0)

    @pl.when(j == 0)
    def _():
        candv_sc[...] = jnp.full_like(candv_sc, jnp.inf)
        candi_sc[...] = jnp.zeros_like(candi_sc)

    cross = jax.lax.dot_general(
        q_ref[...], m_ref[...], (((1,), (1,)), ((), ())),
        preferred_element_type=jnp.float32)                    # [B, bm]
    d2 = jnp.maximum(q2_ref[...] + m2_ref[...] - 2.0 * cross, 0.0)
    col = jax.lax.broadcasted_iota(jnp.int32, d2.shape, 1) + j * bm

    # Candidate buffer = [running top-k | this bank tile].
    candv_sc[:, k:] = d2
    candi_sc[:, k:] = col

    cand_v = candv_sc[...]
    cand_i = candi_sc[...]
    pos = jax.lax.broadcasted_iota(jnp.int32, cand_v.shape, 1)
    big = jnp.int32(np.iinfo(np.int32).max)
    for kk in range(k):                                        # ascending selection
        cur_min = jnp.min(cand_v, axis=1, keepdims=True)
        first = jnp.min(jnp.where(cand_v <= cur_min, pos, big),
                        axis=1, keepdims=True)
        sel = pos == first
        chosen = jnp.sum(jnp.where(sel, cand_i, 0), axis=1, keepdims=True)
        candv_sc[:, kk:kk + 1] = cur_min
        candi_sc[:, kk:kk + 1] = chosen
        cand_v = jnp.where(sel, jnp.inf, cand_v)

    @pl.when(j == pl.num_programs(0) - 1)
    def _():
        idx_ref[...] = candi_sc[:, :k]


def nearest_neighbor_topk(query_bf16, memory_bank_bf16, q2, m2, k):
    """Indices of the k smallest euclidean distances (ascending), streamed over M."""
    b, d = query_bf16.shape
    m = memory_bank_bf16.shape[0]
    bm = _pick_block(m, (1024, 512, 256, 128))
    assert k <= bm and k <= m, "num_neighbors must not exceed bank / tile size"
    kernel = functools.partial(_nn_topk_kernel, bm=bm, k=k)
    return pl.pallas_call(
        kernel,
        out_shape=jax.ShapeDtypeStruct((b, k), jnp.int32),
        grid=(m // bm,),
        in_specs=[pl.BlockSpec((b, d), lambda j: (0, 0)),
                  pl.BlockSpec((bm, d), lambda j: (j, 0)),
                  pl.BlockSpec((b, 1), lambda j: (0, 0)),
                  pl.BlockSpec((1, bm), lambda j: (0, j))],
        out_specs=pl.BlockSpec((b, k), lambda j: (0, 0)),
        scratch_shapes=[pltpu.VMEM((b, k + bm), jnp.float32),
                        pltpu.VMEM((b, k + bm), jnp.int32)],
        compiler_params=pltpu.CompilerParams(
            dimension_semantics=("arbitrary",),
            vmem_limit_bytes=_NN_VMEM_LIMIT),
    )(query_bf16, memory_bank_bf16, q2, m2)


# ----------------------------------------------------------------------------
# Kernel 4: fused nearest-upsample + separable Gaussian blur as two matmuls
# ----------------------------------------------------------------------------
def _upsample_blur_kernel(p_ref, av_ref, bd_ref, o_ref):
    # p_ref: [Hp, B*Wp], av_ref: [H, Hp], bd_ref: [B*Wp, B*W] (block-diagonal)
    t = jnp.dot(av_ref[...], p_ref[...], preferred_element_type=jnp.float32)
    o_ref[...] = jnp.dot(t, bd_ref[...], preferred_element_type=jnp.float32)


def _gaussian_matrix(n, weights):
    """[n, n] banded matrix applying a 1-D gaussian with 'reflect' border."""
    k = len(weights)
    pad = (k - 1) // 2
    mat = np.zeros((n, n), np.float64)
    for i in range(n):
        for t in range(k):
            j = i - pad + t
            while j < 0 or j >= n:                 # reflect (no edge repeat)
                if j < 0:
                    j = -j
                if j >= n:
                    j = 2 * (n - 1) - j
            mat[i, j] += weights[t]
    return mat


# ----------------------------------------------------------------------------
# PatchcoreModel forward pass on top of the Pallas kernels
# ----------------------------------------------------------------------------
class PatchcoreModelPallas:
    def __init__(self, input_size=(64, 64), layers=("layer2", "layer3"),
                 num_neighbors=9, sigma=4.0, key=jax.random.PRNGKey(1)):
        self.input_size = tuple(input_size)
        self.layers = list(layers)
        self.num_neighbors = num_neighbors

        # TODO(synk): the pretrained wide_resnet50_2 FeatureExtractor is replaced
        # by deterministic synthetic strided 3x3 conv stages (one per layer) with
        # the reference spatial strides (layer2 -> /8, layer3 -> /16).
        self.layer_cfg = {"layer2": (16, 8), "layer3": (32, 16)}  # (Cout, stride)
        c_in = 3
        keys = jax.random.split(key, 2 * len(self.layers))
        self.params = {}
        for i, layer in enumerate(self.layers):
            c_out, _ = self.layer_cfg[layer]
            w = jax.random.normal(keys[2 * i], (3, 3, c_in, c_out), jnp.float32) * 0.1
            b = jax.random.normal(keys[2 * i + 1], (c_out,), jnp.float32) * 0.01
            self.params[layer] = (w, b)

        # AnomalyMapGenerator gaussian kernel: size = 2*int(4*sigma+0.5)+1, sigma=4
        ks = 2 * int(4.0 * sigma + 0.5) + 1
        xs = np.arange(ks, dtype=np.float64) - (ks - 1) / 2.0
        g = np.exp(-(xs ** 2) / (2.0 * sigma ** 2))
        self.gauss1d = g / g.sum()
        self._blur_mats_cache = {}

    # -- feature extraction: fused conv + bias + avg pool per layer ----------
    def _extract_features(self, x_nhwc):
        feats = {}
        for layer in self.layers:
            w, b = self.params[layer]
            _, stride = self.layer_cfg[layer]
            feats[layer] = conv3x3_bias_avgpool(x_nhwc, w, b, stride)
        return feats

    # -- generate_embedding (nearest upsample + channel concat) --------------
    def generate_embedding(self, features):
        embeddings = features[self.layers[0]]                   # [B, H0, W0, C0]
        _, h0, w0, _ = embeddings.shape
        for layer in self.layers[1:]:
            f = features[layer]
            _, h, w, _ = f.shape
            rows = (jnp.arange(h0) * h) // h0                   # nearest
            cols = (jnp.arange(w0) * w) // w0
            f_up = f[:, rows][:, :, cols]
            embeddings = jnp.concatenate([embeddings, f_up], axis=-1)
        return embeddings

    # -- compute_anomaly_score ------------------------------------------------
    def compute_anomaly_score(self, patch_scores, locations, embedding,
                              memory_bank, memory_bank_bf16, m2):
        if self.num_neighbors == 1:
            return jnp.max(patch_scores, axis=1)
        batch, num_patches = patch_scores.shape
        batch_idx = jnp.arange(batch)
        max_patches = jnp.argmax(patch_scores, axis=1)
        emb = embedding.reshape(batch, num_patches, -1)
        max_patch_feats = emb[batch_idx, max_patches]           # [B, D]
        score = patch_scores[batch_idx, max_patches]            # [B]
        nn_index = locations[batch_idx, max_patches]            # [B]
        nn_sample_bf16 = memory_bank_bf16[nn_index]             # [B, D] bf16
        q2 = m2[0, nn_index][:, None]                           # [B, 1] f32 (reused norms)
        support = nearest_neighbor_topk(                        # Pallas streamed top-k
            nn_sample_bf16, memory_bank_bf16, q2, m2, self.num_neighbors)
        support_feats = memory_bank[support]                    # [B, k, D] f32
        diff = max_patch_feats[:, None, :] - support_feats
        distances = jnp.sqrt(jnp.maximum(jnp.sum(diff * diff, axis=-1), 0.0))
        weights = (1.0 - jax.nn.softmax(distances, axis=1))[:, 0]
        return weights * score

    # -- anomaly map generator: fused upsample + gaussian blur ---------------
    def _blur_mats(self, batch, hp, wp):
        cache_key = (batch, hp, wp)
        if cache_key not in self._blur_mats_cache:
            h, w = self.input_size
            g_h = _gaussian_matrix(h, self.gauss1d)             # [H, H]
            g_w = _gaussian_matrix(w, self.gauss1d)             # [W, W]
            rows = (np.arange(h) * hp) // h                     # nearest upsample
            cols = (np.arange(w) * wp) // w
            u_v = np.zeros((h, hp), np.float64)
            u_v[np.arange(h), rows] = 1.0
            u_h = np.zeros((w, wp), np.float64)
            u_h[np.arange(w), cols] = 1.0
            a_v = g_h @ u_v                                     # [H, Hp]
            b_h_t = (g_w @ u_h).T                               # [Wp, W]
            bd = np.zeros((batch * wp, batch * w), np.float64)
            for b in range(batch):
                bd[b * wp:(b + 1) * wp, b * w:(b + 1) * w] = b_h_t
            self._blur_mats_cache[cache_key] = (
                jnp.asarray(a_v, jnp.float32), jnp.asarray(bd, jnp.float32))
        return self._blur_mats_cache[cache_key]

    def anomaly_map_generator(self, patch_scores_bhw):          # [B, Hp, Wp]
        batch, hp, wp = patch_scores_bhw.shape
        h, w = self.input_size
        a_v, bd = self._blur_mats(batch, hp, wp)
        # Lane-dense slab [Hp, B*Wp] in, [H, B*W] out.
        p2 = jnp.transpose(patch_scores_bhw, (1, 0, 2)).reshape(hp, batch * wp)
        out2 = pl.pallas_call(
            _upsample_blur_kernel,
            out_shape=jax.ShapeDtypeStruct((h, batch * w), jnp.float32),
            grid=(1,),
            in_specs=[_full_spec(p2.shape), _full_spec(a_v.shape),
                      _full_spec(bd.shape)],
            out_specs=_full_spec((h, batch * w)),
        )(p2, a_v, bd)
        amap = jnp.transpose(out2.reshape(h, batch, w), (1, 0, 2))
        return amap[:, None]                                    # [B, 1, H, W]

    # -- forward ---------------------------------------------------------------
    def forward(self, input_tensor_nchw, memory_bank, training=False):
        x = jnp.transpose(input_tensor_nchw, (0, 2, 3, 1))      # NCHW -> NHWC
        features = self._extract_features(x)                    # conv+pool fused
        embedding_map = self.generate_embedding(features)       # [B, Hp, Wp, E]
        batch, hp, wp, e_dim = embedding_map.shape
        embedding = embedding_map.reshape(-1, e_dim)            # reshape_embedding
        if training:
            return embedding

        memory_bank_bf16 = memory_bank.astype(jnp.bfloat16)     # streamed in bf16
        m2 = jnp.sum(memory_bank * memory_bank, axis=1)[None, :]  # hoisted norms

        scores, locs = nearest_neighbor_min(embedding, memory_bank_bf16, m2)
        patch_scores = scores.reshape(batch, -1)
        locations = locs.reshape(batch, -1)
        anomaly_score = self.compute_anomaly_score(
            patch_scores, locations, embedding, memory_bank, memory_bank_bf16, m2)
        anomaly_map = self.anomaly_map_generator(
            patch_scores.reshape(batch, hp, wp))
        return anomaly_map, anomaly_score

    # TODO(synk): subsample_embedding / KCenterGreedy coreset sampling is a
    # training-time routine (not part of forward) and is not implemented; the
    # memory bank is supplied externally.


# ----------------------------------------------------------------------------
if __name__ == "__main__":
    key = jax.random.PRNGKey(0)
    kx, km = jax.random.split(key)

    B, C, H, W = 2, 3, 64, 64                     # sigma=4 -> 33-tap blur, needs >=33 px
    x = jax.random.normal(kx, (B, C, H, W), jnp.float32)

    model = PatchcoreModelPallas(input_size=(H, W),
                                 layers=("layer2", "layer3"),
                                 num_neighbors=9,
                                 key=jax.random.PRNGKey(1))

    embed_dim = 16 + 32                           # layer2 + layer3 channels
    memory_bank = jax.random.normal(km, (64, embed_dim), jnp.float32)

    fwd = jax.jit(lambda inp, mb: model.forward(inp, mb, training=False))
    anomaly_map, anomaly_score = fwd(x, memory_bank)
    jax.block_until_ready((anomaly_map, anomaly_score))

    assert anomaly_map.shape == (B, 1, H, W)
    assert anomaly_score.shape == (B,)
    assert bool(jnp.all(jnp.isfinite(anomaly_map)))
    assert bool(jnp.all(jnp.isfinite(anomaly_score)))
    print("KERNEL_OK")
</pallas_src>

<mosaic_0001>
module attributes {stable_mosaic.version = 11 : i64} {
  func.func @_conv_pool_kernel(%arg0: i32, %arg1: memref<128x27xf32, #tpu.memory_space<vmem>>, %arg2: memref<27x16xf32, #tpu.memory_space<vmem>>, %arg3: memref<1x16xf32, #tpu.memory_space<vmem>>, %arg4: memref<2x8x8x16xf32, #tpu.memory_space<vmem>>, %arg5: memref<2x10x10x16xf32, #tpu.memory_space<vmem>>) attributes {dimension_semantics = [#tpu.dimension_semantics<arbitrary>], iteration_bounds = array<i64: 1>, scalar_prefetch = 0 : i64, scratch_operands = 1 : i64, tpu.core_type = #tpu.core_type<tc>, window_params = [{pipeline_mode = #tpu.pipeline_mode<synchronous>, transform_indices = @transform_0, window_bounds = array<i64: 128, 27>}, {pipeline_mode = #tpu.pipeline_mode<synchronous>, transform_indices = @transform_1, window_bounds = array<i64: 27, 16>}, {pipeline_mode = #tpu.pipeline_mode<synchronous>, transform_indices = @transform_2, window_bounds = array<i64: 1, 16>}, {pipeline_mode = #tpu.pipeline_mode<synchronous>, transform_indices = @transform_3, window_bounds = array<i64: 2, 8, 8, 16>}]} {
    %c0 = arith.constant 0 : index
    %c0_0 = arith.constant 0 : index
    %0 = vector.load %arg1[%c0, %c0_0] : memref<128x27xf32, #tpu.memory_space<vmem>>, vector<128x27xf32>
    %c0_1 = arith.constant 0 : index
    %c0_2 = arith.constant 0 : index
    %1 = vector.load %arg2[%c0_1, %c0_2] : memref<27x16xf32, #tpu.memory_space<vmem>>, vector<27x16xf32>
    %cst = arith.constant dense<0.000000e+00> : vector<128x16xf32>
    %2 = tpu.matmul %0, %1, %cst {dimension_numbers = #tpu.dot_dimension_numbers<[1], [0], [0], [1], [0, 0, 1, 1], [], []>} : vector<128x27xf32>, vector<27x16xf32>, vector<128x16xf32> -> vector<128x16xf32>
    %c0_3 = arith.constant 0 : index
    %c0_4 = arith.constant 0 : index
    %3 = vector.load %arg3[%c0_3, %c0_4] : memref<1x16xf32, #tpu.memory_space<vmem>>, vector<1x16xf32>
    %4 = vector.broadcast %3 : vector<1x16xf32> to vector<128x16xf32>
    %5 = arith.addf %2, %4 : vector<128x16xf32>
    %6 = vector.shape_cast %5 : vector<128x16xf32> to vector<2x8x8x16xf32>
    %cst_5 = arith.constant 0.000000e+00 : f32
    %7 = vector.broadcast %cst_5 : f32 to vector<2x10x10x16xf32>
    %c0_6 = arith.constant 0 : index
    %c0_7 = arith.constant 0 : index
    %c0_8 = arith.constant 0 : index
    %c0_9 = arith.constant 0 : index
    %8 = vector.load %arg5[%c0_6, %c0_7, %c0_8, %c0_9] : memref<2x10x10x16xf32, #tpu.memory_space<vmem>>, vector<2x10x10x16xf32>
    tpu.vector_store %arg5[%c0_6, %c0_7, %c0_8, %c0_9], %7 {strides = array<i32>} : memref<2x10x10x16xf32, #tpu.memory_space<vmem>>, vector<2x10x10x16xf32>,
    %9 = vector.extract_strided_slice %6 {offsets = [0, 0, 0, 0], sizes = [1, 8, 8, 16], strides = [1, 1, 1, 1]} : vector<2x8x8x16xf32> to vector<1x8x8x16xf32>
    %10 = vector.shape_cast %9 : vector<1x8x8x16xf32> to vector<8x8x16xf32>
    %c0_10 = arith.constant 0 : index
    %c1 = arith.constant 1 : index
    %c1_11 = arith.constant 1 : index
    %c0_12 = arith.constant 0 : index
    %11 = vector.load %arg5[%c0_10, %c1, %c1_11, %c0_12] : memref<2x10x10x16xf32, #tpu.memory_space<vmem>>, vector<1x8x8x16xf32>
    %12 = vector.shape_cast %11 : vector<1x8x8x16xf32> to vector<8x8x16xf32>
    %13 = vector.shape_cast %10 : vector<8x8x16xf32> to vector<1x8x8x16xf32>
    tpu.vector_store %arg5[%c0_10, %c1, %c1_11, %c0_12], %13 {strides = array<i32>} : memref<2x10x10x16xf32, #tpu.memory_space<vmem>>, vector<1x8x8x16xf32>,
    %14 = vector.extract_strided_slice %6 {offsets = [1, 0, 0, 0], sizes = [1, 8, 8, 16], strides = [1, 1, 1, 1]} : vector<2x8x8x16xf32> to vector<1x8x8x16xf32>
    %15 = vector.shape_cast %14 : vector<1x8x8x16xf32> to vector<8x8x16xf32>
    %c1_13 = arith.constant 1 : index
    %c1_14 = arith.constant 1 : index
    %c1_15 = arith.constant 1 : index
    %c0_16 = arith.constant 0 : index
    %16 = vector.load %arg5[%c1_13, %c1_14, %c1_15, %c0_16] : memref<2x10x10x16xf32, #tpu.memory_space<vmem>>, vector<1x8x8x16xf32>
    %17 = vector.shape_cast %16 : vector<1x8x8x16xf32> to vector<8x8x16xf32>
    %18 = vector.shape_cast %15 : vector<8x8x16xf32> to vector<1x8x8x16xf32>
    tpu.vector_store %arg5[%c1_13, %c1_14, %c1_15, %c0_16], %18 {strides = array<i32>} : memref<2x10x10x16xf32, #tpu.memory_space<vmem>>, vector<1x8x8x16xf32>,
    %cst_17 = arith.constant 0.000000e+00 : f32
    %19 = vector.broadcast %cst_17 : f32 to vector<2x8x8x16xf32>
    %c0_18 = arith.constant 0 : index
    %c0_19 = arith.constant 0 : index
    %c0_20 = arith.constant 0 : index
    %c0_21 = arith.constant 0 : index
    %20 = vector.load %arg5[%c0_18, %c0_19, %c0_20, %c0_21] : memref<2x10x10x16xf32, #tpu.memory_space<vmem>>, vector<2x8x8x16xf32>
    %21 = arith.addf %19, %20 : vector<2x8x8x16xf32>
    %c0_22 = arith.constant 0 : index
    %c0_23 = arith.constant 0 : index
    %c1_24 = arith.constant 1 : index
    %c0_25 = arith.constant 0 : index
    %22 = vector.load %arg5[%c0_22, %c0_23, %c1_24, %c0_25] : memref<2x10x10x16xf32, #tpu.memory_space<vmem>>, vector<2x8x8x16xf32>
    %23 = arith.addf %21, %22 : vector<2x8x8x16xf32>
    %c0_26 = arith.constant 0 : index
    %c0_27 = arith.constant 0 : index
    %c2 = arith.constant 2 : index
    %c0_28 = arith.constant 0 : index
    %24 = vector.load %arg5[%c0_26, %c0_27, %c2, %c0_28] : memref<2x10x10x16xf32, #tpu.memory_space<vmem>>, vector<2x8x8x16xf32>
    %25 = arith.addf %23, %24 : vector<2x8x8x16xf32>
    %c0_29 = arith.constant 0 : index
    %c1_30 = arith.constant 1 : index
    %c0_31 = arith.constant 0 : index
    %c0_32 = arith.constant 0 : index
    %26 = vector.load %arg5[%c0_29, %c1_30, %c0_31, %c0_32] : memref<2x10x10x16xf32, #tpu.memory_space<vmem>>, vector<2x8x8x16xf32>
    %27 = arith.addf %25, %26 : vector<2x8x8x16xf32>
    %c0_33 = arith.constant 0 : index
    %c1_34 = arith.constant 1 : index
    %c1_35 = arith.constant 1 : index
    %c0_36 = arith.constant 0 : index
    %28 = vector.load %arg5[%c0_33, %c1_34, %c1_35, %c0_36] : memref<2x10x10x16xf32, #tpu.memory_space<vmem>>, vector<2x8x8x16xf32>
    %29 = arith.addf %27, %28 : vector<2x8x8x16xf32>
    %c0_37 = arith.constant 0 : index
    %c1_38 = arith.constant 1 : index
    %c2_39 = arith.constant 2 : index
    %c0_40 = arith.constant 0 : index
    %30 = vector.load %arg5[%c0_37, %c1_38, %c2_39, %c0_40] : memref<2x10x10x16xf32, #tpu.memory_space<vmem>>, vector<2x8x8x16xf32>
    %31 = arith.addf %29, %30 : vector<2x8x8x16xf32>
    %c0_41 = arith.constant 0 : index
    %c2_42 = arith.constant 2 : index
    %c0_43 = arith.constant 0 : index
    %c0_44 = arith.constant 0 : index
    %32 = vector.load %arg5[%c0_41, %c2_42, %c0_43, %c0_44] : memref<2x10x10x16xf32, #tpu.memory_space<vmem>>, vector<2x8x8x16xf32>
    %33 = arith.addf %31, %32 : vector<2x8x8x16xf32>
    %c0_45 = arith.constant 0 : index
    %c2_46 = arith.constant 2 : index
    %c1_47 = arith.constant 1 : index
    %c0_48 = arith.constant 0 : index
    %34 = vector.load %arg5[%c0_45, %c2_46, %c1_47, %c0_48] : memref<2x10x10x16xf32, #tpu.memory_space<vmem>>, vector<2x8x8x16xf32>
    %35 = arith.addf %33, %34 : vector<2x8x8x16xf32>
    %c0_49 = arith.constant 0 : index
    %c2_50 = arith.constant 2 : index
    %c2_51 = arith.constant 2 : index
    %c0_52 = arith.constant 0 : index
    %36 = vector.load %arg5[%c0_49, %c2_50, %c2_51, %c0_52] : memref<2x10x10x16xf32, #tpu.memory_space<vmem>>, vector<2x8x8x16xf32>
    %37 = arith.addf %35, %36 : vector<2x8x8x16xf32>
    %cst_53 = arith.constant 0.111111112 : f32
    %38 = vector.broadcast %cst_53 : f32 to vector<2x8x8x16xf32>
    %39 = arith.mulf %37, %38 : vector<2x8x8x16xf32>
    %c0_54 = arith.constant 0 : index
    %c0_55 = arith.constant 0 : index
    %c0_56 = arith.constant 0 : index
    %c0_57 = arith.constant 0 : index
    %40 = vector.load %arg4[%c0_54, %c0_55, %c0_56, %c0_57] : memref<2x8x8x16xf32, #tpu.memory_space<vmem>>, vector<2x8x8x16xf32>
    tpu.vector_store %arg4[%c0_54, %c0_55, %c0_56, %c0_57], %39 {strides = array<i32>} : memref<2x8x8x16xf32, #tpu.memory_space<vmem>>, vector<2x8x8x16xf32>,
    return
  }
  func.func @transform_0(%arg0: i32) -> (i32, i32) {
    %c0_i32 = arith.constant 0 : i32
    %c0_i32_0 = arith.constant 0 : i32
    %c0_i32_1 = arith.constant 0 : i32
    return %c0_i32, %c0_i32_0 : i32, i32
  }
  func.func @transform_1(%arg0: i32) -> (i32, i32) {
    %c0_i32 = arith.constant 0 : i32
    %c0_i32_0 = arith.constant 0 : i32
    %c0_i32_1 = arith.constant 0 : i32
    return %c0_i32, %c0_i32_0 : i32, i32
  }
  func.func @transform_2(%arg0: i32) -> (i32, i32) {
    %c0_i32 = arith.constant 0 : i32
    %c0_i32_0 = arith.constant 0 : i32
    %c0_i32_1 = arith.constant 0 : i32
    return %c0_i32, %c0_i32_0 : i32, i32
  }
  func.func @transform_3(%arg0: i32) -> (i32, i32, i32, i32) {
    %c0_i32 = arith.constant 0 : i32
    %c0_i32_0 = arith.constant 0 : i32
    %c0_i32_1 = arith.constant 0 : i32
    %c0_i32_2 = arith.constant 0 : i32
    %c0_i32_3 = arith.constant 0 : i32
    return %c0_i32, %c0_i32_0, %c0_i32_1, %c0_i32_2 : i32, i32, i32, i32
  }
}

module attributes {stable_mosaic.version = 11 : i64} {
  func.func @_conv_pool_kernel(%arg0: i32, %arg1: memref<32x27xf32, #tpu.memory_space<vmem>>, %arg2: memref<27x32xf32, #tpu.memory_space<vmem>>, %arg3: memref<1x32xf32, #tpu.memory_space<vmem>>, %arg4: memref<2x4x4x32xf32, #tpu.memory_space<vmem>>, %arg5: memref<2x6x6x32xf32, #tpu.memory_space<vmem>>) attributes {dimension_semantics = [#tpu.dimension_semantics<arbitrary>], iteration_bounds = array<i64: 1>, scalar_prefetch = 0 : i64, scratch_operands = 1 : i64, tpu.core_type = #tpu.core_type<tc>, window_params = [{pipeline_mode = #tpu.pipeline_mode<synchronous>, transform_indices = @transform_0, window_bounds = array<i64: 32, 27>}, {pipeline_mode = #tpu.pipeline_mode<synchronous>, transform_indices = @transform_1, window_bounds = array<i64: 27, 32>}, {pipeline_mode = #tpu.pipeline_mode<synchronous>, transform_indices = @transform_2, window_bounds = array<i64: 1, 32>}, {pipeline_mode = #tpu.pipeline_mode<synchronous>, transform_indices = @transform_3, window_bounds = array<i64: 2, 4, 4, 32>}]} {
    %c0 = arith.constant 0 : index
    %c0_0 = arith.constant 0 : index
    %0 = vector.load %arg1[%c0, %c0_0] : memref<32x27xf32, #tpu.memory_space<vmem>>, vector<32x27xf32>
    %c0_1 = arith.constant 0 : index
    %c0_2 = arith.constant 0 : index
    %1 = vector.load %arg2[%c0_1, %c0_2] : memref<27x32xf32, #tpu.memory_space<vmem>>, vector<27x32xf32>
    %cst = arith.constant dense<0.000000e+00> : vector<32x32xf32>
    %2 = tpu.matmul %0, %1, %cst {dimension_numbers = #tpu.dot_dimension_numbers<[1], [0], [0], [1], [0, 0, 1, 1], [], []>} : vector<32x27xf32>, vector<27x32xf32>, vector<32x32xf32> -> vector<32x32xf32>
    %c0_3 = arith.constant 0 : index
    %c0_4 = arith.constant 0 : index
    %3 = vector.load %arg3[%c0_3, %c0_4] : memref<1x32xf32, #tpu.memory_space<vmem>>, vector<1x32xf32>
    %4 = vector.broadcast %3 : vector<1x32xf32> to vector<32x32xf32>
    %5 = arith.addf %2, %4 : vector<32x32xf32>
    %6 = vector.shape_cast %5 : vector<32x32xf32> to vector<2x4x4x32xf32>
    %cst_5 = arith.constant 0.000000e+00 : f32
    %7 = vector.broadcast %cst_5 : f32 to vector<2x6x6x32xf32>
    %c0_6 = arith.constant 0 : index
    %c0_7 = arith.constant 0 : index
    %c0_8 = arith.constant 0 : index
    %c0_9 = arith.constant 0 : index
    %8 = vector.load %arg5[%c0_6, %c0_7, %c0_8, %c0_9] : memref<2x6x6x32xf32, #tpu.memory_space<vmem>>, vector<2x6x6x32xf32>
    tpu.vector_store %arg5[%c0_6, %c0_7, %c0_8, %c0_9], %7 {strides = array<i32>} : memref<2x6x6x32xf32, #tpu.memory_space<vmem>>, vector<2x6x6x32xf32>,
    %9 = vector.extract_strided_slice %6 {offsets = [0, 0, 0, 0], sizes = [1, 4, 4, 32], strides = [1, 1, 1, 1]} : vector<2x4x4x32xf32> to vector<1x4x4x32xf32>
    %10 = vector.shape_cast %9 : vector<1x4x4x32xf32> to vector<4x4x32xf32>
    %c0_10 = arith.constant 0 : index
    %c1 = arith.constant 1 : index
    %c1_11 = arith.constant 1 : index
    %c0_12 = arith.constant 0 : index
    %11 = vector.load %arg5[%c0_10, %c1, %c1_11, %c0_12] : memref<2x6x6x32xf32, #tpu.memory_space<vmem>>, vector<1x4x4x32xf32>
    %12 = vector.shape_cast %11 : vector<1x4x4x32xf32> to vector<4x4x32xf32>
    %13 = vector.shape_cast %10 : vector<4x4x32xf32> to vector<1x4x4x32xf32>
    tpu.vector_store %arg5[%c0_10, %c1, %c1_11, %c0_12], %13 {strides = array<i32>} : memref<2x6x6x32xf32, #tpu.memory_space<vmem>>, vector<1x4x4x32xf32>,
    %14 = vector.extract_strided_slice %6 {offsets = [1, 0, 0, 0], sizes = [1, 4, 4, 32], strides = [1, 1, 1, 1]} : vector<2x4x4x32xf32> to vector<1x4x4x32xf32>
    %15 = vector.shape_cast %14 : vector<1x4x4x32xf32> to vector<4x4x32xf32>
    %c1_13 = arith.constant 1 : index
    %c1_14 = arith.constant 1 : index
    %c1_15 = arith.constant 1 : index
    %c0_16 = arith.constant 0 : index
    %16 = vector.load %arg5[%c1_13, %c1_14, %c1_15, %c0_16] : memref<2x6x6x32xf32, #tpu.memory_space<vmem>>, vector<1x4x4x32xf32>
    %17 = vector.shape_cast %16 : vector<1x4x4x32xf32> to vector<4x4x32xf32>
    %18 = vector.shape_cast %15 : vector<4x4x32xf32> to vector<1x4x4x32xf32>
    tpu.vector_store %arg5[%c1_13, %c1_14, %c1_15, %c0_16], %18 {strides = array<i32>} : memref<2x6x6x32xf32, #tpu.memory_space<vmem>>, vector<1x4x4x32xf32>,
    %cst_17 = arith.constant 0.000000e+00 : f32
    %19 = vector.broadcast %cst_17 : f32 to vector<2x4x4x32xf32>
    %c0_18 = arith.constant 0 : index
    %c0_19 = arith.constant 0 : index
    %c0_20 = arith.constant 0 : index
    %c0_21 = arith.constant 0 : index
    %20 = vector.load %arg5[%c0_18, %c0_19, %c0_20, %c0_21] : memref<2x6x6x32xf32, #tpu.memory_space<vmem>>, vector<2x4x4x32xf32>
    %21 = arith.addf %19, %20 : vector<2x4x4x32xf32>
    %c0_22 = arith.constant 0 : index
    %c0_23 = arith.constant 0 : index
    %c1_24 = arith.constant 1 : index
    %c0_25 = arith.constant 0 : index
    %22 = vector.load %arg5[%c0_22, %c0_23, %c1_24, %c0_25] : memref<2x6x6x32xf32, #tpu.memory_space<vmem>>, vector<2x4x4x32xf32>
    %23 = arith.addf %21, %22 : vector<2x4x4x32xf32>
    %c0_26 = arith.constant 0 : index
    %c0_27 = arith.constant 0 : index
    %c2 = arith.constant 2 : index
    %c0_28 = arith.constant 0 : index
    %24 = vector.load %arg5[%c0_26, %c0_27, %c2, %c0_28] : memref<2x6x6x32xf32, #tpu.memory_space<vmem>>, vector<2x4x4x32xf32>
    %25 = arith.addf %23, %24 : vector<2x4x4x32xf32>
    %c0_29 = arith.constant 0 : index
    %c1_30 = arith.constant 1 : index
    %c0_31 = arith.constant 0 : index
    %c0_32 = arith.constant 0 : index
    %26 = vector.load %arg5[%c0_29, %c1_30, %c0_31, %c0_32] : memref<2x6x6x32xf32, #tpu.memory_space<vmem>>, vector<2x4x4x32xf32>
    %27 = arith.addf %25, %26 : vector<2x4x4x32xf32>
    %c0_33 = arith.constant 0 : index
    %c1_34 = arith.constant 1 : index
    %c1_35 = arith.constant 1 : index
    %c0_36 = arith.constant 0 : index
    %28 = vector.load %arg5[%c0_33, %c1_34, %c1_35, %c0_36] : memref<2x6x6x32xf32, #tpu.memory_space<vmem>>, vector<2x4x4x32xf32>
    %29 = arith.addf %27, %28 : vector<2x4x4x32xf32>
    %c0_37 = arith.constant 0 : index
    %c1_38 = arith.constant 1 : index
    %c2_39 = arith.constant 2 : index
    %c0_40 = arith.constant 0 : index
    %30 = vector.load %arg5[%c0_37, %c1_38, %c2_39, %c0_40] : memref<2x6x6x32xf32, #tpu.memory_space<vmem>>, vector<2x4x4x32xf32>
    %31 = arith.addf %29, %30 : vector<2x4x4x32xf32>
    %c0_41 = arith.constant 0 : index
    %c2_42 = arith.constant 2 : index
    %c0_43 = arith.constant 0 : index
    %c0_44 = arith.constant 0 : index
    %32 = vector.load %arg5[%c0_41, %c2_42, %c0_43, %c0_44] : memref<2x6x6x32xf32, #tpu.memory_space<vmem>>, vector<2x4x4x32xf32>
    %33 = arith.addf %31, %32 : vector<2x4x4x32xf32>
    %c0_45 = arith.constant 0 : index
    %c2_46 = arith.constant 2 : index
    %c1_47 = arith.constant 1 : index
    %c0_48 = arith.constant 0 : index
    %34 = vector.load %arg5[%c0_45, %c2_46, %c1_47, %c0_48] : memref<2x6x6x32xf32, #tpu.memory_space<vmem>>, vector<2x4x4x32xf32>
    %35 = arith.addf %33, %34 : vector<2x4x4x32xf32>
    %c0_49 = arith.constant 0 : index
    %c2_50 = arith.constant 2 : index
    %c2_51 = arith.constant 2 : index
    %c0_52 = arith.constant 0 : index
    %36 = vector.load %arg5[%c0_49, %c2_50, %c2_51, %c0_52] : memref<2x6x6x32xf32, #tpu.memory_space<vmem>>, vector<2x4x4x32xf32>
    %37 = arith.addf %35, %36 : vector<2x4x4x32xf32>
    %cst_53 = arith.constant 0.111111112 : f32
    %38 = vector.broadcast %cst_53 : f32 to vector<2x4x4x32xf32>
    %39 = arith.mulf %37, %38 : vector<2x4x4x32xf32>
    %c0_54 = arith.constant 0 : index
    %c0_55 = arith.constant 0 : index
    %c0_56 = arith.constant 0 : index
    %c0_57 = arith.constant 0 : index
    %40 = vector.load %arg4[%c0_54, %c0_55, %c0_56, %c0_57] : memref<2x4x4x32xf32, #tpu.memory_space<vmem>>, vector<2x4x4x32xf32>
    tpu.vector_store %arg4[%c0_54, %c0_55, %c0_56, %c0_57], %39 {strides = array<i32>} : memref<2x4x4x32xf32, #tpu.memory_space<vmem>>, vector<2x4x4x32xf32>,
    return
  }
  func.func @transform_0(%arg0: i32) -> (i32, i32) {
    %c0_i32 = arith.constant 0 : i32
    %c0_i32_0 = arith.constant 0 : i32
    %c0_i32_1 = arith.constant 0 : i32
    return %c0_i32, %c0_i32_0 : i32, i32
  }
  func.func @transform_1(%arg0: i32) -> (i32, i32) {
    %c0_i32 = arith.constant 0 : i32
    %c0_i32_0 = arith.constant 0 : i32
    %c0_i32_1 = arith.constant 0 : i32
    return %c0_i32, %c0_i32_0 : i32, i32
  }
  func.func @transform_2(%arg0: i32) -> (i32, i32) {
    %c0_i32 = arith.constant 0 : i32
    %c0_i32_0 = arith.constant 0 : i32
    %c0_i32_1 = arith.constant 0 : i32
    return %c0_i32, %c0_i32_0 : i32, i32
  }
  func.func @transform_3(%arg0: i32) -> (i32, i32, i32, i32) {
    %c0_i32 = arith.constant 0 : i32
    %c0_i32_0 = arith.constant 0 : i32
    %c0_i32_1 = arith.constant 0 : i32
    %c0_i32_2 = arith.constant 0 : i32
    %c0_i32_3 = arith.constant 0 : i32
    return %c0_i32, %c0_i32_0, %c0_i32_1, %c0_i32_2 : i32, i32, i32, i32
  }
}

module attributes {stable_mosaic.version = 11 : i64} {
  func.func @_nn_min_kernel(%arg0: i32, %arg1: i32, %arg2: memref<128x48xbf16, #tpu.memory_space<vmem>>, %arg3: memref<64x48xbf16, #tpu.memory_space<vmem>>, %arg4: memref<128x1xf32, #tpu.memory_space<vmem>>, %arg5: memref<1x64xf32, #tpu.memory_space<vmem>>, %arg6: memref<128x1xf32, #tpu.memory_space<vmem>>, %arg7: memref<128x1xi32, #tpu.memory_space<vmem>>, %arg8: memref<128x1xf32, #tpu.memory_space<vmem>>, %arg9: memref<128x1xi32, #tpu.memory_space<vmem>>) attributes {dimension_semantics = [#tpu.dimension_semantics<parallel>, #tpu.dimension_semantics<arbitrary>], iteration_bounds = array<i64: 1, 1>, scalar_prefetch = 0 : i64, scratch_operands = 2 : i64, tpu.core_type = #tpu.core_type<tc>, window_params = [{transform_indices = @transform_0, window_bounds = array<i64: 128, 48>}, {transform_indices = @transform_1, window_bounds = array<i64: 64, 48>}, {transform_indices = @transform_2, window_bounds = array<i64: 128, 1>}, {transform_indices = @transform_3, window_bounds = array<i64: 1, 64>}, {transform_indices = @transform_4, window_bounds = array<i64: 128, 1>}, {transform_indices = @transform_5, window_bounds = array<i64: 128, 1>}]} {
    %c0_i32 = arith.constant 0 : i32
    %0 = arith.cmpi eq, %arg1, %c0_i32 : i32
    %1 = arith.extui %0 : i1 to i32
    %c0_i32_0 = arith.constant 0 : i32
    %2 = arith.cmpi ne, %1, %c0_i32_0 : i32
    scf.if %2 {
      %cst_24 = arith.constant 0x7F800000 : f32
      %39 = vector.broadcast %cst_24 : f32 to vector<128x1xf32>
      %c0_25 = arith.constant 0 : index
      %c0_26 = arith.constant 0 : index
      %40 = vector.load %arg8[%c0_25, %c0_26] : memref<128x1xf32, #tpu.memory_space<vmem>>, vector<128x1xf32>
      tpu.vector_store %arg8[%c0_25, %c0_26], %39 {strides = array<i32>} : memref<128x1xf32, #tpu.memory_space<vmem>>, vector<128x1xf32>,
      %c0_i32_27 = arith.constant 0 : i32
      %41 = vector.broadcast %c0_i32_27 : i32 to vector<128x1xi32>
      %c0_28 = arith.constant 0 : index
      %c0_29 = arith.constant 0 : index
      %42 = vector.load %arg9[%c0_28, %c0_29] : memref<128x1xi32, #tpu.memory_space<vmem>>, vector<128x1xi32>
      tpu.vector_store %arg9[%c0_28, %c0_29], %41 {strides = array<i32>} : memref<128x1xi32, #tpu.memory_space<vmem>>, vector<128x1xi32>,
    } else {
    }
    %c0 = arith.constant 0 : index
    %c0_1 = arith.constant 0 : index
    %3 = vector.load %arg2[%c0, %c0_1] : memref<128x48xbf16, #tpu.memory_space<vmem>>, vector<128x48xbf16>
    %c0_2 = arith.constant 0 : index
    %c0_3 = arith.constant 0 : index
    %4 = vector.load %arg3[%c0_2, %c0_3] : memref<64x48xbf16, #tpu.memory_space<vmem>>, vector<64x48xbf16>
    %cst = arith.constant dense<0.000000e+00> : vector<128x64xf32>
    %5 = tpu.matmul %3, %4, %cst {dimension_numbers = #tpu.dot_dimension_numbers<[1], [1], [0], [0], [0, 0, 1, 0], [], []>} : vector<128x48xbf16>, vector<64x48xbf16>, vector<128x64xf32> -> vector<128x64xf32>
    %c0_4 = arith.constant 0 : index
    %c0_5 = arith.constant 0 : index
    %6 = vector.load %arg4[%c0_4, %c0_5] : memref<128x1xf32, #tpu.memory_space<vmem>>, vector<128x1xf32>
    %c0_6 = arith.constant 0 : index
    %c0_7 = arith.constant 0 : index
    %7 = vector.load %arg5[%c0_6, %c0_7] : memref<1x64xf32, #tpu.memory_space<vmem>>, vector<1x64xf32>
    %8 = vector.broadcast %6 : vector<128x1xf32> to vector<128x64xf32>
    %9 = vector.broadcast %7 : vector<1x64xf32> to vector<128x64xf32>
    %10 = arith.addf %8, %9 : vector<128x64xf32>
    %cst_8 = arith.constant 2.000000e+00 : f32
    %11 = vector.broadcast %cst_8 : f32 to vector<128x64xf32>
    %12 = arith.mulf %11, %5 : vector<128x64xf32>
    %13 = arith.subf %10, %12 : vector<128x64xf32>
    %cst_9 = arith.constant 0.000000e+00 : f32
    %14 = vector.broadcast %cst_9 : f32 to vector<128x64xf32>
    %15 = arith.maximumf %13, %14 : vector<128x64xf32>
    %cst_10 = arith.constant dense<0x7F800000> : vector<128xf32>
    %16 = vector.multi_reduction <minimumf>, %15, %cst_10 [1] : vector<128x64xf32> to vector<128xf32>
    %17 = vector.shape_cast %16 : vector<128xf32> to vector<128x1xf32>
    %18 = tpu.iota {dimensions = array<i32: 1>} : vector<128x64xi32>
    %c64_i32 = arith.constant 64 : i32
    %19 = arith.muli %arg1, %c64_i32 : i32
    %20 = vector.broadcast %19 : i32 to vector<128x64xi32>
    %21 = arith.addi %18, %20 : vector<128x64xi32>
    %22 = vector.broadcast %17 : vector<128x1xf32> to vector<128x64xf32>
    %23 = arith.cmpf ole, %15, %22 : vector<128x64xf32>
    %c2147483647_i32 = arith.constant 2147483647 : i32
    %24 = vector.broadcast %c2147483647_i32 : i32 to vector<128x64xi32>
    %25 = arith.select %23, %21, %24 : vector<128x64xi1>, vector<128x64xi32>
    %cst_11 = arith.constant dense<2147483647> : vector<128xi32>
    %26 = vector.multi_reduction <minsi>, %25, %cst_11 [1] : vector<128x64xi32> to vector<128xi32>
    %27 = vector.shape_cast %26 : vector<128xi32> to vector<128x1xi32>
    %c0_12 = arith.constant 0 : index
    %c0_13 = arith.constant 0 : index
    %28 = vector.load %arg8[%c0_12, %c0_13] : memref<128x1xf32, #tpu.memory_space<vmem>>, vector<128x1xf32>
    %29 = arith.cmpf olt, %17, %28 : vector<128x1xf32>
    %c0_14 = arith.constant 0 : index
    %c0_15 = arith.constant 0 : index
    %30 = vector.load %arg9[%c0_14, %c0_15] : memref<128x1xi32, #tpu.memory_space<vmem>>, vector<128x1xi32>
    %31 = arith.select %29, %27, %30 : vector<128x1xi1>, vector<128x1xi32>
    %c0_16 = arith.constant 0 : index
    %c0_17 = arith.constant 0 : index
    %32 = vector.load %arg9[%c0_16, %c0_17] : memref<128x1xi32, #tpu.memory_space<vmem>>, vector<128x1xi32>
    tpu.vector_store %arg9[%c0_16, %c0_17], %31 {strides = array<i32>} : memref<128x1xi32, #tpu.memory_space<vmem>>, vector<128x1xi32>,
    %c0_18 = arith.constant 0 : index
    %c0_19 = arith.constant 0 : index
    %33 = vector.load %arg8[%c0_18, %c0_19] : memref<128x1xf32, #tpu.memory_space<vmem>>, vector<128x1xf32>
    %34 = arith.select %29, %17, %33 : vector<128x1xi1>, vector<128x1xf32>
    %c0_20 = arith.constant 0 : index
    %c0_21 = arith.constant 0 : index
    %35 = vector.load %arg8[%c0_20, %c0_21] : memref<128x1xf32, #tpu.memory_space<vmem>>, vector<128x1xf32>
    tpu.vector_store %arg8[%c0_20, %c0_21], %34 {strides = array<i32>} : memref<128x1xf32, #tpu.memory_space<vmem>>, vector<128x1xf32>,
    %c0_i32_22 = arith.constant 0 : i32
    %36 = arith.cmpi eq, %arg1, %c0_i32_22 : i32
    %37 = arith.extui %36 : i1 to i32
    %c0_i32_23 = arith.constant 0 : i32
    %38 = arith.cmpi ne, %37, %c0_i32_23 : i32
    scf.if %38 {
      %c0_24 = arith.constant 0 : index
      %c0_25 = arith.constant 0 : index
      %39 = vector.load %arg8[%c0_24, %c0_25] : memref<128x1xf32, #tpu.memory_space<vmem>>, vector<128x1xf32>
      %40 = math.sqrt %39 : vector<128x1xf32>
      %c0_26 = arith.constant 0 : index
      %c0_27 = arith.constant 0 : index
      %41 = vector.load %arg6[%c0_26, %c0_27] : memref<128x1xf32, #tpu.memory_space<vmem>>, vector<128x1xf32>
      tpu.vector_store %arg6[%c0_26, %c0_27], %40 {strides = array<i32>} : memref<128x1xf32, #tpu.memory_space<vmem>>, vector<128x1xf32>,
      %c0_28 = arith.constant 0 : index
      %c0_29 = arith.constant 0 : index
      %42 = vector.load %arg9[%c0_28, %c0_29] : memref<128x1xi32, #tpu.memory_space<vmem>>, vector<128x1xi32>
      %c0_30 = arith.constant 0 : index
      %c0_31 = arith.constant 0 : index
      %43 = vector.load %arg7[%c0_30, %c0_31] : memref<128x1xi32, #tpu.memory_space<vmem>>, vector<128x1xi32>
      tpu.vector_store %arg7[%c0_30, %c0_31], %42 {strides = array<i32>} : memref<128x1xi32, #tpu.memory_space<vmem>>, vector<128x1xi32>,
    } else {
    }
    return
  }
  func.func @transform_0(%arg0: i32, %arg1: i32) -> (i32, i32) {
    %c0_i32 = arith.constant 0 : i32
    %c0_i32_0 = arith.constant 0 : i32
    return %arg0, %c0_i32 : i32, i32
  }
  func.func @transform_1(%arg0: i32, %arg1: i32) -> (i32, i32) {
    %c0_i32 = arith.constant 0 : i32
    %c0_i32_0 = arith.constant 0 : i32
    return %arg1, %c0_i32 : i32, i32
  }
  func.func @transform_2(%arg0: i32, %arg1: i32) -> (i32, i32) {
    %c0_i32 = arith.constant 0 : i32
    %c0_i32_0 = arith.constant 0 : i32
    return %arg0, %c0_i32 : i32, i32
  }
  func.func @transform_3(%arg0: i32, %arg1: i32) -> (i32, i32) {
    %c0_i32 = arith.constant 0 : i32
    %c0_i32_0 = arith.constant 0 : i32
    return %c0_i32, %arg1 : i32, i32
  }
  func.func @transform_4(%arg0: i32, %arg1: i32) -> (i32, i32) {
    %c0_i32 = arith.constant 0 : i32
    %c0_i32_0 = arith.constant 0 : i32
    return %arg0, %c0_i32 : i32, i32
  }
  func.func @transform_5(%arg0: i32, %arg1: i32) -> (i32, i32) {
    %c0_i32 = arith.constant 0 : i32
    %c0_i32_0 = arith.constant 0 : i32
    return %arg0, %c0_i32 : i32, i32
  }
}

module attributes {stable_mosaic.version = 11 : i64} {
  func.func @_nn_topk_kernel(%arg0: i32, %arg1: memref<2x48xbf16, #tpu.memory_space<vmem>>, %arg2: memref<64x48xbf16, #tpu.memory_space<vmem>>, %arg3: memref<2x1xf32, #tpu.memory_space<vmem>>, %arg4: memref<1x64xf32, #tpu.memory_space<vmem>>, %arg5: memref<2x9xi32, #tpu.memory_space<vmem>>, %arg6: memref<2x73xf32, #tpu.memory_space<vmem>>, %arg7: memref<2x73xi32, #tpu.memory_space<vmem>>) attributes {dimension_semantics = [#tpu.dimension_semantics<arbitrary>], iteration_bounds = array<i64: 1>, scalar_prefetch = 0 : i64, scratch_operands = 2 : i64, tpu.core_type = #tpu.core_type<tc>, window_params = [{pipeline_mode = #tpu.pipeline_mode<synchronous>, transform_indices = @transform_0, window_bounds = array<i64: 2, 48>}, {transform_indices = @transform_1, window_bounds = array<i64: 64, 48>}, {pipeline_mode = #tpu.pipeline_mode<synchronous>, transform_indices = @transform_2, window_bounds = array<i64: 2, 1>}, {transform_indices = @transform_3, window_bounds = array<i64: 1, 64>}, {pipeline_mode = #tpu.pipeline_mode<synchronous>, transform_indices = @transform_4, window_bounds = array<i64: 2, 9>}]} {
    %c0_i32 = arith.constant 0 : i32
    %0 = arith.cmpi eq, %arg0, %c0_i32 : i32
    %1 = arith.extui %0 : i1 to i32
    %c0_i32_0 = arith.constant 0 : i32
    %2 = arith.cmpi ne, %1, %c0_i32_0 : i32
    scf.if %2 {
      %cst_99 = arith.constant 0x7F800000 : f32
      %188 = vector.broadcast %cst_99 : f32 to vector<2x73xf32>
      %c0_100 = arith.constant 0 : index
      %c0_101 = arith.constant 0 : index
      %189 = vector.load %arg6[%c0_100, %c0_101] : memref<2x73xf32, #tpu.memory_space<vmem>>, vector<2x73xf32>
      tpu.vector_store %arg6[%c0_100, %c0_101], %188 {strides = array<i32>} : memref<2x73xf32, #tpu.memory_space<vmem>>, vector<2x73xf32>,
      %c0_i32_102 = arith.constant 0 : i32
      %190 = vector.broadcast %c0_i32_102 : i32 to vector<2x73xi32>
      %c0_103 = arith.constant 0 : index
      %c0_104 = arith.constant 0 : index
      %191 = vector.load %arg7[%c0_103, %c0_104] : memref<2x73xi32, #tpu.memory_space<vmem>>, vector<2x73xi32>
      tpu.vector_store %arg7[%c0_103, %c0_104], %190 {strides = array<i32>} : memref<2x73xi32, #tpu.memory_space<vmem>>, vector<2x73xi32>,
    } else {
    }
    %c0 = arith.constant 0 : index
    %c0_1 = arith.constant 0 : index
    %3 = vector.load %arg1[%c0, %c0_1] : memref<2x48xbf16, #tpu.memory_space<vmem>>, vector<2x48xbf16>
    %c0_2 = arith.constant 0 : index
    %c0_3 = arith.constant 0 : index
    %4 = vector.load %arg2[%c0_2, %c0_3] : memref<64x48xbf16, #tpu.memory_space<vmem>>, vector<64x48xbf16>
    %cst = arith.constant dense<0.000000e+00> : vector<2x64xf32>
    %5 = tpu.matmul %3, %4, %cst {dimension_numbers = #tpu.dot_dimension_numbers<[1], [1], [0], [0], [0, 0, 1, 0], [], []>} : vector<2x48xbf16>, vector<64x48xbf16>, vector<2x64xf32> -> vector<2x64xf32>
    %c0_4 = arith.constant 0 : index
    %c0_5 = arith.constant 0 : index
    %6 = vector.load %arg3[%c0_4, %c0_5] : memref<2x1xf32, #tpu.memory_space<vmem>>, vector<2x1xf32>
    %c0_6 = arith.constant 0 : index
    %c0_7 = arith.constant 0 : index
    %7 = vector.load %arg4[%c0_6, %c0_7] : memref<1x64xf32, #tpu.memory_space<vmem>>, vector<1x64xf32>
    %8 = vector.broadcast %6 : vector<2x1xf32> to vector<2x64xf32>
    %9 = vector.broadcast %7 : vector<1x64xf32> to vector<2x64xf32>
    %10 = arith.addf %8, %9 : vector<2x64xf32>
    %cst_8 = arith.constant 2.000000e+00 : f32
    %11 = vector.broadcast %cst_8 : f32 to vector<2x64xf32>
    %12 = arith.mulf %11, %5 : vector<2x64xf32>
    %13 = arith.subf %10, %12 : vector<2x64xf32>
    %cst_9 = arith.constant 0.000000e+00 : f32
    %14 = vector.broadcast %cst_9 : f32 to vector<2x64xf32>
    %15 = arith.maximumf %13, %14 : vector<2x64xf32>
    %16 = tpu.iota {dimensions = array<i32: 1>} : vector<2x64xi32>
    %c64_i32 = arith.constant 64 : i32
    %17 = arith.muli %arg0, %c64_i32 : i32
    %18 = vector.broadcast %17 : i32 to vector<2x64xi32>
    %19 = arith.addi %16, %18 : vector<2x64xi32>
    %c0_10 = arith.constant 0 : index
    %c9 = arith.constant 9 : index
    %20 = vector.load %arg6[%c0_10, %c9] : memref<2x73xf32, #tpu.memory_space<vmem>>, vector<2x64xf32>
    tpu.vector_store %arg6[%c0_10, %c9], %15 {strides = array<i32>} : memref<2x73xf32, #tpu.memory_space<vmem>>, vector<2x64xf32>,
    %c0_11 = arith.constant 0 : index
    %c9_12 = arith.constant 9 : index
    %21 = vector.load %arg7[%c0_11, %c9_12] : memref<2x73xi32, #tpu.memory_space<vmem>>, vector<2x64xi32>
    tpu.vector_store %arg7[%c0_11, %c9_12], %19 {strides = array<i32>} : memref<2x73xi32, #tpu.memory_space<vmem>>, vector<2x64xi32>,
    %c0_13 = arith.constant 0 : index
    %c0_14 = arith.constant 0 : index
    %22 = vector.load %arg6[%c0_13, %c0_14] : memref<2x73xf32, #tpu.memory_space<vmem>>, vector<2x73xf32>
    %c0_15 = arith.constant 0 : index
    %c0_16 = arith.constant 0 : index
    %23 = vector.load %arg7[%c0_15, %c0_16] : memref<2x73xi32, #tpu.memory_space<vmem>>, vector<2x73xi32>
    %24 = tpu.iota {dimensions = array<i32: 1>} : vector<2x73xi32>
    %cst_17 = arith.constant dense<0x7F800000> : vector<2xf32>
    %25 = vector.multi_reduction <minimumf>, %22, %cst_17 [1] : vector<2x73xf32> to vector<2xf32>
    %26 = vector.shape_cast %25 : vector<2xf32> to vector<2x1xf32>
    %27 = vector.broadcast %26 : vector<2x1xf32> to vector<2x73xf32>
    %28 = arith.cmpf ole, %22, %27 : vector<2x73xf32>
    %c2147483647_i32 = arith.constant 2147483647 : i32
    %29 = vector.broadcast %c2147483647_i32 : i32 to vector<2x73xi32>
    %30 = arith.select %28, %24, %29 : vector<2x73xi1>, vector<2x73xi32>
    %cst_18 = arith.constant dense<2147483647> : vector<2xi32>
    %31 = vector.multi_reduction <minsi>, %30, %cst_18 [1] : vector<2x73xi32> to vector<2xi32>
    %32 = vector.shape_cast %31 : vector<2xi32> to vector<2x1xi32>
    %33 = vector.broadcast %32 : vector<2x1xi32> to vector<2x73xi32>
    %34 = arith.cmpi eq, %24, %33 : vector<2x73xi32>
    %c0_i32_19 = arith.constant 0 : i32
    %35 = vector.broadcast %c0_i32_19 : i32 to vector<2x73xi32>
    %36 = arith.select %34, %23, %35 : vector<2x73xi1>, vector<2x73xi32>
    %cst_20 = arith.constant dense<0> : vector<2xi32>
    %37 = vector.multi_reduction <add>, %36, %cst_20 [1] : vector<2x73xi32> to vector<2xi32>
    %38 = vector.shape_cast %37 : vector<2xi32> to vector<2x1xi32>
    %c0_21 = arith.constant 0 : index
    %c0_22 = arith.constant 0 : index
    %39 = vector.load %arg6[%c0_21, %c0_22] : memref<2x73xf32, #tpu.memory_space<vmem>>, vector<2x1xf32>
    tpu.vector_store %arg6[%c0_21, %c0_22], %26 {strides = array<i32>} : memref<2x73xf32, #tpu.memory_space<vmem>>, vector<2x1xf32>,
    %c0_23 = arith.constant 0 : index
    %c0_24 = arith.constant 0 : index
    %40 = vector.load %arg7[%c0_23, %c0_24] : memref<2x73xi32, #tpu.memory_space<vmem>>, vector<2x1xi32>
    tpu.vector_store %arg7[%c0_23, %c0_24], %38 {strides = array<i32>} : memref<2x73xi32, #tpu.memory_space<vmem>>, vector<2x1xi32>,
    %cst_25 = arith.constant 0x7F800000 : f32
    %41 = vector.broadcast %cst_25 : f32 to vector<2x73xf32>
    %42 = arith.select %34, %41, %22 : vector<2x73xi1>, vector<2x73xf32>
    %cst_26 = arith.constant dense<0x7F800000> : vector<2xf32>
    %43 = vector.multi_reduction <minimumf>, %42, %cst_26 [1] : vector<2x73xf32> to vector<2xf32>
    %44 = vector.shape_cast %43 : vector<2xf32> to vector<2x1xf32>
    %45 = vector.broadcast %44 : vector<2x1xf32> to vector<2x73xf32>
    %46 = arith.cmpf ole, %42, %45 : vector<2x73xf32>
    %c2147483647_i32_27 = arith.constant 2147483647 : i32
    %47 = vector.broadcast %c2147483647_i32_27 : i32 to vector<2x73xi32>
    %48 = arith.select %46, %24, %47 : vector<2x73xi1>, vector<2x73xi32>
    %cst_28 = arith.constant dense<2147483647> : vector<2xi32>
    %49 = vector.multi_reduction <minsi>, %48, %cst_28 [1] : vector<2x73xi32> to vector<2xi32>
    %50 = vector.shape_cast %49 : vector<2xi32> to vector<2x1xi32>
    %51 = vector.broadcast %50 : vector<2x1xi32> to vector<2x73xi32>
    %52 = arith.cmpi eq, %24, %51 : vector<2x73xi32>
    %c0_i32_29 = arith.constant 0 : i32
    %53 = vector.broadcast %c0_i32_29 : i32 to vector<2x73xi32>
    %54 = arith.select %52, %23, %53 : vector<2x73xi1>, vector<2x73xi32>
    %cst_30 = arith.constant dense<0> : vector<2xi32>
    %55 = vector.multi_reduction <add>, %54, %cst_30 [1] : vector<2x73xi32> to vector<2xi32>
    %56 = vector.shape_cast %55 : vector<2xi32> to vector<2x1xi32>
    %c0_31 = arith.constant 0 : index
    %c1 = arith.constant 1 : index
    %57 = vector.load %arg6[%c0_31, %c1] : memref<2x73xf32, #tpu.memory_space<vmem>>, vector<2x1xf32>
    tpu.vector_store %arg6[%c0_31, %c1], %44 {strides = array<i32>} : memref<2x73xf32, #tpu.memory_space<vmem>>, vector<2x1xf32>,
    %c0_32 = arith.constant 0 : index
    %c1_33 = arith.constant 1 : index
    %58 = vector.load %arg7[%c0_32, %c1_33] : memref<2x73xi32, #tpu.memory_space<vmem>>, vector<2x1xi32>
    tpu.vector_store %arg7[%c0_32, %c1_33], %56 {strides = array<i32>} : memref<2x73xi32, #tpu.memory_space<vmem>>, vector<2x1xi32>,
    %cst_34 = arith.constant 0x7F800000 : f32
    %59 = vector.broadcast %cst_34 : f32 to vector<2x73xf32>
    %60 = arith.select %52, %59, %42 : vector<2x73xi1>, vector<2x73xf32>
    %cst_35 = arith.constant dense<0x7F800000> : vector<2xf32>
    %61 = vector.multi_reduction <minimumf>, %60, %cst_35 [1] : vector<2x73xf32> to vector<2xf32>
    %62 = vector.shape_cast %61 : vector<2xf32> to vector<2x1xf32>
    %63 = vector.broadcast %62 : vector<2x1xf32> to vector<2x73xf32>
    %64 = arith.cmpf ole, %60, %63 : vector<2x73xf32>
    %c2147483647_i32_36 = arith.constant 2147483647 : i32
    %65 = vector.broadcast %c2147483647_i32_36 : i32 to vector<2x73xi32>
    %66 = arith.select %64, %24, %65 : vector<2x73xi1>, vector<2x73xi32>
    %cst_37 = arith.constant dense<2147483647> : vector<2xi32>
    %67 = vector.multi_reduction <minsi>, %66, %cst_37 [1] : vector<2x73xi32> to vector<2xi32>
    %68 = vector.shape_cast %67 : vector<2xi32> to vector<2x1xi32>
    %69 = vector.broadcast %68 : vector<2x1xi32> to vector<2x73xi32>
    %70 = arith.cmpi eq, %24, %69 : vector<2x73xi32>
    %c0_i32_38 = arith.constant 0 : i32
    %71 = vector.broadcast %c0_i32_38 : i32 to vector<2x73xi32>
    %72 = arith.select %70, %23, %71 : vector<2x73xi1>, vector<2x73xi32>
    %cst_39 = arith.constant dense<0> : vector<2xi32>
    %73 = vector.multi_reduction <add>, %72, %cst_39 [1] : vector<2x73xi32> to vector<2xi32>
    %74 = vector.shape_cast %73 : vector<2xi32> to vector<2x1xi32>
    %c0_40 = arith.constant 0 : index
    %c2 = arith.constant 2 : index
    %75 = vector.load %arg6[%c0_40, %c2] : memref<2x73xf32, #tpu.memory_space<vmem>>, vector<2x1xf32>
    tpu.vector_store %arg6[%c0_40, %c2], %62 {strides = array<i32>} : memref<2x73xf32, #tpu.memory_space<vmem>>, vector<2x1xf32>,
    %c0_41 = arith.constant 0 : index
    %c2_42 = arith.constant 2 : index
    %76 = vector.load %arg7[%c0_41, %c2_42] : memref<2x73xi32, #tpu.memory_space<vmem>>, vector<2x1xi32>
    tpu.vector_store %arg7[%c0_41, %c2_42], %74 {strides = array<i32>} : memref<2x73xi32, #tpu.memory_space<vmem>>, vector<2x1xi32>,
    %cst_43 = arith.constant 0x7F800000 : f32
    %77 = vector.broadcast %cst_43 : f32 to vector<2x73xf32>
    %78 = arith.select %70, %77, %60 : vector<2x73xi1>, vector<2x73xf32>
    %cst_44 = arith.constant dense<0x7F800000> : vector<2xf32>
    %79 = vector.multi_reduction <minimumf>, %78, %cst_44 [1] : vector<2x73xf32> to vector<2xf32>
    %80 = vector.shape_cast %79 : vector<2xf32> to vector<2x1xf32>
    %81 = vector.broadcast %80 : vector<2x1xf32> to vector<2x73xf32>
    %82 = arith.cmpf ole, %78, %81 : vector<2x73xf32>
    %c2147483647_i32_45 = arith.constant 2147483647 : i32
    %83 = vector.broadcast %c2147483647_i32_45 : i32 to vector<2x73xi32>
    %84 = arith.select %82, %24, %83 : vector<2x73xi1>, vector<2x73xi32>
    %cst_46 = arith.constant dense<2147483647> : vector<2xi32>
    %85 = vector.multi_reduction <minsi>, %84, %cst_46 [1] : vector<2x73xi32> to vector<2xi32>
    %86 = vector.shape_cast %85 : vector<2xi32> to vector<2x1xi32>
    %87 = vector.broadcast %86 : vector<2x1xi32> to vector<2x73xi32>
    %88 = arith.cmpi eq, %24, %87 : vector<2x73xi32>
    %c0_i32_47 = arith.constant 0 : i32
    %89 = vector.broadcast %c0_i32_47 : i32 to vector<2x73xi32>
    %90 = arith.select %88, %23, %89 : vector<2x73xi1>, vector<2x73xi32>
    %cst_48 = arith.constant dense<0> : vector<2xi32>
    %91 = vector.multi_reduction <add>, %90, %cst_48 [1] : vector<2x73xi32> to vector<2xi32>
    %92 = vector.shape_cast %91 : vector<2xi32> to vector<2x1xi32>
    %c0_49 = arith.constant 0 : index
    %c3 = arith.constant 3 : index
    %93 = vector.load %arg6[%c0_49, %c3] : memref<2x73xf32, #tpu.memory_space<vmem>>, vector<2x1xf32>
    tpu.vector_store %arg6[%c0_49, %c3], %80 {strides = array<i32>} : memref<2x73xf32, #tpu.memory_space<vmem>>, vector<2x1xf32>,
    %c0_50 = arith.constant 0 : index
    %c3_51 = arith.constant 3 : index
    %94 = vector.load %arg7[%c0_50, %c3_51] : memref<2x73xi32, #tpu.memory_space<vmem>>, vector<2x1xi32>
    tpu.vector_store %arg7[%c0_50, %c3_51], %92 {strides = array<i32>} : memref<2x73xi32, #tpu.memory_space<vmem>>, vector<2x1xi32>,
    %cst_52 = arith.constant 0x7F800000 : f32
    %95 = vector.broadcast %cst_52 : f32 to vector<2x73xf32>
    %96 = arith.select %88, %95, %78 : vector<2x73xi1>, vector<2x73xf32>
    %cst_53 = arith.constant dense<0x7F800000> : vector<2xf32>
    %97 = vector.multi_reduction <minimumf>, %96, %cst_53 [1] : vector<2x73xf32> to vector<2xf32>
    %98 = vector.shape_cast %97 : vector<2xf32> to vector<2x1xf32>
    %99 = vector.broadcast %98 : vector<2x1xf32> to vector<2x73xf32>
    %100 = arith.cmpf ole, %96, %99 : vector<2x73xf32>
    %c2147483647_i32_54 = arith.constant 2147483647 : i32
    %101 = vector.broadcast %c2147483647_i32_54 : i32 to vector<2x73xi32>
    %102 = arith.select %100, %24, %101 : vector<2x73xi1>, vector<2x73xi32>
    %cst_55 = arith.constant dense<2147483647> : vector<2xi32>
    %103 = vector.multi_reduction <minsi>, %102, %cst_55 [1] : vector<2x73xi32> to vector<2xi32>
    %104 = vector.shape_cast %103 : vector<2xi32> to vector<2x1xi32>
    %105 = vector.broadcast %104 : vector<2x1xi32> to vector<2x73xi32>
    %106 = arith.cmpi eq, %24, %105 : vector<2x73xi32>
    %c0_i32_56 = arith.constant 0 : i32
    %107 = vector.broadcast %c0_i32_56 : i32 to vector<2x73xi32>
    %108 = arith.select %106, %23, %107 : vector<2x73xi1>, vector<2x73xi32>
    %cst_57 = arith.constant dense<0> : vector<2xi32>
    %109 = vector.multi_reduction <add>, %108, %cst_57 [1] : vector<2x73xi32> to vector<2xi32>
    %110 = vector.shape_cast %109 : vector<2xi32> to vector<2x1xi32>
    %c0_58 = arith.constant 0 : index
    %c4 = arith.constant 4 : index
    %111 = vector.load %arg6[%c0_58, %c4] : memref<2x73xf32, #tpu.memory_space<vmem>>, vector<2x1xf32>
    tpu.vector_store %arg6[%c0_58, %c4], %98 {strides = array<i32>} : memref<2x73xf32, #tpu.memory_space<vmem>>, vector<2x1xf32>,
    %c0_59 = arith.constant 0 : index
    %c4_60 = arith.constant 4 : index
    %112 = vector.load %arg7[%c0_59, %c4_60] : memref<2x73xi32, #tpu.memory_space<vmem>>, vector<2x1xi32>
    tpu.vector_store %arg7[%c0_59, %c4_60], %110 {strides = array<i32>} : memref<2x73xi32, #tpu.memory_space<vmem>>, vector<2x1xi32>,
    %cst_61 = arith.constant 0x7F800000 : f32
    %113 = vector.broadcast %cst_61 : f32 to vector<2x73xf32>
    %114 = arith.select %106, %113, %96 : vector<2x73xi1>, vector<2x73xf32>
    %cst_62 = arith.constant dense<0x7F800000> : vector<2xf32>
    %115 = vector.multi_reduction <minimumf>, %114, %cst_62 [1] : vector<2x73xf32> to vector<2xf32>
    %116 = vector.shape_cast %115 : vector<2xf32> to vector<2x1xf32>
    %117 = vector.broadcast %116 : vector<2x1xf32> to vector<2x73xf32>
    %118 = arith.cmpf ole, %114, %117 : vector<2x73xf32>
    %c2147483647_i32_63 = arith.constant 2147483647 : i32
    %119 = vector.broadcast %c2147483647_i32_63 : i32 to vector<2x73xi32>
    %120 = arith.select %118, %24, %119 : vector<2x73xi1>, vector<2x73xi32>
    %cst_64 = arith.constant dense<2147483647> : vector<2xi32>
    %121 = vector.multi_reduction <minsi>, %120, %cst_64 [1] : vector<2x73xi32> to vector<2xi32>
    %122 = vector.shape_cast %121 : vector<2xi32> to vector<2x1xi32>
    %123 = vector.broadcast %122 : vector<2x1xi32> to vector<2x73xi32>
    %124 = arith.cmpi eq, %24, %123 : vector<2x73xi32>
    %c0_i32_65 = arith.constant 0 : i32
    %125 = vector.broadcast %c0_i32_65 : i32 to vector<2x73xi32>
    %126 = arith.select %124, %23, %125 : vector<2x73xi1>, vector<2x73xi32>
    %cst_66 = arith.constant dense<0> : vector<2xi32>
    %127 = vector.multi_reduction <add>, %126, %cst_66 [1] : vector<2x73xi32> to vector<2xi32>
    %128 = vector.shape_cast %127 : vector<2xi32> to vector<2x1xi32>
    %c0_67 = arith.constant 0 : index
    %c5 = arith.constant 5 : index
    %129 = vector.load %arg6[%c0_67, %c5] : memref<2x73xf32, #tpu.memory_space<vmem>>, vector<2x1xf32>
    tpu.vector_store %arg6[%c0_67, %c5], %116 {strides = array<i32>} : memref<2x73xf32, #tpu.memory_space<vmem>>, vector<2x1xf32>,
    %c0_68 = arith.constant 0 : index
    %c5_69 = arith.constant 5 : index
    %130 = vector.load %arg7[%c0_68, %c5_69] : memref<2x73xi32, #tpu.memory_space<vmem>>, vector<2x1xi32>
    tpu.vector_store %arg7[%c0_68, %c5_69], %128 {strides = array<i32>} : memref<2x73xi32, #tpu.memory_space<vmem>>, vector<2x1xi32>,
    %cst_70 = arith.constant 0x7F800000 : f32
    %131 = vector.broadcast %cst_70 : f32 to vector<2x73xf32>
    %132 = arith.select %124, %131, %114 : vector<2x73xi1>, vector<2x73xf32>
    %cst_71 = arith.constant dense<0x7F800000> : vector<2xf32>
    %133 = vector.multi_reduction <minimumf>, %132, %cst_71 [1] : vector<2x73xf32> to vector<2xf32>
    %134 = vector.shape_cast %133 : vector<2xf32> to vector<2x1xf32>
    %135 = vector.broadcast %134 : vector<2x1xf32> to vector<2x73xf32>
    %136 = arith.cmpf ole, %132, %135 : vector<2x73xf32>
    %c2147483647_i32_72 = arith.constant 2147483647 : i32
    %137 = vector.broadcast %c2147483647_i32_72 : i32 to vector<2x73xi32>
    %138 = arith.select %136, %24, %137 : vector<2x73xi1>, vector<2x73xi32>
    %cst_73 = arith.constant dense<2147483647> : vector<2xi32>
    %139 = vector.multi_reduction <minsi>, %138, %cst_73 [1] : vector<2x73xi32> to vector<2xi32>
    %140 = vector.shape_cast %139 : vector<2xi32> to vector<2x1xi32>
    %141 = vector.broadcast %140 : vector<2x1xi32> to vector<2x73xi32>
    %142 = arith.cmpi eq, %24, %141 : vector<2x73xi32>
    %c0_i32_74 = arith.constant 0 : i32
    %143 = vector.broadcast %c0_i32_74 : i32 to vector<2x73xi32>
    %144 = arith.select %142, %23, %143 : vector<2x73xi1>, vector<2x73xi32>
    %cst_75 = arith.constant dense<0> : vector<2xi32>
    %145 = vector.multi_reduction <add>, %144, %cst_75 [1] : vector<2x73xi32> to vector<2xi32>
    %146 = vector.shape_cast %145 : vector<2xi32> to vector<2x1xi32>
    %c0_76 = arith.constant 0 : index
    %c6 = arith.constant 6 : index
    %147 = vector.load %arg6[%c0_76, %c6] : memref<2x73xf32, #tpu.memory_space<vmem>>, vector<2x1xf32>
    tpu.vector_store %arg6[%c0_76, %c6], %134 {strides = array<i32>} : memref<2x73xf32, #tpu.memory_space<vmem>>, vector<2x1xf32>,
    %c0_77 = arith.constant 0 : index
    %c6_78 = arith.constant 6 : index
    %148 = vector.load %arg7[%c0_77, %c6_78] : memref<2x73xi32, #tpu.memory_space<vmem>>, vector<2x1xi32>
    tpu.vector_store %arg7[%c0_77, %c6_78], %146 {strides = array<i32>} : memref<2x73xi32, #tpu.memory_space<vmem>>, vector<2x1xi32>,
    %cst_79 = arith.constant 0x7F800000 : f32
    %149 = vector.broadcast %cst_79 : f32 to vector<2x73xf32>
    %150 = arith.select %142, %149, %132 : vector<2x73xi1>, vector<2x73xf32>
    %cst_80 = arith.constant dense<0x7F800000> : vector<2xf32>
    %151 = vector.multi_reduction <minimumf>, %150, %cst_80 [1] : vector<2x73xf32> to vector<2xf32>
    %152 = vector.shape_cast %151 : vector<2xf32> to vector<2x1xf32>
    %153 = vector.broadcast %152 : vector<2x1xf32> to vector<2x73xf32>
    %154 = arith.cmpf ole, %150, %153 : vector<2x73xf32>
    %c2147483647_i32_81 = arith.constant 2147483647 : i32
    %155 = vector.broadcast %c2147483647_i32_81 : i32 to vector<2x73xi32>
    %156 = arith.select %154, %24, %155 : vector<2x73xi1>, vector<2x73xi32>
    %cst_82 = arith.constant dense<2147483647> : vector<2xi32>
    %157 = vector.multi_reduction <minsi>, %156, %cst_82 [1] : vector<2x73xi32> to vector<2xi32>
    %158 = vector.shape_cast %157 : vector<2xi32> to vector<2x1xi32>
    %159 = vector.broadcast %158 : vector<2x1xi32> to vector<2x73xi32>
    %160 = arith.cmpi eq, %24, %159 : vector<2x73xi32>
    %c0_i32_83 = arith.constant 0 : i32
    %161 = vector.broadcast %c0_i32_83 : i32 to vector<2x73xi32>
    %162 = arith.select %160, %23, %161 : vector<2x73xi1>, vector<2x73xi32>
    %cst_84 = arith.constant dense<0> : vector<2xi32>
    %163 = vector.multi_reduction <add>, %162, %cst_84 [1] : vector<2x73xi32> to vector<2xi32>
    %164 = vector.shape_cast %163 : vector<2xi32> to vector<2x1xi32>
    %c0_85 = arith.constant 0 : index
    %c7 = arith.constant 7 : index
    %165 = vector.load %arg6[%c0_85, %c7] : memref<2x73xf32, #tpu.memory_space<vmem>>, vector<2x1xf32>
    tpu.vector_store %arg6[%c0_85, %c7], %152 {strides = array<i32>} : memref<2x73xf32, #tpu.memory_space<vmem>>, vector<2x1xf32>,
    %c0_86 = arith.constant 0 : index
    %c7_87 = arith.constant 7 : index
    %166 = vector.load %arg7[%c0_86, %c7_87] : memref<2x73xi32, #tpu.memory_space<vmem>>, vector<2x1xi32>
    tpu.vector_store %arg7[%c0_86, %c7_87], %164 {strides = array<i32>} : memref<2x73xi32, #tpu.memory_space<vmem>>, vector<2x1xi32>,
    %cst_88 = arith.constant 0x7F800000 : f32
    %167 = vector.broadcast %cst_88 : f32 to vector<2x73xf32>
    %168 = arith.select %160, %167, %150 : vector<2x73xi1>, vector<2x73xf32>
    %cst_89 = arith.constant dense<0x7F800000> : vector<2xf32>
    %169 = vector.multi_reduction <minimumf>, %168, %cst_89 [1] : vector<2x73xf32> to vector<2xf32>
    %170 = vector.shape_cast %169 : vector<2xf32> to vector<2x1xf32>
    %171 = vector.broadcast %170 : vector<2x1xf32> to vector<2x73xf32>
    %172 = arith.cmpf ole, %168, %171 : vector<2x73xf32>
    %c2147483647_i32_90 = arith.constant 2147483647 : i32
    %173 = vector.broadcast %c2147483647_i32_90 : i32 to vector<2x73xi32>
    %174 = arith.select %172, %24, %173 : vector<2x73xi1>, vector<2x73xi32>
    %cst_91 = arith.constant dense<2147483647> : vector<2xi32>
    %175 = vector.multi_reduction <minsi>, %174, %cst_91 [1] : vector<2x73xi32> to vector<2xi32>
    %176 = vector.shape_cast %175 : vector<2xi32> to vector<2x1xi32>
    %177 = vector.broadcast %176 : vector<2x1xi32> to vector<2x73xi32>
    %178 = arith.cmpi eq, %24, %177 : vector<2x73xi32>
    %c0_i32_92 = arith.constant 0 : i32
    %179 = vector.broadcast %c0_i32_92 : i32 to vector<2x73xi32>
    %180 = arith.select %178, %23, %179 : vector<2x73xi1>, vector<2x73xi32>
    %cst_93 = arith.constant dense<0> : vector<2xi32>
    %181 = vector.multi_reduction <add>, %180, %cst_93 [1] : vector<2x73xi32> to vector<2xi32>
    %182 = vector.shape_cast %181 : vector<2xi32> to vector<2x1xi32>
    %c0_94 = arith.constant 0 : index
    %c8 = arith.constant 8 : index
    %183 = vector.load %arg6[%c0_94, %c8] : memref<2x73xf32, #tpu.memory_space<vmem>>, vector<2x1xf32>
    tpu.vector_store %arg6[%c0_94, %c8], %170 {strides = array<i32>} : memref<2x73xf32, #tpu.memory_space<vmem>>, vector<2x1xf32>,
    %c0_95 = arith.constant 0 : index
    %c8_96 = arith.constant 8 : index
    %184 = vector.load %arg7[%c0_95, %c8_96] : memref<2x73xi32, #tpu.memory_space<vmem>>, vector<2x1xi32>
    tpu.vector_store %arg7[%c0_95, %c8_96], %182 {strides = array<i32>} : memref<2x73xi32, #tpu.memory_space<vmem>>, vector<2x1xi32>,
    %c0_i32_97 = arith.constant 0 : i32
    %185 = arith.cmpi eq, %arg0, %c0_i32_97 : i32
    %186 = arith.extui %185 : i1 to i32
    %c0_i32_98 = arith.constant 0 : i32
    %187 = arith.cmpi ne, %186, %c0_i32_98 : i32
    scf.if %187 {
      %c0_99 = arith.constant 0 : index
      %c0_100 = arith.constant 0 : index
      %188 = vector.load %arg7[%c0_99, %c0_100] : memref<2x73xi32, #tpu.memory_space<vmem>>, vector<2x9xi32>
      %c0_101 = arith.constant 0 : index
      %c0_102 = arith.constant 0 : index
      %189 = vector.load %arg5[%c0_101, %c0_102] : memref<2x9xi32, #tpu.memory_space<vmem>>, vector<2x9xi32>
      tpu.vector_store %arg5[%c0_101, %c0_102], %188 {strides = array<i32>} : memref<2x9xi32, #tpu.memory_space<vmem>>, vector<2x9xi32>,
    } else {
    }
    return
  }
  func.func @transform_0(%arg0: i32) -> (i32, i32) {
    %c0_i32 = arith.constant 0 : i32
    %c0_i32_0 = arith.constant 0 : i32
    %c0_i32_1 = arith.constant 0 : i32
    return %c0_i32, %c0_i32_0 : i32, i32
  }
  func.func @transform_1(%arg0: i32) -> (i32, i32) {
    %c0_i32 = arith.constant 0 : i32
    %c0_i32_0 = arith.constant 0 : i32
    return %arg0, %c0_i32 : i32, i32
  }
  func.func @transform_2(%arg0: i32) -> (i32, i32) {
    %c0_i32 = arith.constant 0 : i32
    %c0_i32_0 = arith.constant 0 : i32
    %c0_i32_1 = arith.constant 0 : i32
    return %c0_i32, %c0_i32_0 : i32, i32
  }
  func.func @transform_3(%arg0: i32) -> (i32, i32) {
    %c0_i32 = arith.constant 0 : i32
    %c0_i32_0 = arith.constant 0 : i32
    return %c0_i32, %arg0 : i32, i32
  }
  func.func @transform_4(%arg0: i32) -> (i32, i32) {
    %c0_i32 = arith.constant 0 : i32
    %c0_i32_0 = arith.constant 0 : i32
    %c0_i32_1 = arith.constant 0 : i32
    return %c0_i32, %c0_i32_0 : i32, i32
  }
}

module attributes {stable_mosaic.version = 11 : i64} {
  func.func @_upsample_blur_kernel(%arg0: i32, %arg1: memref<8x16xf32, #tpu.memory_space<vmem>>, %arg2: memref<64x8xf32, #tpu.memory_space<vmem>>, %arg3: memref<16x128xf32, #tpu.memory_space<vmem>>, %arg4: memref<64x128xf32, #tpu.memory_space<vmem>>) attributes {dimension_semantics = [#tpu.dimension_semantics<arbitrary>], iteration_bounds = array<i64: 1>, scalar_prefetch = 0 : i64, scratch_operands = 0 : i64, tpu.core_type = #tpu.core_type<tc>, window_params = [{pipeline_mode = #tpu.pipeline_mode<synchronous>, transform_indices = @transform_0, window_bounds = array<i64: 8, 16>}, {pipeline_mode = #tpu.pipeline_mode<synchronous>, transform_indices = @transform_1, window_bounds = array<i64: 64, 8>}, {pipeline_mode = #tpu.pipeline_mode<synchronous>, transform_indices = @transform_2, window_bounds = array<i64: 16, 128>}, {pipeline_mode = #tpu.pipeline_mode<synchronous>, transform_indices = @transform_3, window_bounds = array<i64: 64, 128>}]} {
    %c0 = arith.constant 0 : index
    %c0_0 = arith.constant 0 : index
    %0 = vector.load %arg2[%c0, %c0_0] : memref<64x8xf32, #tpu.memory_space<vmem>>, vector<64x8xf32>
    %c0_1 = arith.constant 0 : index
    %c0_2 = arith.constant 0 : index
    %1 = vector.load %arg1[%c0_1, %c0_2] : memref<8x16xf32, #tpu.memory_space<vmem>>, vector<8x16xf32>
    %cst = arith.constant dense<0.000000e+00> : vector<64x16xf32>
    %2 = tpu.matmul %0, %1, %cst {dimension_numbers = #tpu.dot_dimension_numbers<[1], [0], [0], [1], [0, 0, 1, 1], [], []>} : vector<64x8xf32>, vector<8x16xf32>, vector<64x16xf32> -> vector<64x16xf32>
    %c0_3 = arith.constant 0 : index
    %c0_4 = arith.constant 0 : index
    %3 = vector.load %arg3[%c0_3, %c0_4] : memref<16x128xf32, #tpu.memory_space<vmem>>, vector<16x128xf32>
    %cst_5 = arith.constant dense<0.000000e+00> : vector<64x128xf32>
    %4 = tpu.matmul %2, %3, %cst_5 {dimension_numbers = #tpu.dot_dimension_numbers<[1], [0], [0], [1], [0, 0, 1, 1], [], []>} : vector<64x16xf32>, vector<16x128xf32>, vector<64x128xf32> -> vector<64x128xf32>
    %c0_6 = arith.constant 0 : index
    %c0_7 = arith.constant 0 : index
    %5 = vector.load %arg4[%c0_6, %c0_7] : memref<64x128xf32, #tpu.memory_space<vmem>>, vector<64x128xf32>
    tpu.vector_store %arg4[%c0_6, %c0_7], %4 {strides = array<i32>} : memref<64x128xf32, #tpu.memory_space<vmem>>, vector<64x128xf32>,
    return
  }
  func.func @transform_0(%arg0: i32) -> (i32, i32) {
    %c0_i32 = arith.constant 0 : i32
    %c0_i32_0 = arith.constant 0 : i32
    %c0_i32_1 = arith.constant 0 : i32
    return %c0_i32, %c0_i32_0 : i32, i32
  }
  func.func @transform_1(%arg0: i32) -> (i32, i32) {
    %c0_i32 = arith.constant 0 : i32
    %c0_i32_0 = arith.constant 0 : i32
    %c0_i32_1 = arith.constant 0 : i32
    return %c0_i32, %c0_i32_0 : i32, i32
  }
  func.func @transform_2(%arg0: i32) -> (i32, i32) {
    %c0_i32 = arith.constant 0 : i32
    %c0_i32_0 = arith.constant 0 : i32
    %c0_i32_1 = arith.constant 0 : i32
    return %c0_i32, %c0_i32_0 : i32, i32
  }
  func.func @transform_3(%arg0: i32) -> (i32, i32) {
    %c0_i32 = arith.constant 0 : i32
    %c0_i32_0 = arith.constant 0 : i32
    %c0_i32_1 = arith.constant 0 : i32
    return %c0_i32, %c0_i32_0 : i32, i32
  }
}

</mosaic_0001>

<llo_original>
// kernel: _lambda_.5
$region0: #{_lambda_.5}
  #allocation0 [shape = 'u32[]', space=smem, size = 0x4, offset = 0x4, fixed_abs, tag = 'smem constant byte address 0x4 - core index']
  #allocation1 [shape = 'u32[144,128]{1,0:T(1,128)}', space=vmem, size = 0x12000, scoped, tag = 'internal scratch']
  #allocation2 [shape = 'f32[2,10,10,16]{3,2,1,0:T(8,128)}', space=vmem, size = 0x28000, scoped, tag = 'scratch operand']
  %s0 = inlined_call_operand.vmem [shape: f32[128,27], index: 0, kind: input, shape index: {}]
  %s1 = inlined_call_operand.vmem [shape: f32[27,16], index: 1, kind: input, shape index: {}]
  %s2 = inlined_call_operand.vmem [shape: f32[1,16], index: 2, kind: input, shape index: {}]
  %s3 = inlined_call_operand.vmem [shape: f32[2,8,8,16], index: 3, kind: output, shape index: {}]
  %s4 = sld [smem:[#allocation0]]
  $region22: #{_lambda_.5} parent=0
    _
  %s6 = ssub.s32 1, %s4
  %s7 = scalar_select 0, %s6, %s4
  // Predicated region
  $region2: #{_lambda_.5} parent=0 // pred_check
    _
  $region3: #{_lambda_.5} parent=0 // pred_check_branch
    %9 = sbr.rel (0) target = $region5
  $region4: #{_lambda_.5} parent=0 // pred_region
    _
  $region5: #{_lambda_.5} parent=0 // pred_fallthru
    _
  // Predicated region
  $region6: #{_lambda_.5} parent=0 // pred_check
    _
  $region7: #{_lambda_.5} parent=0 // pred_check_branch
    %11 = sbr.rel (0) target = $region9
  $region8: #{_lambda_.5} parent=0 // pred_region
    _
  $region9: #{_lambda_.5} parent=0 // pred_fallthru
    _
  // Predicated region
  $region10: #{_lambda_.5} parent=0 // pred_check
    _
  $region11: #{_lambda_.5} parent=0 // pred_check_branch
    %13 = sbr.rel (0) target = $region13
  $region12: #{_lambda_.5} parent=0 // pred_region
    _
  $region13: #{_lambda_.5} parent=0 // pred_fallthru
    _
  %v14 = vld [vmem:[%s0] sm:$0xff]
  %v15 = vld [vmem:[%s0 + $0x8] sm:$0xff]
  %v16 = vld [vmem:[%s0 + $0x10] sm:$0xff]
  %v17 = vld [vmem:[%s0 + $0x18] sm:$0xff]
  %v18 = vld [vmem:[%s0 + $0x20] sm:$0xff]
  %v19 = vld [vmem:[%s0 + $0x28] sm:$0xff]
  %v20 = vld [vmem:[%s0 + $0x30] sm:$0xff]
  %v21 = vld [vmem:[%s0 + $0x38] sm:$0xff]
  %v22 = vld [vmem:[%s0 + $0x40] sm:$0xff]
  %v23 = vld [vmem:[%s0 + $0x48] sm:$0xff]
  %v24 = vld [vmem:[%s0 + $0x50] sm:$0xff]
  %v25 = vld [vmem:[%s0 + $0x58] sm:$0xff]
  %v26 = vld [vmem:[%s0 + $0x60] sm:$0xff]
  %v27 = vld [vmem:[%s0 + $0x68] sm:$0xff]
  %v28 = vld [vmem:[%s0 + $0x70] sm:$0xff]
  %v29 = vld [vmem:[%s0 + $0x78] sm:$0xff]
  %v30 = vld [vmem:[%s1] sm:$0xff]
  %v31 = vld [vmem:[%s1 + $0x8] sm:$0xff]
  %v32 = vld [vmem:[%s1 + $0x10] sm:$0xff]
  %v33 = vld [vmem:[%s1 + $0x18] sm:$0x7]
  %v34 = vld [vmem:[%s2] sm:$0x1]
  %v36 = vlaneseq
  %v37 = vshrl.u32 %v36, 7
  %v38 = vsub.s32 0, %v37
  %v39 = vrot.slane %v34, %v38
  %vm41 = vcmask 220160
  %v43 = vsel %vm41, %v14, 0
  %v46 = vsel %vm41, %v15, 0
  %v49 = vsel %vm41, %v16, 0
  %v52 = vsel %vm41, %v17, 0
  %v55 = vsel %vm41, %v18, 0
  %v58 = vsel %vm41, %v19, 0
  %v61 = vsel %vm41, %v20, 0
  %v64 = vsel %vm41, %v21, 0
  %v67 = vsel %vm41, %v22, 0
  %v70 = vsel %vm41, %v23, 0
  %v73 = vsel %vm41, %v24, 0
  %v76 = vsel %vm41, %v25, 0
  %v79 = vsel %vm41, %v26, 0
  %v82 = vsel %vm41, %v27, 0
  %v85 = vsel %vm41, %v28, 0
  %v88 = vsel %vm41, %v29, 0
  %vm90 = vcmask 1042432
  %v92 = vsel %vm90, %v33, 0
  %94 = vmatprep.subr.mxu0 0.0
  %95 = vmatpush1.msra.mxu0 %v30
  %96 = vmatprep.subr.mxu0 0.0
  %97 = vmatpush1.msra.mxu0 %v31
  %98 = vmatprep.subr.mxu0 0.0
  %99 = vmatpush1.msra.mxu0 %v32
  %100 = vmatprep.subr.mxu0 0.0
  %101 = vmatpush1.msra.mxu0 %v92
  %102 = vmatprep.subr.mxu0 0.0
  %103 = vmatpush1.msra.mxu0 0.0
  %104 = vmatprep.subr.mxu0 0.0
  %105 = vmatpush1.msra.mxu0 0.0
  %106 = vmatprep.subr.mxu0 0.0
  %107 = vmatpush1.msra.mxu0 0.0
  %108 = vmatprep.subr.mxu0 0.0
  %109 = vmatpush1.msra.mxu0 0.0
  %110 = vmatprep.subr.mxu0 0.0
  %111 = vmatpush1.msra.mxu0 0.0
  %112 = vmatprep.subr.mxu0 0.0
  %113 = vmatpush1.msra.mxu0 0.0
  %114 = vmatprep.subr.mxu0 0.0
  %115 = vmatpush1.msra.mxu0 0.0
  %116 = vmatprep.subr.mxu0 0.0
  %117 = vmatpush1.msra.mxu0 0.0
  %118 = vmatprep.subr.mxu0 0.0
  %119 = vmatpush1.msra.mxu0 0.0
  %120 = vmatprep.subr.mxu0 0.0
  %121 = vmatpush1.msra.mxu0 0.0
  %122 = vmatprep.subr.mxu0 0.0
  %123 = vmatpush1.msra.mxu0 0.0
  %124 = vmatprep.subr.mxu0 0.0
  %125 = vmatpush1.msra.mxu0 0.0
  %126 = vmatprep.subr.mxu0 0.0
  %127 = vmatpush1.msra.mxu0 0.0
  %128 = vmatprep.subr.mxu0 0.0
  %129 = vmatpush1.msra.mxu0 0.0
  %130 = vmatprep.subr.mxu0 0.0
  %131 = vmatpush1.msra.mxu0 0.0
  %132 = vmatprep.subr.mxu0 0.0
  %133 = vmatpush1.msra.mxu0 0.0
  %134 = vmatprep.subr.mxu0 0.0
  %135 = vmatpush1.msra.mxu0 0.0
  %136 = vmatprep.subr.mxu0 0.0
  %137 = vmatpush1.msra.mxu0 0.0
  %138 = vmatprep.subr.mxu0 0.0
  %139 = vmatpush1.msra.mxu0 0.0
  %140 = vmatprep.subr.mxu0 0.0
  %141 = vmatpush1.msra.mxu0 0.0
  %142 = vmatprep.subr.mxu0 0.0
  %143 = vmatpush1.msra.mxu0 0.0
  %144 = vmatprep.subr.mxu0 0.0
  %145 = vmatpush1.msra.mxu0 0.0
  %146 = vmatprep.subr.mxu0 0.0
  %147 = vmatpush1.msra.mxu0 0.0
  %148 = vmatprep.subr.mxu0 0.0
  %149 = vmatpush1.msra.mxu0 0.0
  %150 = vmatprep.subr.mxu0 0.0
  %151 = vmatpush1.msra.mxu0 0.0
  %152 = vmatprep.subr.mxu0 0.0
  %153 = vmatpush1.msra.mxu0 0.0
  %154 = vmatprep.subr.mxu0 0.0
  %155 = vmatpush1.msra.mxu0 0.0
  %156 = vmatprep.subr.mxu0 0.0
  %157 = vmatpush1.msra.mxu0 0.0
  %158 = vmatprep.mubr.f32.mxu0 0.0
  %159 = vmatmul.mubr.f32.gmra.mrb[0].mxu0 %v43
  %v160 = vpop.f32.mrb[0].mxu0
  %v161 = vadd.f32 %v39, %v160
  %v162 = vpop.f32.mrb[0].mxu0
  %163 = vmatprep.mubr.f32.mxu0 0.0
  %164 = vmatmul.mubr.f32.gmra.mrb[0].mxu0 %v46
  %v165 = vpop.f32.mrb[0].mxu0
  %v166 = vadd.f32 %v39, %v165
  %v167 = vpop.f32.mrb[0].mxu0
  %168 = vmatprep.mubr.f32.mxu0 0.0
  %169 = vmatmul.mubr.f32.gmra.mrb[0].mxu0 %v49
  %v170 = vpop.f32.mrb[0].mxu0
  %v171 = vadd.f32 %v39, %v170
  %v172 = vpop.f32.mrb[0].mxu0
  %173 = vmatprep.mubr.f32.mxu0 0.0
  %174 = vmatmul.mubr.f32.gmra.mrb[0].mxu0 %v52
  %v175 = vpop.f32.mrb[0].mxu0
  %v176 = vadd.f32 %v39, %v175
  %v177 = vpop.f32.mrb[0].mxu0
  %178 = vmatprep.mubr.f32.mxu0 0.0
  %179 = vmatmul.mubr.f32.gmra.mrb[0].mxu0 %v55
  %v180 = vpop.f32.mrb[0].mxu0
  %v181 = vadd.f32 %v39, %v180
  %v182 = vpop.f32.mrb[0].mxu0
  %183 = vmatprep.mubr.f32.mxu0 0.0
  %184 = vmatmul.mubr.f32.gmra.mrb[0].mxu0 %v58
  %v185 = vpop.f32.mrb[0].mxu0
  %v186 = vadd.f32 %v39, %v185
  %v187 = vpop.f32.mrb[0].mxu0
  %188 = vmatprep.mubr.f32.mxu0 0.0
  %189 = vmatmul.mubr.f32.gmra.mrb[0].mxu0 %v61
  %v190 = vpop.f32.mrb[0].mxu0
  %v191 = vadd.f32 %v39, %v190
  %v192 = vpop.f32.mrb[0].mxu0
  %193 = vmatprep.mubr.f32.mxu0 0.0
  %194 = vmatmul.mubr.f32.gmra.mrb[0].mxu0 %v64
  %v195 = vpop.f32.mrb[0].mxu0
  %v196 = vadd.f32 %v39, %v195
  %v197 = vpop.f32.mrb[0].mxu0
  %198 = vmatprep.mubr.f32.mxu0 0.0
  %199 = vmatmul.mubr.f32.gmra.mrb[0].mxu0 %v67
  %v200 = vpop.f32.mrb[0].mxu0
  %v201 = vadd.f32 %v39, %v200
  %v202 = vpop.f32.mrb[0].mxu0
  %203 = vmatprep.mubr.f32.mxu0 0.0
  %204 = vmatmul.mubr.f32.gmra.mrb[0].mxu0 %v70
  %v205 = vpop.f32.mrb[0].mxu0
  %v206 = vadd.f32 %v39, %v205
  %v207 = vpop.f32.mrb[0].mxu0
  %208 = vmatprep.mubr.f32.mxu0 0.0
  %209 = vmatmul.mubr.f32.gmra.mrb[0].mxu0 %v73
  %v210 = vpop.f32.mrb[0].mxu0
  %v211 = vadd.f32 %v39, %v210
  %v212 = vpop.f32.mrb[0].mxu0
  %213 = vmatprep.mubr.f32.mxu0 0.0
  %214 = vmatmul.mubr.f32.gmra.mrb[0].mxu0 %v76
  %v215 = vpop.f32.mrb[0].mxu0
  %v216 = vadd.f32 %v39, %v215
  %v217 = vpop.f32.mrb[0].mxu0
  %218 = vmatprep.mubr.f32.mxu0 0.0
  %219 = vmatmul.mubr.f32.gmra.mrb[0].mxu0 %v79
  %v220 = vpop.f32.mrb[0].mxu0
  %v221 = vadd.f32 %v39, %v220
  %v222 = vpop.f32.mrb[0].mxu0
  %223 = vmatprep.mubr.f32.mxu0 0.0
  %224 = vmatmul.mubr.f32.gmra.mrb[0].mxu0 %v82
  %v225 = vpop.f32.mrb[0].mxu0
  %v226 = vadd.f32 %v39, %v225
  %v227 = vpop.f32.mrb[0].mxu0
  %228 = vmatprep.mubr.f32.mxu0 0.0
  %229 = vmatmul.mubr.f32.gmra.mrb[0].mxu0 %v85
  %v230 = vpop.f32.mrb[0].mxu0
  %v231 = vadd.f32 %v39, %v230
  %v232 = vpop.f32.mrb[0].mxu0
  %233 = vmatprep.mubr.f32.mxu0 0.0
  %234 = vmatmul.mubr.f32.gmra.mrb[0].mxu0 %v88
  %v235 = vpop.f32.mrb[0].mxu0
  %v236 = vadd.f32 %v39, %v235
  %v237 = vpop.f32.mrb[0].mxu0
  %238 = vdwg.mxu0
  %vm239 = vcmask 130048
  %240 = vst.msk [vmem:[#allocation2] sm:$0xff] %vm239, 0.0
  %vm241 = vcmask 123904
  %242 = vst.msk [vmem:[#allocation2 + $0x8] sm:$0x3] %vm241, 0.0
  %243 = vst.msk [vmem:[#allocation2 + $0x10] sm:$0xff] %vm239, 0.0
  %244 = vst.msk [vmem:[#allocation2 + $0x18] sm:$0x3] %vm241, 0.0
  %245 = vst.msk [vmem:[#allocation2 + $0x20] sm:$0xff] %vm239, 0.0
  %246 = vst.msk [vmem:[#allocation2 + $0x28] sm:$0x3] %vm241, 0.0
  %247 = vst.msk [vmem:[#allocation2 + $0x30] sm:$0xff] %vm239, 0.0
  %248 = vst.msk [vmem:[#allocation2 + $0x38] sm:$0x3] %vm241, 0.0
  %249 = vst.msk [vmem:[#allocation2 + $0x40] sm:$0xff] %vm239, 0.0
  %250 = vst.msk [vmem:[#allocation2 + $0x48] sm:$0x3] %vm241, 0.0
  %251 = vst.msk [vmem:[#allocation2 + $0x50] sm:$0xff] %vm239, 0.0
  %252 = vst.msk [vmem:[#allocation2 + $0x58] sm:$0x3] %vm241, 0.0
  %253 = vst.msk [vmem:[#allocation2 + $0x60] sm:$0xff] %vm239, 0.0
  %254 = vst.msk [vmem:[#allocation2 + $0x68] sm:$0x3] %vm241, 0.0
  %255 = vst.msk [vmem:[#allocation2 + $0x70] sm:$0xff] %vm239, 0.0
  %256 = vst.msk [vmem:[#allocation2 + $0x78] sm:$0x3] %vm241, 0.0
  %257 = vst.msk [vmem:[#allocation2 + $0x80] sm:$0xff] %vm239, 0.0
  %258 = vst.msk [vmem:[#allocation2 + $0x88] sm:$0x3] %vm241, 0.0
  %259 = vst.msk [vmem:[#allocation2 + $0x90] sm:$0xff] %vm239, 0.0
  %260 = vst.msk [vmem:[#allocation2 + $0x98] sm:$0x3] %vm241, 0.0
  %261 = vst.msk [vmem:[#allocation2 + $0xa0] sm:$0xff] %vm239, 0.0
  %262 = vst.msk [vmem:[#allocation2 + $0xa8] sm:$0x3] %vm241, 0.0
  %263 = vst.msk [vmem:[#allocation2 + $0xb0] sm:$0xff] %vm239, 0.0
  %264 = vst.msk [vmem:[#allocation2 + $0xb8] sm:$0x3] %vm241, 0.0
  %265 = vst.msk [vmem:[#allocation2 + $0xc0] sm:$0xff] %vm239, 0.0
  %266 = vst.msk [vmem:[#allocation2 + $0xc8] sm:$0x3] %vm241, 0.0
  %267 = vst.msk [vmem:[#allocation2 + $0xd0] sm:$0xff] %vm239, 0.0
  %268 = vst.msk [vmem:[#allocation2 + $0xd8] sm:$0x3] %vm241, 0.0
  %269 = vst.msk [vmem:[#allocation2 + $0xe0] sm:$0xff] %vm239, 0.0
  %270 = vst.msk [vmem:[#allocation2 + $0xe8] sm:$0x3] %vm241, 0.0
  %271 = vst.msk [vmem:[#allocation2 + $0xf0] sm:$0xff] %vm239, 0.0
  %272 = vst.msk [vmem:[#allocation2 + $0xf8] sm:$0x3] %vm241, 0.0
  %273 = vst.msk [vmem:[#allocation2 + $0x100] sm:$0xff] %vm239, 0.0
  %274 = vst.msk [vmem:[#allocation2 + $0x108] sm:$0x3] %vm241, 0.0
  %275 = vst.msk [vmem:[#allocation2 + $0x110] sm:$0xff] %vm239, 0.0
  %276 = vst.msk [vmem:[#allocation2 + $0x118] sm:$0x3] %vm241, 0.0
  %277 = vst.msk [vmem:[#allocation2 + $0x120] sm:$0xff] %vm239, 0.0
  %278 = vst.msk [vmem:[#allocation2 + $0x128] sm:$0x3] %vm241, 0.0
  %279 = vst.msk [vmem:[#allocation2 + $0x130] sm:$0xff] %vm239, 0.0
  %280 = vst.msk [vmem:[#allocation2 + $0x138] sm:$0x3] %vm241, 0.0
  %s281 = scalar_lea.vmem [#allocation2], 16
  %282 = vst.msk [vmem:[%s281 + $0x1] sm:$0xff] %vm239, %v161
  %283 = vst.msk [vmem:[%s281 + $0x11] sm:$0xff] %vm239, %v166
  %284 = vst.msk [vmem:[%s281 + $0x21] sm:$0xff] %vm239, %v171
  %285 = vst.msk [vmem:[%s281 + $0x31] sm:$0xff] %vm239, %v176
  %286 = vst.msk [vmem:[%s281 + $0x41] sm:$0xff] %vm239, %v181
  %287 = vst.msk [vmem:[%s281 + $0x51] sm:$0xff] %vm239, %v186
  %288 = vst.msk [vmem:[%s281 + $0x61] sm:$0xff] %vm239, %v191
  %289 = vst.msk [vmem:[%s281 + $0x71] sm:$0xff] %vm239, %v196
  %s290 = scalar_lea.vmem [#allocation2], 176
  %291 = vst.msk [vmem:[%s290 + $0x1] sm:$0xff] %vm239, %v201
  %292 = vst.msk [vmem:[%s290 + $0x11] sm:$0xff] %vm239, %v206
  %293 = vst.msk [vmem:[%s290 + $0x21] sm:$0xff] %vm239, %v211
  %294 = vst.msk [vmem:[%s290 + $0x31] sm:$0xff] %vm239, %v216
  %295 = vst.msk [vmem:[%s290 + $0x41] sm:$0xff] %vm239, %v221
  %296 = vst.msk [vmem:[%s290 + $0x51] sm:$0xff] %vm239, %v226
  %297 = vst.msk [vmem:[%s290 + $0x61] sm:$0xff] %vm239, %v231
  %298 = vst.msk [vmem:[%s290 + $0x71] sm:$0xff] %vm239, %v236
  %v299 = vld [vmem:[#allocation2] sm:$0xff]
  %v300 = vld [vmem:[#allocation2 + $0x10] sm:$0xff]
  %v301 = vld [vmem:[#allocation2 + $0x20] sm:$0xff]
  %v302 = vld [vmem:[#allocation2 + $0x30] sm:$0xff]
  %v303 = vld [vmem:[#allocation2 + $0x40] sm:$0xff]
  %v304 = vld [vmem:[#allocation2 + $0x50] sm:$0xff]
  %v305 = vld [vmem:[#allocation2 + $0x60] sm:$0xff]
  %v306 = vld [vmem:[#allocation2 + $0x70] sm:$0xff]
  %v307 = vld [vmem:[#allocation2 + $0xa0] sm:$0xff]
  %v308 = vld [vmem:[#allocation2 + $0xb0] sm:$0xff]
  %v309 = vld [vmem:[#allocation2 + $0xc0] sm:$0xff]
  %v310 = vld [vmem:[#allocation2 + $0xd0] sm:$0xff]
  %v311 = vld [vmem:[#allocation2 + $0xe0] sm:$0xff]
  %v312 = vld [vmem:[#allocation2 + $0xf0] sm:$0xff]
  %v313 = vld [vmem:[#allocation2 + $0x100] sm:$0xff]
  %v314 = vld [vmem:[#allocation2 + $0x110] sm:$0xff]
  %v315 = vadd.f32 %v299, 0.0
  %v316 = vadd.f32 %v300, 0.0
  %v317 = vadd.f32 %v301, 0.0
  %v318 = vadd.f32 %v302, 0.0
  %v319 = vadd.f32 %v303, 0.0
  %v320 = vadd.f32 %v304, 0.0
  %v321 = vadd.f32 %v305, 0.0
  %v322 = vadd.f32 %v306, 0.0
  %v323 = vadd.f32 %v307, 0.0
  %v324 = vadd.f32 %v308, 0.0
  %v325 = vadd.f32 %v309, 0.0
  %v326 = vadd.f32 %v310, 0.0
  %v327 = vadd.f32 %v311, 0.0
  %v328 = vadd.f32 %v312, 0.0
  %v329 = vadd.f32 %v313, 0.0
  %v330 = vadd.f32 %v314, 0.0
  %v331 = vld [vmem:[#allocation2 + $0x1] sm:$0xff]
  %v332 = vld [vmem:[#allocation2 + $0x11] sm:$0xff]
  %v333 = vld [vmem:[#allocation2 + $0x21] sm:$0xff]
  %v334 = vld [vmem:[#allocation2 + $0x31] sm:$0xff]
  %v335 = vld [vmem:[#allocation2 + $0x41] sm:$0xff]
  %v336 = vld [vmem:[#allocation2 + $0x51] sm:$0xff]
  %v337 = vld [vmem:[#allocation2 + $0x61] sm:$0xff]
  %v338 = vld [vmem:[#allocation2 + $0x71] sm:$0xff]
  %v339 = vld [vmem:[#allocation2 + $0xa1] sm:$0xff]
  %v340 = vld [vmem:[#allocation2 + $0xb1] sm:$0xff]
  %v341 = vld [vmem:[#allocation2 + $0xc1] sm:$0xff]
  %v342 = vld [vmem:[#allocation2 + $0xd1] sm:$0xff]
  %v343 = vld [vmem:[#allocation2 + $0xe1] sm:$0xff]
  %v344 = vld [vmem:[#allocation2 + $0xf1] sm:$0xff]
  %v345 = vld [vmem:[#allocation2 + $0x101] sm:$0xff]
  %v346 = vld [vmem:[#allocation2 + $0x111] sm:$0xff]
  %v347 = vadd.f32 %v315, %v331
  %v348 = vadd.f32 %v316, %v332
  %v349 = vadd.f32 %v317, %v333
  %v350 = vadd.f32 %v318, %v334
  %v351 = vadd.f32 %v319, %v335
  %v352 = vadd.f32 %v320, %v336
  %v353 = vadd.f32 %v321, %v337
  %v354 = vadd.f32 %v322, %v338
  %v355 = vadd.f32 %v323, %v339
  %v356 = vadd.f32 %v324, %v340
  %v357 = vadd.f32 %v325, %v341
  %v358 = vadd.f32 %v326, %v342
  %v359 = vadd.f32 %v327, %v343
  %v360 = vadd.f32 %v328, %v344
  %v361 = vadd.f32 %v329, %v345
  %v362 = vadd.f32 %v330, %v346
  %v363 = vld [vmem:[#allocation2 + $0x2] sm:$0xff]
  %v364 = vld [vmem:[#allocation2 + $0x12] sm:$0xff]
  %v365 = vld [vmem:[#allocation2 + $0x22] sm:$0xff]
  %v366 = vld [vmem:[#allocation2 + $0x32] sm:$0xff]
  %v367 = vld [vmem:[#allocation2 + $0x42] sm:$0xff]
  %v368 = vld [vmem:[#allocation2 + $0x52] sm:$0xff]
  %v369 = vld [vmem:[#allocation2 + $0x62] sm:$0xff]
  %v370 = vld [vmem:[#allocation2 + $0x72] sm:$0xff]
  %v371 = vld [vmem:[#allocation2 + $0xa2] sm:$0xff]
  %v372 = vld [vmem:[#allocation2 + $0xb2] sm:$0xff]
  %v373 = vld [vmem:[#allocation2 + $0xc2] sm:$0xff]
  %v374 = vld [vmem:[#allocation2 + $0xd2] sm:$0xff]
  %v375 = vld [vmem:[#allocation2 + $0xe2] sm:$0xff]
  %v376 = vld [vmem:[#allocation2 + $0xf2] sm:$0xff]
  %v377 = vld [vmem:[#allocation2 + $0x102] sm:$0xff]
  %v378 = vld [vmem:[#allocation2 + $0x112] sm:$0xff]
  %v379 = vadd.f32 %v347, %v363
  %v380 = vadd.f32 %v348, %v364
  %v381 = vadd.f32 %v349, %v365
  %v382 = vadd.f32 %v350, %v366
  %v383 = vadd.f32 %v351, %v367
  %v384 = vadd.f32 %v352, %v368
  %v385 = vadd.f32 %v353, %v369
  %v386 = vadd.f32 %v354, %v370
  %v387 = vadd.f32 %v355, %v371
  %v388 = vadd.f32 %v356, %v372
  %v389 = vadd.f32 %v357, %v373
  %v390 = vadd.f32 %v358, %v374
  %v391 = vadd.f32 %v359, %v375
  %v392 = vadd.f32 %v360, %v376
  %v393 = vadd.f32 %v361, %v377
  %v394 = vadd.f32 %v362, %v378
  %v395 = vld [vmem:[%s281] sm:$0xff]
  %v396 = vld [vmem:[%s281 + $0x10] sm:$0xff]
  %v397 = vld [vmem:[%s281 + $0x20] sm:$0xff]
  %v398 = vld [vmem:[%s281 + $0x30] sm:$0xff]
  %v399 = vld [vmem:[%s281 + $0x40] sm:$0xff]
  %v400 = vld [vmem:[%s281 + $0x50] sm:$0xff]
  %v401 = vld [vmem:[%s281 + $0x60] sm:$0xff]
  %v402 = vld [vmem:[%s281 + $0x70] sm:$0xff]
  %v403 = vld [vmem:[%s281 + $0xa0] sm:$0xff]
  %v404 = vld [vmem:[%s281 + $0xb0] sm:$0xff]
  %v405 = vld [vmem:[%s281 + $0xc0] sm:$0xff]
  %v406 = vld [vmem:[%s281 + $0xd0] sm:$0xff]
  %v407 = vld [vmem:[%s281 + $0xe0] sm:$0xff]
  %v408 = vld [vmem:[%s281 + $0xf0] sm:$0xff]
  %v409 = vld [vmem:[%s281 + $0x100] sm:$0xff]
  %v410 = vld [vmem:[%s281 + $0x110] sm:$0xff]
  %v411 = vadd.f32 %v379, %v395
  %v412 = vadd.f32 %v380, %v396
  %v413 = vadd.f32 %v381, %v397
  %v414 = vadd.f32 %v382, %v398
  %v415 = vadd.f32 %v383, %v399
  %v416 = vadd.f32 %v384, %v400
  %v417 = vadd.f32 %v385, %v401
  %v418 = vadd.f32 %v386, %v402
  %v419 = vadd.f32 %v387, %v403
  %v420 = vadd.f32 %v388, %v404
  %v421 = vadd.f32 %v389, %v405
  %v422 = vadd.f32 %v390, %v406
  %v423 = vadd.f32 %v391, %v407
  %v424 = vadd.f32 %v392, %v408
  %v425 = vadd.f32 %v393, %v409
  %v426 = vadd.f32 %v394, %v410
  %v427 = vld [vmem:[%s281 + $0x1] sm:$0xff]
  %v428 = vld [vmem:[%s281 + $0x11] sm:$0xff]
  %v429 = vld [vmem:[%s281 + $0x21] sm:$0xff]
  %v430 = vld [vmem:[%s281 + $0x31] sm:$0xff]
  %v431 = vld [vmem:[%s281 + $0x41] sm:$0xff]
  %v432 = vld [vmem:[%s281 + $0x51] sm:$0xff]
  %v433 = vld [vmem:[%s281 + $0x61] sm:$0xff]
  %v434 = vld [vmem:[%s281 + $0x71] sm:$0xff]
  %v435 = vld [vmem:[%s281 + $0xa1] sm:$0xff]
  %v436 = vld [vmem:[%s281 + $0xb1] sm:$0xff]
  %v437 = vld [vmem:[%s281 + $0xc1] sm:$0xff]
  %v438 = vld [vmem:[%s281 + $0xd1] sm:$0xff]
  %v439 = vld [vmem:[%s281 + $0xe1] sm:$0xff]
  %v440 = vld [vmem:[%s281 + $0xf1] sm:$0xff]
  %v441 = vld [vmem:[%s281 + $0x101] sm:$0xff]
  %v442 = vld [vmem:[%s281 + $0x111] sm:$0xff]
  %v443 = vadd.f32 %v411, %v427
  %v444 = vadd.f32 %v412, %v428
  %v445 = vadd.f32 %v413, %v429
  %v446 = vadd.f32 %v414, %v430
  %v447 = vadd.f32 %v415, %v431
  %v448 = vadd.f32 %v416, %v432
  %v449 = vadd.f32 %v417, %v433
  %v450 = vadd.f32 %v418, %v434
  %v451 = vadd.f32 %v419, %v435
  %v452 = vadd.f32 %v420, %v436
  %v453 = vadd.f32 %v421, %v437
  %v454 = vadd.f32 %v422, %v438
  %v455 = vadd.f32 %v423, %v439
  %v456 = vadd.f32 %v424, %v440
  %v457 = vadd.f32 %v425, %v441
  %v458 = vadd.f32 %v426, %v442
  %v459 = vld [vmem:[%s281 + $0x2] sm:$0xff]
  %v460 = vld [vmem:[%s281 + $0x12] sm:$0xff]
  %v461 = vld [vmem:[%s281 + $0x22] sm:$0xff]
  %v462 = vld [vmem:[%s281 + $0x32] sm:$0xff]
  %v463 = vld [vmem:[%s281 + $0x42] sm:$0xff]
  %v464 = vld [vmem:[%s281 + $0x52] sm:$0xff]
  %v465 = vld [vmem:[%s281 + $0x62] sm:$0xff]
  %v466 = vld [vmem:[%s281 + $0x72] sm:$0xff]
  %v467 = vld [vmem:[%s281 + $0xa2] sm:$0xff]
  %v468 = vld [vmem:[%s281 + $0xb2] sm:$0xff]
  %v469 = vld [vmem:[%s281 + $0xc2] sm:$0xff]
  %v470 = vld [vmem:[%s281 + $0xd2] sm:$0xff]
  %v471 = vld [vmem:[%s281 + $0xe2] sm:$0xff]
  %v472 = vld [vmem:[%s281 + $0xf2] sm:$0xff]
  %v473 = vld [vmem:[%s281 + $0x102] sm:$0xff]
  %v474 = vld [vmem:[%s281 + $0x112] sm:$0xff]
  %v475 = vadd.f32 %v443, %v459
  %v476 = vadd.f32 %v444, %v460
  %v477 = vadd.f32 %v445, %v461
  %v478 = vadd.f32 %v446, %v462
  %v479 = vadd.f32 %v447, %v463
  %v480 = vadd.f32 %v448, %v464
  %v481 = vadd.f32 %v449, %v465
  %v482 = vadd.f32 %v450, %v466
  %v483 = vadd.f32 %v451, %v467
  %v484 = vadd.f32 %v452, %v468
  %v485 = vadd.f32 %v453, %v469
  %v486 = vadd.f32 %v454, %v470
  %v487 = vadd.f32 %v455, %v471
  %v488 = vadd.f32 %v456, %v472
  %v489 = vadd.f32 %v457, %v473
  %v490 = vadd.f32 %v458, %v474
  %s491 = scalar_lea.vmem [#allocation2], 32
  %v492 = vld [vmem:[%s491] sm:$0xff]
  %v493 = vld [vmem:[%s491 + $0x10] sm:$0xff]
  %v494 = vld [vmem:[%s491 + $0x20] sm:$0xff]
  %v495 = vld [vmem:[%s491 + $0x30] sm:$0xff]
  %v496 = vld [vmem:[%s491 + $0x40] sm:$0xff]
  %v497 = vld [vmem:[%s491 + $0x50] sm:$0xff]
  %v498 = vld [vmem:[%s491 + $0x60] sm:$0xff]
  %v499 = vld [vmem:[%s491 + $0x70] sm:$0xff]
  %v500 = vld [vmem:[%s491 + $0xa0] sm:$0xff]
  %v501 = vld [vmem:[%s491 + $0xb0] sm:$0xff]
  %v502 = vld [vmem:[%s491 + $0xc0] sm:$0xff]
  %v503 = vld [vmem:[%s491 + $0xd0] sm:$0xff]
  %v504 = vld [vmem:[%s491 + $0xe0] sm:$0xff]
  %v505 = vld [vmem:[%s491 + $0xf0] sm:$0xff]
  %v506 = vld [vmem:[%s491 + $0x100] sm:$0xff]
  %v507 = vld [vmem:[%s491 + $0x110] sm:$0xff]
  %v508 = vadd.f32 %v475, %v492
  %v509 = vadd.f32 %v476, %v493
  %v510 = vadd.f32 %v477, %v494
  %v511 = vadd.f32 %v478, %v495
  %v512 = vadd.f32 %v479, %v496
  %v513 = vadd.f32 %v480, %v497
  %v514 = vadd.f32 %v481, %v498
  %v515 = vadd.f32 %v482, %v499
  %v516 = vadd.f32 %v483, %v500
  %v517 = vadd.f32 %v484, %v501
  %v518 = vadd.f32 %v485, %v502
  %v519 = vadd.f32 %v486, %v503
  %v520 = vadd.f32 %v487, %v504
  %v521 = vadd.f32 %v488, %v505
  %v522 = vadd.f32 %v489, %v506
  %v523 = vadd.f32 %v490, %v507
  %v524 = vld [vmem:[%s491 + $0x1] sm:$0xff]
  %v525 = vld [vmem:[%s491 + $0x11] sm:$0xff]
  %v526 = vld [vmem:[%s491 + $0x21] sm:$0xff]
  %v527 = vld [vmem:[%s491 + $0x31] sm:$0xff]
  %v528 = vld [vmem:[%s491 + $0x41] sm:$0xff]
  %v529 = vld [vmem:[%s491 + $0x51] sm:$0xff]
  %v530 = vld [vmem:[%s491 + $0x61] sm:$0xff]
  %v531 = vld [vmem:[%s491 + $0x71] sm:$0xff]
  %v532 = vld [vmem:[%s491 + $0xa1] sm:$0xff]
  %v533 = vld [vmem:[%s491 + $0xb1] sm:$0xff]
  %v534 = vld [vmem:[%s491 + $0xc1] sm:$0xff]
  %v535 = vld [vmem:[%s491 + $0xd1] sm:$0xff]
  %v536 = vld [vmem:[%s491 + $0xe1] sm:$0xff]
  %v537 = vld [vmem:[%s491 + $0xf1] sm:$0xff]
  %v538 = vld [vmem:[%s491 + $0x101] sm:$0xff]
  %v539 = vld [vmem:[%s491 + $0x111] sm:$0xff]
  %v540 = vadd.f32 %v508, %v524
  %v541 = vadd.f32 %v509, %v525
  %v542 = vadd.f32 %v510, %v526
  %v543 = vadd.f32 %v511, %v527
  %v544 = vadd.f32 %v512, %v528
  %v545 = vadd.f32 %v513, %v529
  %v546 = vadd.f32 %v514, %v530
  %v547 = vadd.f32 %v515, %v531
  %v548 = vadd.f32 %v516, %v532
  %v549 = vadd.f32 %v517, %v533
  %v550 = vadd.f32 %v518, %v534
  %v551 = vadd.f32 %v519, %v535
  %v552 = vadd.f32 %v520, %v536
  %v553 = vadd.f32 %v521, %v537
  %v554 = vadd.f32 %v522, %v538
  %v555 = vadd.f32 %v523, %v539
  %v556 = vld [vmem:[%s491 + $0x2] sm:$0xff]
  %v557 = vld [vmem:[%s491 + $0x12] sm:$0xff]
  %v558 = vld [vmem:[%s491 + $0x22] sm:$0xff]
  %v559 = vld [vmem:[%s491 + $0x32] sm:$0xff]
  %v560 = vld [vmem:[%s491 + $0x42] sm:$0xff]
  %v561 = vld [vmem:[%s491 + $0x52] sm:$0xff]
  %v562 = vld [vmem:[%s491 + $0x62] sm:$0xff]
  %v563 = vld [vmem:[%s491 + $0x72] sm:$0xff]
  %v564 = vld [vmem:[%s491 + $0xa2] sm:$0xff]
  %v565 = vld [vmem:[%s491 + $0xb2] sm:$0xff]
  %v566 = vld [vmem:[%s491 + $0xc2] sm:$0xff]
  %v567 = vld [vmem:[%s491 + $0xd2] sm:$0xff]
  %v568 = vld [vmem:[%s491 + $0xe2] sm:$0xff]
  %v569 = vld [vmem:[%s491 + $0xf2] sm:$0xff]
  %v570 = vld [vmem:[%s491 + $0x102] sm:$0xff]
  %v571 = vld [vmem:[%s491 + $0x112] sm:$0xff]
  %v572 = vadd.f32 %v540, %v556
  %v573 = vadd.f32 %v541, %v557
  %v574 = vadd.f32 %v542, %v558
  %v575 = vadd.f32 %v543, %v559
  %v576 = vadd.f32 %v544, %v560
  %v577 = vadd.f32 %v545, %v561
  %v578 = vadd.f32 %v546, %v562
  %v579 = vadd.f32 %v547, %v563
  %v580 = vadd.f32 %v548, %v564
  %v581 = vadd.f32 %v549, %v565
  %v582 = vadd.f32 %v550, %v566
  %v583 = vadd.f32 %v551, %v567
  %v584 = vadd.f32 %v552, %v568
  %v585 = vadd.f32 %v553, %v569
  %v586 = vadd.f32 %v554, %v570
  %v587 = vadd.f32 %v555, %v571
  %v588 = vmul.f32 %v572, 0.11111111
  %v589 = vmul.f32 %v573, 0.11111111
  %v590 = vmul.f32 %v574, 0.11111111
  %v591 = vmul.f32 %v575, 0.11111111
  %v592 = vmul.f32 %v576, 0.11111111
  %v593 = vmul.f32 %v577, 0.11111111
  %v594 = vmul.f32 %v578, 0.11111111
  %v595 = vmul.f32 %v579, 0.11111111
  %v596 = vmul.f32 %v580, 0.11111111
  %v597 = vmul.f32 %v581, 0.11111111
  %v598 = vmul.f32 %v582, 0.11111111
  %v599 = vmul.f32 %v583, 0.11111111
  %v600 = vmul.f32 %v584, 0.11111111
  %v601 = vmul.f32 %v585, 0.11111111
  %v602 = vmul.f32 %v586, 0.11111111
  %v603 = vmul.f32 %v587, 0.11111111
  %604 = vst.msk [vmem:[%s3] sm:$0xff] %vm239, %v588
  %605 = vst.msk [vmem:[%s3 + $0x8] sm:$0xff] %vm239, %v589
  %606 = vst.msk [vmem:[%s3 + $0x10] sm:$0xff] %vm239, %v590
  %607 = vst.msk [vmem:[%s3 + $0x18] sm:$0xff] %vm239, %v591
  %608 = vst.msk [vmem:[%s3 + $0x20] sm:$0xff] %vm239, %v592
  %609 = vst.msk [vmem:[%s3 + $0x28] sm:$0xff] %vm239, %v593
  %610 = vst.msk [vmem:[%s3 + $0x30] sm:$0xff] %vm239, %v594
  %611 = vst.msk [vmem:[%s3 + $0x38] sm:$0xff] %vm239, %v595
  %612 = vst.msk [vmem:[%s3 + $0x40] sm:$0xff] %vm239, %v596
  %613 = vst.msk [vmem:[%s3 + $0x48] sm:$0xff] %vm239, %v597
  %614 = vst.msk [vmem:[%s3 + $0x50] sm:$0xff] %vm239, %v598
  %615 = vst.msk [vmem:[%s3 + $0x58] sm:$0xff] %vm239, %v599
  %616 = vst.msk [vmem:[%s3 + $0x60] sm:$0xff] %vm239, %v600
  %617 = vst.msk [vmem:[%s3 + $0x68] sm:$0xff] %vm239, %v601
  %618 = vst.msk [vmem:[%s3 + $0x70] sm:$0xff] %vm239, %v602
  %619 = vst.msk [vmem:[%s3 + $0x78] sm:$0xff] %vm239, %v603
  // Predicated region
  $region14: #{_lambda_.5} parent=0 // pred_check
    _
  $region15: #{_lambda_.5} parent=0 // pred_check_branch
    %621 = sbr.rel (0) target = $region17
  $region16: #{_lambda_.5} parent=0 // pred_region
    _
  $region17: #{_lambda_.5} parent=0 // pred_fallthru
    _
  // Predicated region
  $region18: #{_lambda_.5} parent=0 // pred_check
    _
  $region19: #{_lambda_.5} parent=0 // pred_check_branch
    %623 = sbr.rel (0) target = $region21
  $region20: #{_lambda_.5} parent=0 // pred_region
    _
  $region21: #{_lambda_.5} parent=0 // pred_fallthru
    _

// kernel: squeeze.4
$region0: #{squeeze.4}
  %s0 = inlined_call_operand.vmem [shape: f32[128], index: 0, kind: input, shape index: {}]
  %s1 = inlined_call_operand.vmem [shape: f32[2,64], index: 1, kind: output, shape index: {}]
  $region1: #{squeeze.4} parent=0
    #allocation0 [shape = 'u8[4096]{0}', space=vmem, size = 0x1000, scoped, tag = 'scoped mem for output reshape']
    #allocation1 [shape = 'u8[4096]{0}', space=vmem, size = 0x1000, scoped, tag = 'scoped mem for input reshape']
    %s3 = sshllo.u32 0, 1
    %v4 = vld [vmem:[%s0] sm:%s3]
    %5 = vst [vmem:[#allocation1] sm:%s3] %v4
    %v6 = vld [vmem:[#allocation1] sm:$0x1]
    %vm7 = vcmask 523264
    %8 = vst.msk [vmem:[#allocation0] sm:$0x1] %vm7, %v6
    %v9 = vld [vmem:[#allocation1] sm:$0x1]
    %10 = vrot.lane.b32.xlu0 %v9, 64
    %v11 = vpop.permute.xlu0 %10
    %vm12 = vcmask 523264
    %s13 = scalar_lea.vmem [#allocation0], 1
    %14 = vst.msk [vmem:[%s13] sm:$0x1] %vm12, %v11
    %s16 = sshllo.u32 0, 2
    %v18 = vld [vmem:[#allocation0] sm:%s16]
    %s19 = sshllo.u32 0, 2
    %20 = vst [vmem:[%s1] sm:%s19] %v18

// kernel: _lambda_.6
$region0: #{_lambda_.6}
  #allocation0 [shape = 'u32[]', space=smem, size = 0x4, offset = 0x4, fixed_abs, tag = 'smem constant byte address 0x4 - core index']
  #allocation1 [shape = 'u32[144,128]{1,0:T(1,128)}', space=vmem, size = 0x12000, scoped, tag = 'internal scratch']
  #allocation2 [shape = 'f32[2,6,6,32]{3,2,1,0:T(8,128)}', space=vmem, size = 0xc000, scoped, tag = 'scratch operand']
  %s0 = inlined_call_operand.vmem [shape: f32[32,27], index: 0, kind: input, shape index: {}]
  %s1 = inlined_call_operand.vmem [shape: f32[27,32], index: 1, kind: input, shape index: {}]
  %s2 = inlined_call_operand.vmem [shape: f32[1,32], index: 2, kind: input, shape index: {}]
  %s3 = inlined_call_operand.vmem [shape: f32[2,4,4,32], index: 3, kind: output, shape index: {}]
  %s4 = sld [smem:[#allocation0]]
  $region22: #{_lambda_.6} parent=0
    _
  %s6 = ssub.s32 1, %s4
  %s7 = scalar_select 0, %s6, %s4
  // Predicated region
  $region2: #{_lambda_.6} parent=0 // pred_check
    _
  $region3: #{_lambda_.6} parent=0 // pred_check_branch
    %9 = sbr.rel (0) target = $region5
  $region4: #{_lambda_.6} parent=0 // pred_region
    _
  $region5: #{_lambda_.6} parent=0 // pred_fallthru
    _
  // Predicated region
  $region6: #{_lambda_.6} parent=0 // pred_check
    _
  $region7: #{_lambda_.6} parent=0 // pred_check_branch
    %11 = sbr.rel (0) target = $region9
  $region8: #{_lambda_.6} parent=0 // pred_region
    _
  $region9: #{_lambda_.6} parent=0 // pred_fallthru
    _
  // Predicated region
  $region10: #{_lambda_.6} parent=0 // pred_check
    _
  $region11: #{_lambda_.6} parent=0 // pred_check_branch
    %13 = sbr.rel (0) target = $region13
  $region12: #{_lambda_.6} parent=0 // pred_region
    _
  $region13: #{_lambda_.6} parent=0 // pred_fallthru
    _
  %v14 = vld [vmem:[%s0] sm:$0xff]
  %v15 = vld [vmem:[%s0 + $0x8] sm:$0xff]
  %v16 = vld [vmem:[%s0 + $0x10] sm:$0xff]
  %v17 = vld [vmem:[%s0 + $0x18] sm:$0xff]
  %v18 = vld [vmem:[%s1] sm:$0xff]
  %v19 = vld [vmem:[%s1 + $0x8] sm:$0xff]
  %v20 = vld [vmem:[%s1 + $0x10] sm:$0xff]
  %v21 = vld [vmem:[%s1 + $0x18] sm:$0x7]
  %v22 = vld [vmem:[%s2] sm:$0x1]
  %v24 = vlaneseq
  %v25 = vshrl.u32 %v24, 7
  %v26 = vsub.s32 0, %v25
  %v27 = vrot.slane %v22, %v26
  %vm29 = vcmask 220160
  %v31 = vsel %vm29, %v14, 0
  %v34 = vsel %vm29, %v15, 0
  %v37 = vsel %vm29, %v16, 0
  %v40 = vsel %vm29, %v17, 0
  %vm42 = vcmask 1042432
  %v44 = vsel %vm42, %v21, 0
  %46 = vmatprep.subr.mxu0 0.0
  %47 = vmatpush1.msra.mxu0 %v18
  %48 = vmatprep.subr.mxu0 0.0
  %49 = vmatpush1.msra.mxu0 %v19
  %50 = vmatprep.subr.mxu0 0.0
  %51 = vmatpush1.msra.mxu0 %v20
  %52 = vmatprep.subr.mxu0 0.0
  %53 = vmatpush1.msra.mxu0 %v44
  %54 = vmatprep.subr.mxu0 0.0
  %55 = vmatpush1.msra.mxu0 0.0
  %56 = vmatprep.subr.mxu0 0.0
  %57 = vmatpush1.msra.mxu0 0.0
  %58 = vmatprep.subr.mxu0 0.0
  %59 = vmatpush1.msra.mxu0 0.0
  %60 = vmatprep.subr.mxu0 0.0
  %61 = vmatpush1.msra.mxu0 0.0
  %62 = vmatprep.subr.mxu0 0.0
  %63 = vmatpush1.msra.mxu0 0.0
  %64 = vmatprep.subr.mxu0 0.0
  %65 = vmatpush1.msra.mxu0 0.0
  %66 = vmatprep.subr.mxu0 0.0
  %67 = vmatpush1.msra.mxu0 0.0
  %68 = vmatprep.subr.mxu0 0.0
  %69 = vmatpush1.msra.mxu0 0.0
  %70 = vmatprep.subr.mxu0 0.0
  %71 = vmatpush1.msra.mxu0 0.0
  %72 = vmatprep.subr.mxu0 0.0
  %73 = vmatpush1.msra.mxu0 0.0
  %74 = vmatprep.subr.mxu0 0.0
  %75 = vmatpush1.msra.mxu0 0.0
  %76 = vmatprep.subr.mxu0 0.0
  %77 = vmatpush1.msra.mxu0 0.0
  %78 = vmatprep.subr.mxu0 0.0
  %79 = vmatpush1.msra.mxu0 0.0
  %80 = vmatprep.subr.mxu0 0.0
  %81 = vmatpush1.msra.mxu0 0.0
  %82 = vmatprep.subr.mxu0 0.0
  %83 = vmatpush1.msra.mxu0 0.0
  %84 = vmatprep.subr.mxu0 0.0
  %85 = vmatpush1.msra.mxu0 0.0
  %86 = vmatprep.subr.mxu0 0.0
  %87 = vmatpush1.msra.mxu0 0.0
  %88 = vmatprep.subr.mxu0 0.0
  %89 = vmatpush1.msra.mxu0 0.0
  %90 = vmatprep.subr.mxu0 0.0
  %91 = vmatpush1.msra.mxu0 0.0
  %92 = vmatprep.subr.mxu0 0.0
  %93 = vmatpush1.msra.mxu0 0.0
  %94 = vmatprep.subr.mxu0 0.0
  %95 = vmatpush1.msra.mxu0 0.0
  %96 = vmatprep.subr.mxu0 0.0
  %97 = vmatpush1.msra.mxu0 0.0
  %98 = vmatprep.subr.mxu0 0.0
  %99 = vmatpush1.msra.mxu0 0.0
  %100 = vmatprep.subr.mxu0 0.0
  %101 = vmatpush1.msra.mxu0 0.0
  %102 = vmatprep.subr.mxu0 0.0
  %103 = vmatpush1.msra.mxu0 0.0
  %104 = vmatprep.subr.mxu0 0.0
  %105 = vmatpush1.msra.mxu0 0.0
  %106 = vmatprep.subr.mxu0 0.0
  %107 = vmatpush1.msra.mxu0 0.0
  %108 = vmatprep.subr.mxu0 0.0
  %109 = vmatpush1.msra.mxu0 0.0
  %110 = vmatprep.mubr.f32.mxu0 0.0
  %111 = vmatmul.mubr.f32.gmra.mrb[0].mxu0 %v31
  %v112 = vpop.f32.mrb[0].mxu0
  %v113 = vadd.f32 %v27, %v112
  %v114 = vpop.f32.mrb[0].mxu0
  %115 = vmatprep.mubr.f32.mxu0 0.0
  %116 = vmatmul.mubr.f32.gmra.mrb[0].mxu0 %v34
  %v117 = vpop.f32.mrb[0].mxu0
  %v118 = vadd.f32 %v27, %v117
  %v119 = vpop.f32.mrb[0].mxu0
  %120 = vmatprep.mubr.f32.mxu0 0.0
  %121 = vmatmul.mubr.f32.gmra.mrb[0].mxu0 %v37
  %v122 = vpop.f32.mrb[0].mxu0
  %v123 = vadd.f32 %v27, %v122
  %v124 = vpop.f32.mrb[0].mxu0
  %125 = vmatprep.mubr.f32.mxu0 0.0
  %126 = vmatmul.mubr.f32.gmra.mrb[0].mxu0 %v40
  %v127 = vpop.f32.mrb[0].mxu0
  %v128 = vadd.f32 %v27, %v127
  %v129 = vpop.f32.mrb[0].mxu0
  %130 = vdwg.mxu0
  %v135 = vcombine.high %v113, %v113
  %v136 = vcombine.high %v118, %v118
  %v137 = vcombine.high %v123, %v123
  %v138 = vcombine.high %v128, %v128
  %vm143 = vcmask 259072
  %144 = vst.msk [vmem:[#allocation2] sm:$0x3f] %vm143, 0.0
  %145 = vst.msk [vmem:[#allocation2 + $0x8] sm:$0x3f] %vm143, 0.0
  %146 = vst.msk [vmem:[#allocation2 + $0x10] sm:$0x3f] %vm143, 0.0
  %147 = vst.msk [vmem:[#allocation2 + $0x18] sm:$0x3f] %vm143, 0.0
  %148 = vst.msk [vmem:[#allocation2 + $0x20] sm:$0x3f] %vm143, 0.0
  %149 = vst.msk [vmem:[#allocation2 + $0x28] sm:$0x3f] %vm143, 0.0
  %150 = vst.msk [vmem:[#allocation2 + $0x30] sm:$0x3f] %vm143, 0.0
  %151 = vst.msk [vmem:[#allocation2 + $0x38] sm:$0x3f] %vm143, 0.0
  %152 = vst.msk [vmem:[#allocation2 + $0x40] sm:$0x3f] %vm143, 0.0
  %153 = vst.msk [vmem:[#allocation2 + $0x48] sm:$0x3f] %vm143, 0.0
  %154 = vst.msk [vmem:[#allocation2 + $0x50] sm:$0x3f] %vm143, 0.0
  %155 = vst.msk [vmem:[#allocation2 + $0x58] sm:$0x3f] %vm143, 0.0
  %s156 = scalar_lea.vmem [#allocation2], 8
  %vm157 = vcmask 257024
  %158 = vst.msk [vmem:[%s156 + $0x1] sm:$0xf] %vm157, %v113
  %159 = vst.msk [vmem:[%s156 + $0x9] sm:$0xf] %vm157, %v135
  %160 = vst.msk [vmem:[%s156 + $0x11] sm:$0xf] %vm157, %v118
  %161 = vst.msk [vmem:[%s156 + $0x19] sm:$0xf] %vm157, %v136
  %s162 = scalar_lea.vmem [#allocation2], 56
  %163 = vst.msk [vmem:[%s162 + $0x1] sm:$0xf] %vm157, %v123
  %164 = vst.msk [vmem:[%s162 + $0x9] sm:$0xf] %vm157, %v137
  %165 = vst.msk [vmem:[%s162 + $0x11] sm:$0xf] %vm157, %v128
  %166 = vst.msk [vmem:[%s162 + $0x19] sm:$0xf] %vm157, %v138
  %v167 = vld [vmem:[#allocation2] sm:$0xf]
  %v168 = vld [vmem:[#allocation2 + $0x8] sm:$0xf]
  %v169 = vld [vmem:[#allocation2 + $0x10] sm:$0xf]
  %v170 = vld [vmem:[#allocation2 + $0x18] sm:$0xf]
  %v171 = vld [vmem:[#allocation2 + $0x30] sm:$0xf]
  %v172 = vld [vmem:[#allocation2 + $0x38] sm:$0xf]
  %v173 = vld [vmem:[#allocation2 + $0x40] sm:$0xf]
  %v174 = vld [vmem:[#allocation2 + $0x48] sm:$0xf]
  %v175 = vadd.f32 %v167, 0.0
  %v176 = vadd.f32 %v168, 0.0
  %v177 = vadd.f32 %v169, 0.0
  %v178 = vadd.f32 %v170, 0.0
  %v179 = vadd.f32 %v171, 0.0
  %v180 = vadd.f32 %v172, 0.0
  %v181 = vadd.f32 %v173, 0.0
  %v182 = vadd.f32 %v174, 0.0
  %v183 = vld [vmem:[#allocation2 + $0x1] sm:$0xf]
  %v184 = vld [vmem:[#allocation2 + $0x9] sm:$0xf]
  %v185 = vld [vmem:[#allocation2 + $0x11] sm:$0xf]
  %v186 = vld [vmem:[#allocation2 + $0x19] sm:$0xf]
  %v187 = vld [vmem:[#allocation2 + $0x31] sm:$0xf]
  %v188 = vld [vmem:[#allocation2 + $0x39] sm:$0xf]
  %v189 = vld [vmem:[#allocation2 + $0x41] sm:$0xf]
  %v190 = vld [vmem:[#allocation2 + $0x49] sm:$0xf]
  %v191 = vadd.f32 %v175, %v183
  %v192 = vadd.f32 %v176, %v184
  %v193 = vadd.f32 %v177, %v185
  %v194 = vadd.f32 %v178, %v186
  %v195 = vadd.f32 %v179, %v187
  %v196 = vadd.f32 %v180, %v188
  %v197 = vadd.f32 %v181, %v189
  %v198 = vadd.f32 %v182, %v190
  %v199 = vld [vmem:[#allocation2 + $0x2] sm:$0xf]
  %v200 = vld [vmem:[#allocation2 + $0xa] sm:$0xf]
  %v201 = vld [vmem:[#allocation2 + $0x12] sm:$0xf]
  %v202 = vld [vmem:[#allocation2 + $0x1a] sm:$0xf]
  %v203 = vld [vmem:[#allocation2 + $0x32] sm:$0xf]
  %v204 = vld [vmem:[#allocation2 + $0x3a] sm:$0xf]
  %v205 = vld [vmem:[#allocation2 + $0x42] sm:$0xf]
  %v206 = vld [vmem:[#allocation2 + $0x4a] sm:$0xf]
  %v207 = vadd.f32 %v191, %v199
  %v208 = vadd.f32 %v192, %v200
  %v209 = vadd.f32 %v193, %v201
  %v210 = vadd.f32 %v194, %v202
  %v211 = vadd.f32 %v195, %v203
  %v212 = vadd.f32 %v196, %v204
  %v213 = vadd.f32 %v197, %v205
  %v214 = vadd.f32 %v198, %v206
  %v215 = vld [vmem:[%s156] sm:$0xf]
  %v216 = vld [vmem:[%s156 + $0x8] sm:$0xf]
  %v217 = vld [vmem:[%s156 + $0x10] sm:$0xf]
  %v218 = vld [vmem:[%s156 + $0x18] sm:$0xf]
  %v219 = vld [vmem:[%s156 + $0x30] sm:$0xf]
  %v220 = vld [vmem:[%s156 + $0x38] sm:$0xf]
  %v221 = vld [vmem:[%s156 + $0x40] sm:$0xf]
  %v222 = vld [vmem:[%s156 + $0x48] sm:$0xf]
  %v223 = vadd.f32 %v207, %v215
  %v224 = vadd.f32 %v208, %v216
  %v225 = vadd.f32 %v209, %v217
  %v226 = vadd.f32 %v210, %v218
  %v227 = vadd.f32 %v211, %v219
  %v228 = vadd.f32 %v212, %v220
  %v229 = vadd.f32 %v213, %v221
  %v230 = vadd.f32 %v214, %v222
  %v231 = vld [vmem:[%s156 + $0x1] sm:$0xf]
  %v232 = vld [vmem:[%s156 + $0x9] sm:$0xf]
  %v233 = vld [vmem:[%s156 + $0x11] sm:$0xf]
  %v234 = vld [vmem:[%s156 + $0x19] sm:$0xf]
  %v235 = vld [vmem:[%s156 + $0x31] sm:$0xf]
  %v236 = vld [vmem:[%s156 + $0x39] sm:$0xf]
  %v237 = vld [vmem:[%s156 + $0x41] sm:$0xf]
  %v238 = vld [vmem:[%s156 + $0x49] sm:$0xf]
  %v239 = vadd.f32 %v223, %v231
  %v240 = vadd.f32 %v224, %v232
  %v241 = vadd.f32 %v225, %v233
  %v242 = vadd.f32 %v226, %v234
  %v243 = vadd.f32 %v227, %v235
  %v244 = vadd.f32 %v228, %v236
  %v245 = vadd.f32 %v229, %v237
  %v246 = vadd.f32 %v230, %v238
  %v247 = vld [vmem:[%s156 + $0x2] sm:$0xf]
  %v248 = vld [vmem:[%s156 + $0xa] sm:$0xf]
  %v249 = vld [vmem:[%s156 + $0x12] sm:$0xf]
  %v250 = vld [vmem:[%s156 + $0x1a] sm:$0xf]
  %v251 = vld [vmem:[%s156 + $0x32] sm:$0xf]
  %v252 = vld [vmem:[%s156 + $0x3a] sm:$0xf]
  %v253 = vld [vmem:[%s156 + $0x42] sm:$0xf]
  %v254 = vld [vmem:[%s156 + $0x4a] sm:$0xf]
  %v255 = vadd.f32 %v239, %v247
  %v256 = vadd.f32 %v240, %v248
  %v257 = vadd.f32 %v241, %v249
  %v258 = vadd.f32 %v242, %v250
  %v259 = vadd.f32 %v243, %v251
  %v260 = vadd.f32 %v244, %v252
  %v261 = vadd.f32 %v245, %v253
  %v262 = vadd.f32 %v246, %v254
  %s263 = scalar_lea.vmem [#allocation2], 16
  %v264 = vld [vmem:[%s263] sm:$0xf]
  %v265 = vld [vmem:[%s263 + $0x8] sm:$0xf]
  %v266 = vld [vmem:[%s263 + $0x10] sm:$0xf]
  %v267 = vld [vmem:[%s263 + $0x18] sm:$0xf]
  %v268 = vld [vmem:[%s263 + $0x30] sm:$0xf]
  %v269 = vld [vmem:[%s263 + $0x38] sm:$0xf]
  %v270 = vld [vmem:[%s263 + $0x40] sm:$0xf]
  %v271 = vld [vmem:[%s263 + $0x48] sm:$0xf]
  %v272 = vadd.f32 %v255, %v264
  %v273 = vadd.f32 %v256, %v265
  %v274 = vadd.f32 %v257, %v266
  %v275 = vadd.f32 %v258, %v267
  %v276 = vadd.f32 %v259, %v268
  %v277 = vadd.f32 %v260, %v269
  %v278 = vadd.f32 %v261, %v270
  %v279 = vadd.f32 %v262, %v271
  %v280 = vld [vmem:[%s263 + $0x1] sm:$0xf]
  %v281 = vld [vmem:[%s263 + $0x9] sm:$0xf]
  %v282 = vld [vmem:[%s263 + $0x11] sm:$0xf]
  %v283 = vld [vmem:[%s263 + $0x19] sm:$0xf]
  %v284 = vld [vmem:[%s263 + $0x31] sm:$0xf]
  %v285 = vld [vmem:[%s263 + $0x39] sm:$0xf]
  %v286 = vld [vmem:[%s263 + $0x41] sm:$0xf]
  %v287 = vld [vmem:[%s263 + $0x49] sm:$0xf]
  %v288 = vadd.f32 %v272, %v280
  %v289 = vadd.f32 %v273, %v281
  %v290 = vadd.f32 %v274, %v282
  %v291 = vadd.f32 %v275, %v283
  %v292 = vadd.f32 %v276, %v284
  %v293 = vadd.f32 %v277, %v285
  %v294 = vadd.f32 %v278, %v286
  %v295 = vadd.f32 %v279, %v287
  %v296 = vld [vmem:[%s263 + $0x2] sm:$0xf]
  %v297 = vld [vmem:[%s263 + $0xa] sm:$0xf]
  %v298 = vld [vmem:[%s263 + $0x12] sm:$0xf]
  %v299 = vld [vmem:[%s263 + $0x1a] sm:$0xf]
  %v300 = vld [vmem:[%s263 + $0x32] sm:$0xf]
  %v301 = vld [vmem:[%s263 + $0x3a] sm:$0xf]
  %v302 = vld [vmem:[%s263 + $0x42] sm:$0xf]
  %v303 = vld [vmem:[%s263 + $0x4a] sm:$0xf]
  %v304 = vadd.f32 %v288, %v296
  %v305 = vadd.f32 %v289, %v297
  %v306 = vadd.f32 %v290, %v298
  %v307 = vadd.f32 %v291, %v299
  %v308 = vadd.f32 %v292, %v300
  %v309 = vadd.f32 %v293, %v301
  %v310 = vadd.f32 %v294, %v302
  %v311 = vadd.f32 %v295, %v303
  %v312 = vmul.f32 %v304, 0.11111111
  %v313 = vmul.f32 %v305, 0.11111111
  %v314 = vmul.f32 %v306, 0.11111111
  %v315 = vmul.f32 %v307, 0.11111111
  %v316 = vmul.f32 %v308, 0.11111111
  %v317 = vmul.f32 %v309, 0.11111111
  %v318 = vmul.f32 %v310, 0.11111111
  %v319 = vmul.f32 %v311, 0.11111111
  %320 = vst.msk [vmem:[%s3] sm:$0xf] %vm157, %v312
  %321 = vst.msk [vmem:[%s3 + $0x4] sm:$0xf] %vm157, %v313
  %322 = vst.msk [vmem:[%s3 + $0x8] sm:$0xf] %vm157, %v314
  %323 = vst.msk [vmem:[%s3 + $0xc] sm:$0xf] %vm157, %v315
  %324 = vst.msk [vmem:[%s3 + $0x10] sm:$0xf] %vm157, %v316
  %325 = vst.msk [vmem:[%s3 + $0x14] sm:$0xf] %vm157, %v317
  %326 = vst.msk [vmem:[%s3 + $0x18] sm:$0xf] %vm157, %v318
  %327 = vst.msk [vmem:[%s3 + $0x1c] sm:$0xf] %vm157, %v319
  // Predicated region
  $region14: #{_lambda_.6} parent=0 // pred_check
    _
  $region15: #{_lambda_.6} parent=0 // pred_check_branch
    %329 = sbr.rel (0) target = $region17
  $region16: #{_lambda_.6} parent=0 // pred_region
    _
  $region17: #{_lambda_.6} parent=0 // pred_fallthru
    _
  // Predicated region
  $region18: #{_lambda_.6} parent=0 // pred_check
    _
  $region19: #{_lambda_.6} parent=0 // pred_check_branch
    %331 = sbr.rel (0) target = $region21
  $region20: #{_lambda_.6} parent=0 // pred_region
    _
  $region21: #{_lambda_.6} parent=0 // pred_fallthru
    _

// kernel: squeeze.5
$region0: #{squeeze.5}
  %s0 = inlined_call_operand.vmem [shape: s32[128], index: 0, kind: input, shape index: {}]
  %s1 = inlined_call_operand.vmem [shape: s32[2,64], index: 1, kind: output, shape index: {}]
  $region1: #{squeeze.5} parent=0
    #allocation0 [shape = 'u8[4096]{0}', space=vmem, size = 0x1000, scoped, tag = 'scoped mem for output reshape']
    #allocation1 [shape = 'u8[4096]{0}', space=vmem, size = 0x1000, scoped, tag = 'scoped mem for input reshape']
    %s3 = sshllo.u32 0, 1
    %v4 = vld [vmem:[%s0] sm:%s3]
    %5 = vst [vmem:[#allocation1] sm:%s3] %v4
    %v6 = vld [vmem:[#allocation1] sm:$0x1]
    %vm7 = vcmask 523264
    %8 = vst.msk [vmem:[#allocation0] sm:$0x1] %vm7, %v6
    %v9 = vld [vmem:[#allocation1] sm:$0x1]
    %10 = vrot.lane.b32.xlu0 %v9, 64
    %v11 = vpop.permute.xlu0 %10
    %vm12 = vcmask 523264
    %s13 = scalar_lea.vmem [#allocation0], 1
    %14 = vst.msk [vmem:[%s13] sm:$0x1] %vm12, %v11
    %s16 = sshllo.u32 0, 2
    %v18 = vld [vmem:[#allocation0] sm:%s16]
    %s19 = sshllo.u32 0, 2
    %20 = vst [vmem:[%s1] sm:%s19] %v18

// kernel: mul.11
$region0: #{mul.11}
  #allocation2 [shape = 's32[1]{0}', space=sflag, size = 0x4, scoped, tag = 'scoped memory for mul.11']
  %s0 = inlined_call_operand.vmem [shape: f32[2], index: 0, kind: input, shape index: {}]
  %s1 = inlined_call_operand.vmem [shape: f32[2], index: 1, kind: input, shape index: {}]
  %s2 = inlined_call_operand.hbm [shape: f32[2], index: 2, kind: output, shape index: {}]
  $region1: #{mul.11} parent=0
    #allocation0 [shape = 'u8[512]{0}', space=vmem, size = 0x400, scoped, tag = 'operand span for operand 2']
    #allocation1 [shape = 's32[1]{0}', space=sflag, size = 0x4, scoped, tag = 'scoped memory for mul.11']
    %3 = vsyncpa [#allocation1], 0
    %v4 = vld [vmem:[%s0] sm:$0x1]
    %v5 = vld [vmem:[%s1] sm:$0x1]
    %6 = xla_tuple %v4, %v5
    %7 = xla_tuple %6
    %v8 = vmul.f32 %v4, %v5
    %9 = xla_tuple %v8
    %10 = vst [vmem:[#allocation0] sm:$0x1] %v8
    %s12 = ssub.s32 16, 16
    %13 = vsyncadd [#allocation1], %s12
    %s15 = sshll.u32 [#allocation0], 4
    %s16 = int_to_ptr.vmem [resolvable:$true] %s15
    %18 = dma.vmem_to_hbm [thread:$0]  %s16, 16, %s2, [#allocation1]
    %19 = dma.done [#allocation1], 16
    %20 = vsyncpa [#allocation1], 1

// kernel: squeeze.7
$region0: #{squeeze.7}
  %s0 = inlined_call_operand.vmem [shape: f32[128], index: 0, kind: input, shape index: {}]
  %s1 = inlined_call_operand.vmem [shape: f32[2,8,8], index: 1, kind: output, shape index: {}]
  $region1: #{squeeze.7} parent=0
    #allocation0 [shape = 'u8[4096]{0}', space=vmem, size = 0x1000, scoped, tag = 'scoped mem for input reshape']
    %s3 = sshllo.u32 0, 1
    %v4 = vld [vmem:[%s0] sm:%s3]
    %5 = vst [vmem:[#allocation0] sm:%s3] %v4
    %v6 = vld [vmem:[#allocation0] sm:$0x1]
    %vm7 = vcmask 64512
    %8 = vst.msk [vmem:[%s1] sm:$0x1] %vm7, %v6
    %v9 = vld [vmem:[#allocation0] sm:$0x1]
    %10 = vrot.lane.b32.xlu0 %v9, 120
    %v11 = vpop.permute.xlu0 %10
    %vm12 = vcmask 64512
    %s13 = scalar_lea.vmem %s1, 1
    %14 = vst.msk [vmem:[%s13] sm:$0x1] %vm12, %v11
    %v15 = vld [vmem:[#allocation0] sm:$0x1]
    %16 = vrot.lane.b32.xlu0 %v15, 112
    %v17 = vpop.permute.xlu0 %16
    %vm18 = vcmask 64512
    %s19 = scalar_lea.vmem %s1, 2
    %20 = vst.msk [vmem:[%s19] sm:$0x1] %vm18, %v17
    %v21 = vld [vmem:[#allocation0] sm:$0x1]
    %22 = vrot.lane.b32.xlu0 %v21, 104
    %v23 = vpop.permute.xlu0 %22
    %vm24 = vcmask 64512
    %s25 = scalar_lea.vmem %s1, 3
    %26 = vst.msk [vmem:[%s25] sm:$0x1] %vm24, %v23
    %v27 = vld [vmem:[#allocation0] sm:$0x1]
    %28 = vrot.lane.b32.xlu0 %v27, 96
    %v29 = vpop.permute.xlu0 %28
    %vm30 = vcmask 64512
    %s31 = scalar_lea.vmem %s1, 4
    %32 = vst.msk [vmem:[%s31] sm:$0x1] %vm30, %v29
    %v33 = vld [vmem:[#allocation0] sm:$0x1]
    %34 = vrot.lane.b32.xlu0 %v33, 88
    %v35 = vpop.permute.xlu0 %34
    %vm36 = vcmask 64512
    %s37 = scalar_lea.vmem %s1, 5
    %38 = vst.msk [vmem:[%s37] sm:$0x1] %vm36, %v35
    %v39 = vld [vmem:[#allocation0] sm:$0x1]
    %40 = vrot.lane.b32.xlu0 %v39, 80
    %v41 = vpop.permute.xlu0 %40
    %vm42 = vcmask 64512
    %s43 = scalar_lea.vmem %s1, 6
    %44 = vst.msk [vmem:[%s43] sm:$0x1] %vm42, %v41
    %v45 = vld [vmem:[#allocation0] sm:$0x1]
    %46 = vrot.lane.b32.xlu0 %v45, 72
    %v47 = vpop.permute.xlu0 %46
    %vm48 = vcmask 64512
    %s49 = scalar_lea.vmem %s1, 7
    %50 = vst.msk [vmem:[%s49] sm:$0x1] %vm48, %v47
    %v51 = vld [vmem:[#allocation0] sm:$0x1]
    %52 = vrot.lane.b32.xlu0 %v51, 64
    %v53 = vpop.permute.xlu0 %52
    %vm54 = vcmask 64512
    %s55 = scalar_lea.vmem %s1, 8
    %56 = vst.msk [vmem:[%s55] sm:$0x1] %vm54, %v53
    %v57 = vld [vmem:[#allocation0] sm:$0x1]
    %58 = vrot.lane.b32.xlu0 %v57, 56
    %v59 = vpop.permute.xlu0 %58
    %vm60 = vcmask 64512
    %s61 = scalar_lea.vmem %s1, 9
    %62 = vst.msk [vmem:[%s61] sm:$0x1] %vm60, %v59
    %v63 = vld [vmem:[#allocation0] sm:$0x1]
    %64 = vrot.lane.b32.xlu0 %v63, 48
    %v65 = vpop.permute.xlu0 %64
    %vm66 = vcmask 64512
    %s67 = scalar_lea.vmem %s1, 10
    %68 = vst.msk [vmem:[%s67] sm:$0x1] %vm66, %v65
    %v69 = vld [vmem:[#allocation0] sm:$0x1]
    %70 = vrot.lane.b32.xlu0 %v69, 40
    %v71 = vpop.permute.xlu0 %70
    %vm72 = vcmask 64512
    %s73 = scalar_lea.vmem %s1, 11
    %74 = vst.msk [vmem:[%s73] sm:$0x1] %vm72, %v71
    %v75 = vld [vmem:[#allocation0] sm:$0x1]
    %76 = vrot.lane.b32.xlu0 %v75, 32
    %v77 = vpop.permute.xlu0 %76
    %vm78 = vcmask 64512
    %s79 = scalar_lea.vmem %s1, 12
    %80 = vst.msk [vmem:[%s79] sm:$0x1] %vm78, %v77
    %v81 = vld [vmem:[#allocation0] sm:$0x1]
    %82 = vrot.lane.b32.xlu0 %v81, 24
    %v83 = vpop.permute.xlu0 %82
    %vm84 = vcmask 64512
    %s85 = scalar_lea.vmem %s1, 13
    %86 = vst.msk [vmem:[%s85] sm:$0x1] %vm84, %v83
    %v87 = vld [vmem:[#allocation0] sm:$0x1]
    %88 = vrot.lane.b32.xlu0 %v87, 16
    %v89 = vpop.permute.xlu0 %88
    %vm90 = vcmask 64512
    %s91 = scalar_lea.vmem %s1, 14
    %92 = vst.msk [vmem:[%s91] sm:$0x1] %vm90, %v89
    %v93 = vld [vmem:[#allocation0] sm:$0x1]
    %94 = vrot.lane.b32.xlu0 %v93, 8
    %v95 = vpop.permute.xlu0 %94
    %vm96 = vcmask 64512
    %s97 = scalar_lea.vmem %s1, 15
    %98 = vst.msk [vmem:[%s97] sm:$0x1] %vm96, %v95

// kernel: _lambda_.7
$region0: #{_lambda_.7}
  #allocation0 [shape = 'u32[]', space=smem, size = 0x4, offset = 0x4, fixed_abs, tag = 'smem constant byte address 0x4 - core index']
  #allocation1 [shape = 'u32[144,128]{1,0:T(1,128)}', space=vmem, size = 0x12000, scoped, tag = 'internal scratch']
  #allocation2 [shape = 'f32[128,1]{1,0:T(8,128)}', space=vmem, size = 0x10000, scoped, tag = 'scratch operand']
  #allocation3 [shape = 's32[128,1]{1,0:T(8,128)}', space=vmem, size = 0x10000, scoped, tag = 'scratch operand']
  %s0 = inlined_call_operand.vmem [shape: bf16[128,48], index: 0, kind: input, shape index: {}]
  %s1 = inlined_call_operand.vmem [shape: bf16[64,48], index: 1, kind: input, shape index: {}]
  %s2 = inlined_call_operand.vmem [shape: f32[128,1], index: 2, kind: input, shape index: {}]
  %s3 = inlined_call_operand.vmem [shape: f32[1,64], index: 3, kind: input, shape index: {}]
  %s4 = inlined_call_operand.vmem [shape: f32[128,1], index: 4, kind: output, shape index: {0}]
  %s5 = inlined_call_operand.vmem [shape: s32[128,1], index: 5, kind: output, shape index: {1}]
  %6 = xla_tuple %s4, %s5
  %s7 = sld [smem:[#allocation0]]
  $region42: #{_lambda_.7} parent=0
    _
  %s9 = ssub.s32 1, %s7
  %s10 = scalar_select 0, %s9, %s7
  // Predicated region
  $region2: #{_lambda_.7} parent=0 // pred_check
    _
  $region3: #{_lambda_.7} parent=0 // pred_check_branch
    %12 = sbr.rel (0) target = $region5
  $region4: #{_lambda_.7} parent=0 // pred_region
    _
  $region5: #{_lambda_.7} parent=0 // pred_fallthru
    _
  // Predicated region
  $region6: #{_lambda_.7} parent=0 // pred_check
    _
  $region7: #{_lambda_.7} parent=0 // pred_check_branch
    %14 = sbr.rel (0) target = $region9
  $region8: #{_lambda_.7} parent=0 // pred_region
    _
  $region9: #{_lambda_.7} parent=0 // pred_fallthru
    _
  // Predicated region
  $region10: #{_lambda_.7} parent=0 // pred_check
    _
  $region11: #{_lambda_.7} parent=0 // pred_check_branch
    %16 = sbr.rel (0) target = $region13
  $region12: #{_lambda_.7} parent=0 // pred_region
    _
  $region13: #{_lambda_.7} parent=0 // pred_fallthru
    _
  // Predicated region
  $region14: #{_lambda_.7} parent=0 // pred_check
    _
  $region15: #{_lambda_.7} parent=0 // pred_check_branch
    %18 = sbr.rel (0) target = $region17
  $region16: #{_lambda_.7} parent=0 // pred_region
    _
  $region17: #{_lambda_.7} parent=0 // pred_fallthru
    _
  %p20 = scmp.eq.s32.totalorder 0, 0
  // Predicated region
  $region18: #{_lambda_.7} parent=0 // pred_check
    %p21 = pneg %p20
  $region19: #{_lambda_.7} parent=0 // pred_check_branch
    %23 = sbr.rel (%p21) target = $region21
  $region20: #{_lambda_.7} parent=0 // pred_region
    %vm24 = vcmask 7168
    %25 = vst.msk [vmem:[#allocation2] sm:$0xff] %vm24, inf
    %26 = vst.msk [vmem:[#allocation2 + $0x8] sm:$0xff] %vm24, inf
    %27 = vst.msk [vmem:[#allocation2 + $0x10] sm:$0xff] %vm24, inf
    %28 = vst.msk [vmem:[#allocation2 + $0x18] sm:$0xff] %vm24, inf
    %29 = vst.msk [vmem:[#allocation2 + $0x20] sm:$0xff] %vm24, inf
    %30 = vst.msk [vmem:[#allocation2 + $0x28] sm:$0xff] %vm24, inf
    %31 = vst.msk [vmem:[#allocation2 + $0x30] sm:$0xff] %vm24, inf
    %32 = vst.msk [vmem:[#allocation2 + $0x38] sm:$0xff] %vm24, inf
    %33 = vst.msk [vmem:[#allocation2 + $0x40] sm:$0xff] %vm24, inf
    %34 = vst.msk [vmem:[#allocation2 + $0x48] sm:$0xff] %vm24, inf
    %35 = vst.msk [vmem:[#allocation2 + $0x50] sm:$0xff] %vm24, inf
    %36 = vst.msk [vmem:[#allocation2 + $0x58] sm:$0xff] %vm24, inf
    %37 = vst.msk [vmem:[#allocation2 + $0x60] sm:$0xff] %vm24, inf
    %38 = vst.msk [vmem:[#allocation2 + $0x68] sm:$0xff] %vm24, inf
    %39 = vst.msk [vmem:[#allocation2 + $0x70] sm:$0xff] %vm24, inf
    %40 = vst.msk [vmem:[#allocation2 + $0x78] sm:$0xff] %vm24, inf
    %41 = vst.msk [vmem:[#allocation3] sm:$0xff] %vm24, 0
    %42 = vst.msk [vmem:[#allocation3 + $0x8] sm:$0xff] %vm24, 0
    %43 = vst.msk [vmem:[#allocation3 + $0x10] sm:$0xff] %vm24, 0
    %44 = vst.msk [vmem:[#allocation3 + $0x18] sm:$0xff] %vm24, 0
    %45 = vst.msk [vmem:[#allocation3 + $0x20] sm:$0xff] %vm24, 0
    %46 = vst.msk [vmem:[#allocation3 + $0x28] sm:$0xff] %vm24, 0
    %47 = vst.msk [vmem:[#allocation3 + $0x30] sm:$0xff] %vm24, 0
    %48 = vst.msk [vmem:[#allocation3 + $0x38] sm:$0xff] %vm24, 0
    %49 = vst.msk [vmem:[#allocation3 + $0x40] sm:$0xff] %vm24, 0
    %50 = vst.msk [vmem:[#allocation3 + $0x48] sm:$0xff] %vm24, 0
    %51 = vst.msk [vmem:[#allocation3 + $0x50] sm:$0xff] %vm24, 0
    %52 = vst.msk [vmem:[#allocation3 + $0x58] sm:$0xff] %vm24, 0
    %53 = vst.msk [vmem:[#allocation3 + $0x60] sm:$0xff] %vm24, 0
    %54 = vst.msk [vmem:[#allocation3 + $0x68] sm:$0xff] %vm24, 0
    %55 = vst.msk [vmem:[#allocation3 + $0x70] sm:$0xff] %vm24, 0
    %56 = vst.msk [vmem:[#allocation3 + $0x78] sm:$0xff] %vm24, 0
  $region21: #{_lambda_.7} parent=0 // pred_fallthru
    _
  %v57 = vld [vmem:[%s0] sm:$0xf]
  %v58 = vld [vmem:[%s0 + $0x4] sm:$0xf]
  %v59 = vld [vmem:[%s0 + $0x8] sm:$0xf]
  %v60 = vld [vmem:[%s0 + $0xc] sm:$0xf]
  %v61 = vld [vmem:[%s0 + $0x10] sm:$0xf]
  %v62 = vld [vmem:[%s0 + $0x14] sm:$0xf]
  %v63 = vld [vmem:[%s0 + $0x18] sm:$0xf]
  %v64 = vld [vmem:[%s0 + $0x1c] sm:$0xf]
  %v65 = vld [vmem:[%s0 + $0x20] sm:$0xf]
  %v66 = vld [vmem:[%s0 + $0x24] sm:$0xf]
  %v67 = vld [vmem:[%s0 + $0x28] sm:$0xf]
  %v68 = vld [vmem:[%s0 + $0x2c] sm:$0xf]
  %v69 = vld [vmem:[%s0 + $0x30] sm:$0xf]
  %v70 = vld [vmem:[%s0 + $0x34] sm:$0xf]
  %v71 = vld [vmem:[%s0 + $0x38] sm:$0xf]
  %v72 = vld [vmem:[%s0 + $0x3c] sm:$0xf]
  %v73 = vld [vmem:[%s1] sm:$0xf]
  %v74 = vld [vmem:[%s1 + $0x4] sm:$0xf]
  %v75 = vld [vmem:[%s1 + $0x8] sm:$0xf]
  %v76 = vld [vmem:[%s1 + $0xc] sm:$0xf]
  %v77 = vld [vmem:[%s1 + $0x10] sm:$0xf]
  %v78 = vld [vmem:[%s1 + $0x14] sm:$0xf]
  %v79 = vld [vmem:[%s1 + $0x18] sm:$0xf]
  %v80 = vld [vmem:[%s1 + $0x1c] sm:$0xf]
  %v97 = vunpack.c.l.b16 %v57
  %v98 = vunpack.c.l.b16 %v58
  %v99 = vunpack.c.l.b16 %v59
  %v100 = vunpack.c.l.b16 %v60
  %v101 = vunpack.c.l.b16 %v61
  %v102 = vunpack.c.l.b16 %v62
  %v103 = vunpack.c.l.b16 %v63
  %v104 = vunpack.c.l.b16 %v64
  %v105 = vunpack.c.l.b16 %v65
  %v106 = vunpack.c.l.b16 %v66
  %v107 = vunpack.c.l.b16 %v67
  %v108 = vunpack.c.l.b16 %v68
  %v109 = vunpack.c.l.b16 %v69
  %v110 = vunpack.c.l.b16 %v70
  %v111 = vunpack.c.l.b16 %v71
  %v112 = vunpack.c.l.b16 %v72
  %v113 = vpack.c.b16 %v98, %v97
  %v114 = vpack.c.b16 %v100, %v99
  %v115 = vpack.c.b16 %v102, %v101
  %v116 = vpack.c.b16 %v104, %v103
  %v117 = vpack.c.b16 %v106, %v105
  %v118 = vpack.c.b16 %v108, %v107
  %v119 = vpack.c.b16 %v110, %v109
  %v120 = vpack.c.b16 %v112, %v111
  %v129 = vunpack.c.l.b16 %v73
  %v130 = vunpack.c.l.b16 %v74
  %v131 = vunpack.c.l.b16 %v75
  %v132 = vunpack.c.l.b16 %v76
  %v133 = vunpack.c.l.b16 %v77
  %v134 = vunpack.c.l.b16 %v78
  %v135 = vunpack.c.l.b16 %v79
  %v136 = vunpack.c.l.b16 %v80
  %v137 = vpack.c.b16 %v130, %v129
  %v138 = vpack.c.b16 %v132, %v131
  %v139 = vpack.c.b16 %v134, %v133
  %v140 = vpack.c.b16 %v136, %v135
  %vm141 = vcmask 392192
  %v143 = vsel %vm141, %v113, 0
  %v146 = vsel %vm141, %v114, 0
  %v149 = vsel %vm141, %v115, 0
  %v152 = vsel %vm141, %v116, 0
  %v155 = vsel %vm141, %v117, 0
  %v158 = vsel %vm141, %v118, 0
  %v161 = vsel %vm141, %v119, 0
  %v164 = vsel %vm141, %v120, 0
  %v167 = vsel %vm141, %v137, 0
  %v170 = vsel %vm141, %v138, 0
  %v173 = vsel %vm141, %v139, 0
  %v176 = vsel %vm141, %v140, 0
  %178 = vmatprep.subr.bf16.mxu0 0
  %179 = vmatpush1.bf16.xpose.msra.mxu0 %v167
  %180 = vmatprep.subr.bf16.mxu0 0
  %181 = vmatpush1.bf16.xpose.msra.mxu0 %v170
  %182 = vmatprep.subr.bf16.mxu0 0
  %183 = vmatpush1.bf16.xpose.msra.mxu0 %v173
  %184 = vmatprep.subr.bf16.mxu0 0
  %185 = vmatpush1.bf16.xpose.msra.mxu0 %v176
  %186 = vmatprep.subr.bf16.mxu0 0
  %187 = vmatpush1.bf16.xpose.msra.mxu0 0
  %188 = vmatprep.subr.bf16.mxu0 0
  %189 = vmatpush1.bf16.xpose.msra.mxu0 0
  %190 = vmatprep.subr.bf16.mxu0 0
  %191 = vmatpush1.bf16.xpose.msra.mxu0 0
  %192 = vmatprep.subr.bf16.mxu0 0
  %193 = vmatpush1.bf16.xpose.msra.mxu0 0
  %194 = vmatprep.subr.bf16.mxu0 0
  %195 = vmatpush1.bf16.xpose.msra.mxu0 0
  %196 = vmatprep.subr.bf16.mxu0 0
  %197 = vmatpush1.bf16.xpose.msra.mxu0 0
  %198 = vmatprep.subr.bf16.mxu0 0
  %199 = vmatpush1.bf16.xpose.msra.mxu0 0
  %200 = vmatprep.subr.bf16.mxu0 0
  %201 = vmatpush1.bf16.xpose.msra.mxu0 0
  %202 = vmatprep.subr.bf16.mxu0 0
  %203 = vmatpush1.bf16.xpose.msra.mxu0 0
  %204 = vmatprep.subr.bf16.mxu0 0
  %205 = vmatpush1.bf16.xpose.msra.mxu0 0
  %206 = vmatprep.subr.bf16.mxu0 0
  %207 = vmatpush1.bf16.xpose.msra.mxu0 0
  %208 = vmatprep.subr.bf16.mxu0 0
  %209 = vmatpush1.bf16.xpose.msra.mxu0 0
  %210 = vmatprep.mubr.bf16.mxu0 0
  %211 = vmatmul.mubr.bf16.gmra.mrb[0].mxu0 %v143
  %v212 = vpop.f32.mrb[0].mxu0
  %v213 = vadd.f32 0.0, %v212
  %v214 = vpop.f32.mrb[0].mxu0
  %v215 = vpop.f32.mrb[0].mxu0
  %v216 = vadd.f32 0.0, %v215
  %v217 = vpop.f32.mrb[0].mxu0
  %218 = vmatprep.mubr.bf16.mxu0 0
  %219 = vmatmul.mubr.bf16.gmra.mrb[0].mxu0 %v146
  %v220 = vpop.f32.mrb[0].mxu0
  %v221 = vadd.f32 0.0, %v220
  %v222 = vpop.f32.mrb[0].mxu0
  %v223 = vpop.f32.mrb[0].mxu0
  %v224 = vadd.f32 0.0, %v223
  %v225 = vpop.f32.mrb[0].mxu0
  %226 = vmatprep.mubr.bf16.mxu0 0
  %227 = vmatmul.mubr.bf16.gmra.mrb[0].mxu0 %v149
  %v228 = vpop.f32.mrb[0].mxu0
  %v229 = vadd.f32 0.0, %v228
  %v230 = vpop.f32.mrb[0].mxu0
  %v231 = vpop.f32.mrb[0].mxu0
  %v232 = vadd.f32 0.0, %v231
  %v233 = vpop.f32.mrb[0].mxu0
  %234 = vmatprep.mubr.bf16.mxu0 0
  %235 = vmatmul.mubr.bf16.gmra.mrb[0].mxu0 %v152
  %v236 = vpop.f32.mrb[0].mxu0
  %v237 = vadd.f32 0.0, %v236
  %v238 = vpop.f32.mrb[0].mxu0
  %v239 = vpop.f32.mrb[0].mxu0
  %v240 = vadd.f32 0.0, %v239
  %v241 = vpop.f32.mrb[0].mxu0
  %242 = vmatprep.mubr.bf16.mxu0 0
  %243 = vmatmul.mubr.bf16.gmra.mrb[0].mxu0 %v155
  %v244 = vpop.f32.mrb[0].mxu0
  %v245 = vadd.f32 0.0, %v244
  %v246 = vpop.f32.mrb[0].mxu0
  %v247 = vpop.f32.mrb[0].mxu0
  %v248 = vadd.f32 0.0, %v247
  %v249 = vpop.f32.mrb[0].mxu0
  %250 = vmatprep.mubr.bf16.mxu0 0
  %251 = vmatmul.mubr.bf16.gmra.mrb[0].mxu0 %v158
  %v252 = vpop.f32.mrb[0].mxu0
  %v253 = vadd.f32 0.0, %v252
  %v254 = vpop.f32.mrb[0].mxu0
  %v255 = vpop.f32.mrb[0].mxu0
  %v256 = vadd.f32 0.0, %v255
  %v257 = vpop.f32.mrb[0].mxu0
  %258 = vmatprep.mubr.bf16.mxu0 0
  %259 = vmatmul.mubr.bf16.gmra.mrb[0].mxu0 %v161
  %v260 = vpop.f32.mrb[0].mxu0
  %v261 = vadd.f32 0.0, %v260
  %v262 = vpop.f32.mrb[0].mxu0
  %v263 = vpop.f32.mrb[0].mxu0
  %v264 = vadd.f32 0.0, %v263
  %v265 = vpop.f32.mrb[0].mxu0
  %266 = vmatprep.mubr.bf16.mxu0 0
  %267 = vmatmul.mubr.bf16.gmra.mrb[0].mxu0 %v164
  %v268 = vpop.f32.mrb[0].mxu0
  %v269 = vadd.f32 0.0, %v268
  %v270 = vpop.f32.mrb[0].mxu0
  %v271 = vpop.f32.mrb[0].mxu0
  %v272 = vadd.f32 0.0, %v271
  %v273 = vpop.f32.mrb[0].mxu0
  %274 = vdwg.mxu0
  %v275 = vld [vmem:[%s2] sm:$0xff]
  %v276 = vld [vmem:[%s2 + $0x8] sm:$0xff]
  %v277 = vld [vmem:[%s2 + $0x10] sm:$0xff]
  %v278 = vld [vmem:[%s2 + $0x18] sm:$0xff]
  %v279 = vld [vmem:[%s2 + $0x20] sm:$0xff]
  %v280 = vld [vmem:[%s2 + $0x28] sm:$0xff]
  %v281 = vld [vmem:[%s2 + $0x30] sm:$0xff]
  %v282 = vld [vmem:[%s2 + $0x38] sm:$0xff]
  %v283 = vld [vmem:[%s2 + $0x40] sm:$0xff]
  %v284 = vld [vmem:[%s2 + $0x48] sm:$0xff]
  %v285 = vld [vmem:[%s2 + $0x50] sm:$0xff]
  %v286 = vld [vmem:[%s2 + $0x58] sm:$0xff]
  %v287 = vld [vmem:[%s2 + $0x60] sm:$0xff]
  %v288 = vld [vmem:[%s2 + $0x68] sm:$0xff]
  %v289 = vld [vmem:[%s2 + $0x70] sm:$0xff]
  %v290 = vld [vmem:[%s2 + $0x78] sm:$0xff]
  %v291 = vld [vmem:[%s3] sm:$0x1]
  %293 = vset.pattern.permute.xlu0 0
  %294 = vperm.xlu0 %293, %v275
  %v295 = vpop.permute.xlu0 %294
  %298 = vset.pattern.permute.xlu0 0
  %299 = vperm.xlu0 %298, %v276
  %v300 = vpop.permute.xlu0 %299
  %303 = vset.pattern.permute.xlu0 0
  %304 = vperm.xlu0 %303, %v277
  %v305 = vpop.permute.xlu0 %304
  %308 = vset.pattern.permute.xlu0 0
  %309 = vperm.xlu0 %308, %v278
  %v310 = vpop.permute.xlu0 %309
  %313 = vset.pattern.permute.xlu0 0
  %314 = vperm.xlu0 %313, %v279
  %v315 = vpop.permute.xlu0 %314
  %318 = vset.pattern.permute.xlu0 0
  %319 = vperm.xlu0 %318, %v280
  %v320 = vpop.permute.xlu0 %319
  %323 = vset.pattern.permute.xlu0 0
  %324 = vperm.xlu0 %323, %v281
  %v325 = vpop.permute.xlu0 %324
  %328 = vset.pattern.permute.xlu0 0
  %329 = vperm.xlu0 %328, %v282
  %v330 = vpop.permute.xlu0 %329
  %333 = vset.pattern.permute.xlu0 0
  %334 = vperm.xlu0 %333, %v283
  %v335 = vpop.permute.xlu0 %334
  %338 = vset.pattern.permute.xlu0 0
  %339 = vperm.xlu0 %338, %v284
  %v340 = vpop.permute.xlu0 %339
  %343 = vset.pattern.permute.xlu0 0
  %344 = vperm.xlu0 %343, %v285
  %v345 = vpop.permute.xlu0 %344
  %348 = vset.pattern.permute.xlu0 0
  %349 = vperm.xlu0 %348, %v286
  %v350 = vpop.permute.xlu0 %349
  %353 = vset.pattern.permute.xlu0 0
  %354 = vperm.xlu0 %353, %v287
  %v355 = vpop.permute.xlu0 %354
  %358 = vset.pattern.permute.xlu0 0
  %359 = vperm.xlu0 %358, %v288
  %v360 = vpop.permute.xlu0 %359
  %363 = vset.pattern.permute.xlu0 0
  %364 = vperm.xlu0 %363, %v289
  %v365 = vpop.permute.xlu0 %364
  %368 = vset.pattern.permute.xlu0 0
  %369 = vperm.xlu0 %368, %v290
  %v370 = vpop.permute.xlu0 %369
  %v373 = vlaneseq
  %v374 = vshrl.u32 %v373, 7
  %v375 = vsub.s32 0, %v374
  %v376 = vrot.slane %v291, %v375
  %v378 = vadd.f32 %v295, %v376
  %v379 = vadd.f32 %v300, %v376
  %v380 = vadd.f32 %v305, %v376
  %v381 = vadd.f32 %v310, %v376
  %v382 = vadd.f32 %v315, %v376
  %v383 = vadd.f32 %v320, %v376
  %v384 = vadd.f32 %v325, %v376
  %v385 = vadd.f32 %v330, %v376
  %v386 = vadd.f32 %v335, %v376
  %v387 = vadd.f32 %v340, %v376
  %v388 = vadd.f32 %v345, %v376
  %v389 = vadd.f32 %v350, %v376
  %v390 = vadd.f32 %v355, %v376
  %v391 = vadd.f32 %v360, %v376
  %v392 = vadd.f32 %v365, %v376
  %v393 = vadd.f32 %v370, %v376
  %v394 = vmul.f32 %v213, 2.0
  %v395 = vmul.f32 %v216, 2.0
  %v396 = vmul.f32 %v221, 2.0
  %v397 = vmul.f32 %v224, 2.0
  %v398 = vmul.f32 %v229, 2.0
  %v399 = vmul.f32 %v232, 2.0
  %v400 = vmul.f32 %v237, 2.0
  %v401 = vmul.f32 %v240, 2.0
  %v402 = vmul.f32 %v245, 2.0
  %v403 = vmul.f32 %v248, 2.0
  %v404 = vmul.f32 %v253, 2.0
  %v405 = vmul.f32 %v256, 2.0
  %v406 = vmul.f32 %v261, 2.0
  %v407 = vmul.f32 %v264, 2.0
  %v408 = vmul.f32 %v269, 2.0
  %v409 = vmul.f32 %v272, 2.0
  %v410 = vsub.f32 %v378, %v394
  %v411 = vsub.f32 %v379, %v395
  %v412 = vsub.f32 %v380, %v396
  %v413 = vsub.f32 %v381, %v397
  %v414 = vsub.f32 %v382, %v398
  %v415 = vsub.f32 %v383, %v399
  %v416 = vsub.f32 %v384, %v400
  %v417 = vsub.f32 %v385, %v401
  %v418 = vsub.f32 %v386, %v402
  %v419 = vsub.f32 %v387, %v403
  %v420 = vsub.f32 %v388, %v404
  %v421 = vsub.f32 %v389, %v405
  %v422 = vsub.f32 %v390, %v406
  %v423 = vsub.f32 %v391, %v407
  %v424 = vsub.f32 %v392, %v408
  %v425 = vsub.f32 %v393, %v409
  %v426 = vmax.f32 %v410, 0.0
  %v427 = vmax.f32 %v411, 0.0
  %v428 = vmax.f32 %v412, 0.0
  %v429 = vmax.f32 %v413, 0.0
  %v430 = vmax.f32 %v414, 0.0
  %v431 = vmax.f32 %v415, 0.0
  %v432 = vmax.f32 %v416, 0.0
  %v433 = vmax.f32 %v417, 0.0
  %v434 = vmax.f32 %v418, 0.0
  %v435 = vmax.f32 %v419, 0.0
  %v436 = vmax.f32 %v420, 0.0
  %v437 = vmax.f32 %v421, 0.0
  %v438 = vmax.f32 %v422, 0.0
  %v439 = vmax.f32 %v423, 0.0
  %v440 = vmax.f32 %v424, 0.0
  %v441 = vmax.f32 %v425, 0.0
  %vm442 = vcmask 523264
  %v443 = vsel %vm442, %v426, inf
  %444 = vmin.xlane.f32.xlu0 %v443
  %v445 = vpop.xlane.xlu0 %444
  %v446 = vsel %vm442, %v427, inf
  %447 = vmin.xlane.f32.xlu0 %v446
  %v448 = vpop.xlane.xlu0 %447
  %v449 = vsel %vm442, %v428, inf
  %450 = vmin.xlane.f32.xlu0 %v449
  %v451 = vpop.xlane.xlu0 %450
  %v452 = vsel %vm442, %v429, inf
  %453 = vmin.xlane.f32.xlu0 %v452
  %v454 = vpop.xlane.xlu0 %453
  %v455 = vsel %vm442, %v430, inf
  %456 = vmin.xlane.f32.xlu0 %v455
  %v457 = vpop.xlane.xlu0 %456
  %v458 = vsel %vm442, %v431, inf
  %459 = vmin.xlane.f32.xlu0 %v458
  %v460 = vpop.xlane.xlu0 %459
  %v461 = vsel %vm442, %v432, inf
  %462 = vmin.xlane.f32.xlu0 %v461
  %v463 = vpop.xlane.xlu0 %462
  %v464 = vsel %vm442, %v433, inf
  %465 = vmin.xlane.f32.xlu0 %v464
  %v466 = vpop.xlane.xlu0 %465
  %v467 = vsel %vm442, %v434, inf
  %468 = vmin.xlane.f32.xlu0 %v467
  %v469 = vpop.xlane.xlu0 %468
  %v470 = vsel %vm442, %v435, inf
  %471 = vmin.xlane.f32.xlu0 %v470
  %v472 = vpop.xlane.xlu0 %471
  %v473 = vsel %vm442, %v436, inf
  %474 = vmin.xlane.f32.xlu0 %v473
  %v475 = vpop.xlane.xlu0 %474
  %v476 = vsel %vm442, %v437, inf
  %477 = vmin.xlane.f32.xlu0 %v476
  %v478 = vpop.xlane.xlu0 %477
  %v479 = vsel %vm442, %v438, inf
  %480 = vmin.xlane.f32.xlu0 %v479
  %v481 = vpop.xlane.xlu0 %480
  %v482 = vsel %vm442, %v439, inf
  %483 = vmin.xlane.f32.xlu0 %v482
  %v484 = vpop.xlane.xlu0 %483
  %v485 = vsel %vm442, %v440, inf
  %486 = vmin.xlane.f32.xlu0 %v485
  %v487 = vpop.xlane.xlu0 %486
  %v488 = vsel %vm442, %v441, inf
  %489 = vmin.xlane.f32.xlu0 %v488
  %v490 = vpop.xlane.xlu0 %489
  %v491 = vlaneseq
  %v492 = vand.u32 %v491, 127
  %s493 = smul.u32 0, 64
  %v494 = vstv %s493
  %v495 = vadd.s32 %v492, %v494
  %vm496 = vcmp.le.f32.partialorder %v426, %v445
  %vm497 = vcmp.le.f32.partialorder %v427, %v448
  %vm498 = vcmp.le.f32.partialorder %v428, %v451
  %vm499 = vcmp.le.f32.partialorder %v429, %v454
  %vm500 = vcmp.le.f32.partialorder %v430, %v457
  %vm501 = vcmp.le.f32.partialorder %v431, %v460
  %vm502 = vcmp.le.f32.partialorder %v432, %v463
  %vm503 = vcmp.le.f32.partialorder %v433, %v466
  %vm504 = vcmp.le.f32.partialorder %v434, %v469
  %vm505 = vcmp.le.f32.partialorder %v435, %v472
  %vm506 = vcmp.le.f32.partialorder %v436, %v475
  %vm507 = vcmp.le.f32.partialorder %v437, %v478
  %vm508 = vcmp.le.f32.partialorder %v438, %v481
  %vm509 = vcmp.le.f32.partialorder %v439, %v484
  %vm510 = vcmp.le.f32.partialorder %v440, %v487
  %vm511 = vcmp.le.f32.partialorder %v441, %v490
  %v512 = vsel %vm496, %v495, 2147483647
  %v513 = vsel %vm497, %v495, 2147483647
  %v514 = vsel %vm498, %v495, 2147483647
  %v515 = vsel %vm499, %v495, 2147483647
  %v516 = vsel %vm500, %v495, 2147483647
  %v517 = vsel %vm501, %v495, 2147483647
  %v518 = vsel %vm502, %v495, 2147483647
  %v519 = vsel %vm503, %v495, 2147483647
  %v520 = vsel %vm504, %v495, 2147483647
  %v521 = vsel %vm505, %v495, 2147483647
  %v522 = vsel %vm506, %v495, 2147483647
  %v523 = vsel %vm507, %v495, 2147483647
  %v524 = vsel %vm508, %v495, 2147483647
  %v525 = vsel %vm509, %v495, 2147483647
  %v526 = vsel %vm510, %v495, 2147483647
  %v527 = vsel %vm511, %v495, 2147483647
  %v528 = vsel %vm442, %v512, 2147483647
  %v529 = vand.u32 %v528, 65535
  %v530 = vshra.s32 %v528, 16
  %v531 = vcvt.s32.f32 %v529
  %v532 = vcvt.s32.f32 %v530
  %533 = vmin.xlane.f32.xlu0 %v532
  %v534 = vpop.xlane.xlu0 %533
  %vm535 = vcmp.eq.f32.partialorder %v532, %v534
  %v536 = vsel %vm535, %v531, inf
  %537 = vmin.xlane.f32.xlu0 %v536
  %v538 = vpop.xlane.xlu0 %537
  %v539 = vcvt.f32.s32 %v538
  %v540 = vcvt.f32.s32 %v534
  %v541 = vshll.u32 %v540, 16
  %v542 = vadd.s32 %v541, %v539
  %v543 = vsel %vm442, %v513, 2147483647
  %v544 = vand.u32 %v543, 65535
  %v545 = vshra.s32 %v543, 16
  %v546 = vcvt.s32.f32 %v544
  %v547 = vcvt.s32.f32 %v545
  %548 = vmin.xlane.f32.xlu0 %v547
  %v549 = vpop.xlane.xlu0 %548
  %vm550 = vcmp.eq.f32.partialorder %v547, %v549
  %v551 = vsel %vm550, %v546, inf
  %552 = vmin.xlane.f32.xlu0 %v551
  %v553 = vpop.xlane.xlu0 %552
  %v554 = vcvt.f32.s32 %v553
  %v555 = vcvt.f32.s32 %v549
  %v556 = vshll.u32 %v555, 16
  %v557 = vadd.s32 %v556, %v554
  %v558 = vsel %vm442, %v514, 2147483647
  %v559 = vand.u32 %v558, 65535
  %v560 = vshra.s32 %v558, 16
  %v561 = vcvt.s32.f32 %v559
  %v562 = vcvt.s32.f32 %v560
  %563 = vmin.xlane.f32.xlu0 %v562
  %v564 = vpop.xlane.xlu0 %563
  %vm565 = vcmp.eq.f32.partialorder %v562, %v564
  %v566 = vsel %vm565, %v561, inf
  %567 = vmin.xlane.f32.xlu0 %v566
  %v568 = vpop.xlane.xlu0 %567
  %v569 = vcvt.f32.s32 %v568
  %v570 = vcvt.f32.s32 %v564
  %v571 = vshll.u32 %v570, 16
  %v572 = vadd.s32 %v571, %v569
  %v573 = vsel %vm442, %v515, 2147483647
  %v574 = vand.u32 %v573, 65535
  %v575 = vshra.s32 %v573, 16
  %v576 = vcvt.s32.f32 %v574
  %v577 = vcvt.s32.f32 %v575
  %578 = vmin.xlane.f32.xlu0 %v577
  %v579 = vpop.xlane.xlu0 %578
  %vm580 = vcmp.eq.f32.partialorder %v577, %v579
  %v581 = vsel %vm580, %v576, inf
  %582 = vmin.xlane.f32.xlu0 %v581
  %v583 = vpop.xlane.xlu0 %582
  %v584 = vcvt.f32.s32 %v583
  %v585 = vcvt.f32.s32 %v579
  %v586 = vshll.u32 %v585, 16
  %v587 = vadd.s32 %v586, %v584
  %v588 = vsel %vm442, %v516, 2147483647
  %v589 = vand.u32 %v588, 65535
  %v590 = vshra.s32 %v588, 16
  %v591 = vcvt.s32.f32 %v589
  %v592 = vcvt.s32.f32 %v590
  %593 = vmin.xlane.f32.xlu0 %v592
  %v594 = vpop.xlane.xlu0 %593
  %vm595 = vcmp.eq.f32.partialorder %v592, %v594
  %v596 = vsel %vm595, %v591, inf
  %597 = vmin.xlane.f32.xlu0 %v596
  %v598 = vpop.xlane.xlu0 %597
  %v599 = vcvt.f32.s32 %v598
  %v600 = vcvt.f32.s32 %v594
  %v601 = vshll.u32 %v600, 16
  %v602 = vadd.s32 %v601, %v599
  %v603 = vsel %vm442, %v517, 2147483647
  %v604 = vand.u32 %v603, 65535
  %v605 = vshra.s32 %v603, 16
  %v606 = vcvt.s32.f32 %v604
  %v607 = vcvt.s32.f32 %v605
  %608 = vmin.xlane.f32.xlu0 %v607
  %v609 = vpop.xlane.xlu0 %608
  %vm610 = vcmp.eq.f32.partialorder %v607, %v609
  %v611 = vsel %vm610, %v606, inf
  %612 = vmin.xlane.f32.xlu0 %v611
  %v613 = vpop.xlane.xlu0 %612
  %v614 = vcvt.f32.s32 %v613
  %v615 = vcvt.f32.s32 %v609
  %v616 = vshll.u32 %v615, 16
  %v617 = vadd.s32 %v616, %v614
  %v618 = vsel %vm442, %v518, 2147483647
  %v619 = vand.u32 %v618, 65535
  %v620 = vshra.s32 %v618, 16
  %v621 = vcvt.s32.f32 %v619
  %v622 = vcvt.s32.f32 %v620
  %623 = vmin.xlane.f32.xlu0 %v622
  %v624 = vpop.xlane.xlu0 %623
  %vm625 = vcmp.eq.f32.partialorder %v622, %v624
  %v626 = vsel %vm625, %v621, inf
  %627 = vmin.xlane.f32.xlu0 %v626
  %v628 = vpop.xlane.xlu0 %627
  %v629 = vcvt.f32.s32 %v628
  %v630 = vcvt.f32.s32 %v624
  %v631 = vshll.u32 %v630, 16
  %v632 = vadd.s32 %v631, %v629
  %v633 = vsel %vm442, %v519, 2147483647
  %v634 = vand.u32 %v633, 65535
  %v635 = vshra.s32 %v633, 16
  %v636 = vcvt.s32.f32 %v634
  %v637 = vcvt.s32.f32 %v635
  %638 = vmin.xlane.f32.xlu0 %v637
  %v639 = vpop.xlane.xlu0 %638
  %vm640 = vcmp.eq.f32.partialorder %v637, %v639
  %v641 = vsel %vm640, %v636, inf
  %642 = vmin.xlane.f32.xlu0 %v641
  %v643 = vpop.xlane.xlu0 %642
  %v644 = vcvt.f32.s32 %v643
  %v645 = vcvt.f32.s32 %v639
  %v646 = vshll.u32 %v645, 16
  %v647 = vadd.s32 %v646, %v644
  %v648 = vsel %vm442, %v520, 2147483647
  %v649 = vand.u32 %v648, 65535
  %v650 = vshra.s32 %v648, 16
  %v651 = vcvt.s32.f32 %v649
  %v652 = vcvt.s32.f32 %v650
  %653 = vmin.xlane.f32.xlu0 %v652
  %v654 = vpop.xlane.xlu0 %653
  %vm655 = vcmp.eq.f32.partialorder %v652, %v654
  %v656 = vsel %vm655, %v651, inf
  %657 = vmin.xlane.f32.xlu0 %v656
  %v658 = vpop.xlane.xlu0 %657
  %v659 = vcvt.f32.s32 %v658
  %v660 = vcvt.f32.s32 %v654
  %v661 = vshll.u32 %v660, 16
  %v662 = vadd.s32 %v661, %v659
  %v663 = vsel %vm442, %v521, 2147483647
  %v664 = vand.u32 %v663, 65535
  %v665 = vshra.s32 %v663, 16
  %v666 = vcvt.s32.f32 %v664
  %v667 = vcvt.s32.f32 %v665
  %668 = vmin.xlane.f32.xlu0 %v667
  %v669 = vpop.xlane.xlu0 %668
  %vm670 = vcmp.eq.f32.partialorder %v667, %v669
  %v671 = vsel %vm670, %v666, inf
  %672 = vmin.xlane.f32.xlu0 %v671
  %v673 = vpop.xlane.xlu0 %672
  %v674 = vcvt.f32.s32 %v673
  %v675 = vcvt.f32.s32 %v669
  %v676 = vshll.u32 %v675, 16
  %v677 = vadd.s32 %v676, %v674
  %v678 = vsel %vm442, %v522, 2147483647
  %v679 = vand.u32 %v678, 65535
  %v680 = vshra.s32 %v678, 16
  %v681 = vcvt.s32.f32 %v679
  %v682 = vcvt.s32.f32 %v680
  %683 = vmin.xlane.f32.xlu0 %v682
  %v684 = vpop.xlane.xlu0 %683
  %vm685 = vcmp.eq.f32.partialorder %v682, %v684
  %v686 = vsel %vm685, %v681, inf
  %687 = vmin.xlane.f32.xlu0 %v686
  %v688 = vpop.xlane.xlu0 %687
  %v689 = vcvt.f32.s32 %v688
  %v690 = vcvt.f32.s32 %v684
  %v691 = vshll.u32 %v690, 16
  %v692 = vadd.s32 %v691, %v689
  %v693 = vsel %vm442, %v523, 2147483647
  %v694 = vand.u32 %v693, 65535
  %v695 = vshra.s32 %v693, 16
  %v696 = vcvt.s32.f32 %v694
  %v697 = vcvt.s32.f32 %v695
  %698 = vmin.xlane.f32.xlu0 %v697
  %v699 = vpop.xlane.xlu0 %698
  %vm700 = vcmp.eq.f32.partialorder %v697, %v699
  %v701 = vsel %vm700, %v696, inf
  %702 = vmin.xlane.f32.xlu0 %v701
  %v703 = vpop.xlane.xlu0 %702
  %v704 = vcvt.f32.s32 %v703
  %v705 = vcvt.f32.s32 %v699
  %v706 = vshll.u32 %v705, 16
  %v707 = vadd.s32 %v706, %v704
  %v708 = vsel %vm442, %v524, 2147483647
  %v709 = vand.u32 %v708, 65535
  %v710 = vshra.s32 %v708, 16
  %v711 = vcvt.s32.f32 %v709
  %v712 = vcvt.s32.f32 %v710
  %713 = vmin.xlane.f32.xlu0 %v712
  %v714 = vpop.xlane.xlu0 %713
  %vm715 = vcmp.eq.f32.partialorder %v712, %v714
  %v716 = vsel %vm715, %v711, inf
  %717 = vmin.xlane.f32.xlu0 %v716
  %v718 = vpop.xlane.xlu0 %717
  %v719 = vcvt.f32.s32 %v718
  %v720 = vcvt.f32.s32 %v714
  %v721 = vshll.u32 %v720, 16
  %v722 = vadd.s32 %v721, %v719
  %v723 = vsel %vm442, %v525, 2147483647
  %v724 = vand.u32 %v723, 65535
  %v725 = vshra.s32 %v723, 16
  %v726 = vcvt.s32.f32 %v724
  %v727 = vcvt.s32.f32 %v725
  %728 = vmin.xlane.f32.xlu0 %v727
  %v729 = vpop.xlane.xlu0 %728
  %vm730 = vcmp.eq.f32.partialorder %v727, %v729
  %v731 = vsel %vm730, %v726, inf
  %732 = vmin.xlane.f32.xlu0 %v731
  %v733 = vpop.xlane.xlu0 %732
  %v734 = vcvt.f32.s32 %v733
  %v735 = vcvt.f32.s32 %v729
  %v736 = vshll.u32 %v735, 16
  %v737 = vadd.s32 %v736, %v734
  %v738 = vsel %vm442, %v526, 2147483647
  %v739 = vand.u32 %v738, 65535
  %v740 = vshra.s32 %v738, 16
  %v741 = vcvt.s32.f32 %v739
  %v742 = vcvt.s32.f32 %v740
  %743 = vmin.xlane.f32.xlu0 %v742
  %v744 = vpop.xlane.xlu0 %743
  %vm745 = vcmp.eq.f32.partialorder %v742, %v744
  %v746 = vsel %vm745, %v741, inf
  %747 = vmin.xlane.f32.xlu0 %v746
  %v748 = vpop.xlane.xlu0 %747
  %v749 = vcvt.f32.s32 %v748
  %v750 = vcvt.f32.s32 %v744
  %v751 = vshll.u32 %v750, 16
  %v752 = vadd.s32 %v751, %v749
  %v753 = vsel %vm442, %v527, 2147483647
  %v754 = vand.u32 %v753, 65535
  %v755 = vshra.s32 %v753, 16
  %v756 = vcvt.s32.f32 %v754
  %v757 = vcvt.s32.f32 %v755
  %758 = vmin.xlane.f32.xlu0 %v757
  %v759 = vpop.xlane.xlu0 %758
  %vm760 = vcmp.eq.f32.partialorder %v757, %v759
  %v761 = vsel %vm760, %v756, inf
  %762 = vmin.xlane.f32.xlu0 %v761
  %v763 = vpop.xlane.xlu0 %762
  %v764 = vcvt.f32.s32 %v763
  %v765 = vcvt.f32.s32 %v759
  %v766 = vshll.u32 %v765, 16
  %v767 = vadd.s32 %v766, %v764
  %v768 = vld [vmem:[#allocation2] sm:$0xff]
  %v769 = vld [vmem:[#allocation2 + $0x8] sm:$0xff]
  %v770 = vld [vmem:[#allocation2 + $0x10] sm:$0xff]
  %v771 = vld [vmem:[#allocation2 + $0x18] sm:$0xff]
  %v772 = vld [vmem:[#allocation2 + $0x20] sm:$0xff]
  %v773 = vld [vmem:[#allocation2 + $0x28] sm:$0xff]
  %v774 = vld [vmem:[#allocation2 + $0x30] sm:$0xff]
  %v775 = vld [vmem:[#allocation2 + $0x38] sm:$0xff]
  %v776 = vld [vmem:[#allocation2 + $0x40] sm:$0xff]
  %v777 = vld [vmem:[#allocation2 + $0x48] sm:$0xff]
  %v778 = vld [vmem:[#allocation2 + $0x50] sm:$0xff]
  %v779 = vld [vmem:[#allocation2 + $0x58] sm:$0xff]
  %v780 = vld [vmem:[#allocation2 + $0x60] sm:$0xff]
  %v781 = vld [vmem:[#allocation2 + $0x68] sm:$0xff]
  %v782 = vld [vmem:[#allocation2 + $0x70] sm:$0xff]
  %v783 = vld [vmem:[#allocation2 + $0x78] sm:$0xff]
  %vm784 = vcmp.lt.f32.partialorder %v445, %v768
  %vm785 = vcmp.lt.f32.partialorder %v448, %v769
  %vm786 = vcmp.lt.f32.partialorder %v451, %v770
  %vm787 = vcmp.lt.f32.partialorder %v454, %v771
  %vm788 = vcmp.lt.f32.partialorder %v457, %v772
  %vm789 = vcmp.lt.f32.partialorder %v460, %v773
  %vm790 = vcmp.lt.f32.partialorder %v463, %v774
  %vm791 = vcmp.lt.f32.partialorder %v466, %v775
  %vm792 = vcmp.lt.f32.partialorder %v469, %v776
  %vm793 = vcmp.lt.f32.partialorder %v472, %v777
  %vm794 = vcmp.lt.f32.partialorder %v475, %v778
  %vm795 = vcmp.lt.f32.partialorder %v478, %v779
  %vm796 = vcmp.lt.f32.partialorder %v481, %v780
  %vm797 = vcmp.lt.f32.partialorder %v484, %v781
  %vm798 = vcmp.lt.f32.partialorder %v487, %v782
  %vm799 = vcmp.lt.f32.partialorder %v490, %v783
  %v800 = vld [vmem:[#allocation3] sm:$0xff]
  %v801 = vld [vmem:[#allocation3 + $0x8] sm:$0xff]
  %v802 = vld [vmem:[#allocation3 + $0x10] sm:$0xff]
  %v803 = vld [vmem:[#allocation3 + $0x18] sm:$0xff]
  %v804 = vld [vmem:[#allocation3 + $0x20] sm:$0xff]
  %v805 = vld [vmem:[#allocation3 + $0x28] sm:$0xff]
  %v806 = vld [vmem:[#allocation3 + $0x30] sm:$0xff]
  %v807 = vld [vmem:[#allocation3 + $0x38] sm:$0xff]
  %v808 = vld [vmem:[#allocation3 + $0x40] sm:$0xff]
  %v809 = vld [vmem:[#allocation3 + $0x48] sm:$0xff]
  %v810 = vld [vmem:[#allocation3 + $0x50] sm:$0xff]
  %v811 = vld [vmem:[#allocation3 + $0x58] sm:$0xff]
  %v812 = vld [vmem:[#allocation3 + $0x60] sm:$0xff]
  %v813 = vld [vmem:[#allocation3 + $0x68] sm:$0xff]
  %v814 = vld [vmem:[#allocation3 + $0x70] sm:$0xff]
  %v815 = vld [vmem:[#allocation3 + $0x78] sm:$0xff]
  %v816 = vsel %vm784, %v542, %v800
  %v817 = vsel %vm785, %v557, %v801
  %v818 = vsel %vm786, %v572, %v802
  %v819 = vsel %vm787, %v587, %v803
  %v820 = vsel %vm788, %v602, %v804
  %v821 = vsel %vm789, %v617, %v805
  %v822 = vsel %vm790, %v632, %v806
  %v823 = vsel %vm791, %v647, %v807
  %v824 = vsel %vm792, %v662, %v808
  %v825 = vsel %vm793, %v677, %v809
  %v826 = vsel %vm794, %v692, %v810
  %v827 = vsel %vm795, %v707, %v811
  %v828 = vsel %vm796, %v722, %v812
  %v829 = vsel %vm797, %v737, %v813
  %v830 = vsel %vm798, %v752, %v814
  %v831 = vsel %vm799, %v767, %v815
  %vm832 = vcmask 7168
  %833 = vst.msk [vmem:[#allocation3] sm:$0xff] %vm832, %v816
  %834 = vst.msk [vmem:[#allocation3 + $0x8] sm:$0xff] %vm832, %v817
  %835 = vst.msk [vmem:[#allocation3 + $0x10] sm:$0xff] %vm832, %v818
  %836 = vst.msk [vmem:[#allocation3 + $0x18] sm:$0xff] %vm832, %v819
  %837 = vst.msk [vmem:[#allocation3 + $0x20] sm:$0xff] %vm832, %v820
  %838 = vst.msk [vmem:[#allocation3 + $0x28] sm:$0xff] %vm832, %v821
  %839 = vst.msk [vmem:[#allocation3 + $0x30] sm:$0xff] %vm832, %v822
  %840 = vst.msk [vmem:[#allocation3 + $0x38] sm:$0xff] %vm832, %v823
  %841 = vst.msk [vmem:[#allocation3 + $0x40] sm:$0xff] %vm832, %v824
  %842 = vst.msk [vmem:[#allocation3 + $0x48] sm:$0xff] %vm832, %v825
  %843 = vst.msk [vmem:[#allocation3 + $0x50] sm:$0xff] %vm832, %v826
  %844 = vst.msk [vmem:[#allocation3 + $0x58] sm:$0xff] %vm832, %v827
  %845 = vst.msk [vmem:[#allocation3 + $0x60] sm:$0xff] %vm832, %v828
  %846 = vst.msk [vmem:[#allocation3 + $0x68] sm:$0xff] %vm832, %v829
  %847 = vst.msk [vmem:[#allocation3 + $0x70] sm:$0xff] %vm832, %v830
  %848 = vst.msk [vmem:[#allocation3 + $0x78] sm:$0xff] %vm832, %v831
  %v849 = vld [vmem:[#allocation2] sm:$0xff]
  %v850 = vld [vmem:[#allocation2 + $0x8] sm:$0xff]
  %v851 = vld [vmem:[#allocation2 + $0x10] sm:$0xff]
  %v852 = vld [vmem:[#allocation2 + $0x18] sm:$0xff]
  %v853 = vld [vmem:[#allocation2 + $0x20] sm:$0xff]
  %v854 = vld [vmem:[#allocation2 + $0x28] sm:$0xff]
  %v855 = vld [vmem:[#allocation2 + $0x30] sm:$0xff]
  %v856 = vld [vmem:[#allocation2 + $0x38] sm:$0xff]
  %v857 = vld [vmem:[#allocation2 + $0x40] sm:$0xff]
  %v858 = vld [vmem:[#allocation2 + $0x48] sm:$0xff]
  %v859 = vld [vmem:[#allocation2 + $0x50] sm:$0xff]
  %v860 = vld [vmem:[#allocation2 + $0x58] sm:$0xff]
  %v861 = vld [vmem:[#allocation2 + $0x60] sm:$0xff]
  %v862 = vld [vmem:[#allocation2 + $0x68] sm:$0xff]
  %v863 = vld [vmem:[#allocation2 + $0x70] sm:$0xff]
  %v864 = vld [vmem:[#allocation2 + $0x78] sm:$0xff]
  %v865 = vsel %vm784, %v445, %v849
  %v866 = vsel %vm785, %v448, %v850
  %v867 = vsel %vm786, %v451, %v851
  %v868 = vsel %vm787, %v454, %v852
  %v869 = vsel %vm788, %v457, %v853
  %v870 = vsel %vm789, %v460, %v854
  %v871 = vsel %vm790, %v463, %v855
  %v872 = vsel %vm791, %v466, %v856
  %v873 = vsel %vm792, %v469, %v857
  %v874 = vsel %vm793, %v472, %v858
  %v875 = vsel %vm794, %v475, %v859
  %v876 = vsel %vm795, %v478, %v860
  %v877 = vsel %vm796, %v481, %v861
  %v878 = vsel %vm797, %v484, %v862
  %v879 = vsel %vm798, %v487, %v863
  %v880 = vsel %vm799, %v490, %v864
  %881 = vst.msk [vmem:[#allocation2] sm:$0xff] %vm832, %v865
  %882 = vst.msk [vmem:[#allocation2 + $0x8] sm:$0xff] %vm832, %v866
  %883 = vst.msk [vmem:[#allocation2 + $0x10] sm:$0xff] %vm832, %v867
  %884 = vst.msk [vmem:[#allocation2 + $0x18] sm:$0xff] %vm832, %v868
  %885 = vst.msk [vmem:[#allocation2 + $0x20] sm:$0xff] %vm832, %v869
  %886 = vst.msk [vmem:[#allocation2 + $0x28] sm:$0xff] %vm832, %v870
  %887 = vst.msk [vmem:[#allocation2 + $0x30] sm:$0xff] %vm832, %v871
  %888 = vst.msk [vmem:[#allocation2 + $0x38] sm:$0xff] %vm832, %v872
  %889 = vst.msk [vmem:[#allocation2 + $0x40] sm:$0xff] %vm832, %v873
  %890 = vst.msk [vmem:[#allocation2 + $0x48] sm:$0xff] %vm832, %v874
  %891 = vst.msk [vmem:[#allocation2 + $0x50] sm:$0xff] %vm832, %v875
  %892 = vst.msk [vmem:[#allocation2 + $0x58] sm:$0xff] %vm832, %v876
  %893 = vst.msk [vmem:[#allocation2 + $0x60] sm:$0xff] %vm832, %v877
  %894 = vst.msk [vmem:[#allocation2 + $0x68] sm:$0xff] %vm832, %v878
  %895 = vst.msk [vmem:[#allocation2 + $0x70] sm:$0xff] %vm832, %v879
  %896 = vst.msk [vmem:[#allocation2 + $0x78] sm:$0xff] %vm832, %v880
  // Predicated region
  $region22: #{_lambda_.7} parent=0 // pred_check
    %p897 = pneg %p20
  $region23: #{_lambda_.7} parent=0 // pred_check_branch
    %899 = sbr.rel (%p897) target = $region25
  $region24: #{_lambda_.7} parent=0 // pred_region
    %v900 = vld [vmem:[#allocation2] sm:$0xff]
    %v901 = vld [vmem:[#allocation2 + $0x8] sm:$0xff]
    %v902 = vld [vmem:[#allocation2 + $0x10] sm:$0xff]
    %v903 = vld [vmem:[#allocation2 + $0x18] sm:$0xff]
    %v904 = vld [vmem:[#allocation2 + $0x20] sm:$0xff]
    %v905 = vld [vmem:[#allocation2 + $0x28] sm:$0xff]
    %v906 = vld [vmem:[#allocation2 + $0x30] sm:$0xff]
    %v907 = vld [vmem:[#allocation2 + $0x38] sm:$0xff]
    %v908 = vld [vmem:[#allocation2 + $0x40] sm:$0xff]
    %v909 = vld [vmem:[#allocation2 + $0x48] sm:$0xff]
    %v910 = vld [vmem:[#allocation2 + $0x50] sm:$0xff]
    %v911 = vld [vmem:[#allocation2 + $0x58] sm:$0xff]
    %v912 = vld [vmem:[#allocation2 + $0x60] sm:$0xff]
    %v913 = vld [vmem:[#allocation2 + $0x68] sm:$0xff]
    %v914 = vld [vmem:[#allocation2 + $0x70] sm:$0xff]
    %v915 = vld [vmem:[#allocation2 + $0x78] sm:$0xff]
    %v916 = vrsqrt.pop %v900
    %v917 = vmul.f32 %v900, %v916
    %vm918 = vcmp.eq.f32.partialorder %v900, inf
    %v919 = vsel %vm918, %v900, %v917
    %vm920 = vcmp.eq.f32.partialorder %v900, 0.0
    %v921 = vand.u32 %v900, 2147483648
    %v922 = vsel %vm920, %v921, %v919
    %v923 = vrsqrt.pop %v901
    %v924 = vmul.f32 %v901, %v923
    %vm925 = vcmp.eq.f32.partialorder %v901, inf
    %v926 = vsel %vm925, %v901, %v924
    %vm927 = vcmp.eq.f32.partialorder %v901, 0.0
    %v928 = vand.u32 %v901, 2147483648
    %v929 = vsel %vm927, %v928, %v926
    %v930 = vrsqrt.pop %v902
    %v931 = vmul.f32 %v902, %v930
    %vm932 = vcmp.eq.f32.partialorder %v902, inf
    %v933 = vsel %vm932, %v902, %v931
    %vm934 = vcmp.eq.f32.partialorder %v902, 0.0
    %v935 = vand.u32 %v902, 2147483648
    %v936 = vsel %vm934, %v935, %v933
    %v937 = vrsqrt.pop %v903
    %v938 = vmul.f32 %v903, %v937
    %vm939 = vcmp.eq.f32.partialorder %v903, inf
    %v940 = vsel %vm939, %v903, %v938
    %vm941 = vcmp.eq.f32.partialorder %v903, 0.0
    %v942 = vand.u32 %v903, 2147483648
    %v943 = vsel %vm941, %v942, %v940
    %v944 = vrsqrt.pop %v904
    %v945 = vmul.f32 %v904, %v944
    %vm946 = vcmp.eq.f32.partialorder %v904, inf
    %v947 = vsel %vm946, %v904, %v945
    %vm948 = vcmp.eq.f32.partialorder %v904, 0.0
    %v949 = vand.u32 %v904, 2147483648
    %v950 = vsel %vm948, %v949, %v947
    %v951 = vrsqrt.pop %v905
    %v952 = vmul.f32 %v905, %v951
    %vm953 = vcmp.eq.f32.partialorder %v905, inf
    %v954 = vsel %vm953, %v905, %v952
    %vm955 = vcmp.eq.f32.partialorder %v905, 0.0
    %v956 = vand.u32 %v905, 2147483648
    %v957 = vsel %vm955, %v956, %v954
    %v958 = vrsqrt.pop %v906
    %v959 = vmul.f32 %v906, %v958
    %vm960 = vcmp.eq.f32.partialorder %v906, inf
    %v961 = vsel %vm960, %v906, %v959
    %vm962 = vcmp.eq.f32.partialorder %v906, 0.0
    %v963 = vand.u32 %v906, 2147483648
    %v964 = vsel %vm962, %v963, %v961
    %v965 = vrsqrt.pop %v907
    %v966 = vmul.f32 %v907, %v965
    %vm967 = vcmp.eq.f32.partialorder %v907, inf
    %v968 = vsel %vm967, %v907, %v966
    %vm969 = vcmp.eq.f32.partialorder %v907, 0.0
    %v970 = vand.u32 %v907, 2147483648
    %v971 = vsel %vm969, %v970, %v968
    %v972 = vrsqrt.pop %v908
    %v973 = vmul.f32 %v908, %v972
    %vm974 = vcmp.eq.f32.partialorder %v908, inf
    %v975 = vsel %vm974, %v908, %v973
    %vm976 = vcmp.eq.f32.partialorder %v908, 0.0
    %v977 = vand.u32 %v908, 2147483648
    %v978 = vsel %vm976, %v977, %v975
    %v979 = vrsqrt.pop %v909
    %v980 = vmul.f32 %v909, %v979
    %vm981 = vcmp.eq.f32.partialorder %v909, inf
    %v982 = vsel %vm981, %v909, %v980
    %vm983 = vcmp.eq.f32.partialorder %v909, 0.0
    %v984 = vand.u32 %v909, 2147483648
    %v985 = vsel %vm983, %v984, %v982
    %v986 = vrsqrt.pop %v910
    %v987 = vmul.f32 %v910, %v986
    %vm988 = vcmp.eq.f32.partialorder %v910, inf
    %v989 = vsel %vm988, %v910, %v987
    %vm990 = vcmp.eq.f32.partialorder %v910, 0.0
    %v991 = vand.u32 %v910, 2147483648
    %v992 = vsel %vm990, %v991, %v989
    %v993 = vrsqrt.pop %v911
    %v994 = vmul.f32 %v911, %v993
    %vm995 = vcmp.eq.f32.partialorder %v911, inf
    %v996 = vsel %vm995, %v911, %v994
    %vm997 = vcmp.eq.f32.partialorder %v911, 0.0
    %v998 = vand.u32 %v911, 2147483648
    %v999 = vsel %vm997, %v998, %v996
    %v1000 = vrsqrt.pop %v912
    %v1001 = vmul.f32 %v912, %v1000
    %vm1002 = vcmp.eq.f32.partialorder %v912, inf
    %v1003 = vsel %vm1002, %v912, %v1001
    %vm1004 = vcmp.eq.f32.partialorder %v912, 0.0
    %v1005 = vand.u32 %v912, 2147483648
    %v1006 = vsel %vm1004, %v1005, %v1003
    %v1007 = vrsqrt.pop %v913
    %v1008 = vmul.f32 %v913, %v1007
    %vm1009 = vcmp.eq.f32.partialorder %v913, inf
    %v1010 = vsel %vm1009, %v913, %v1008
    %vm1011 = vcmp.eq.f32.partialorder %v913, 0.0
    %v1012 = vand.u32 %v913, 2147483648
    %v1013 = vsel %vm1011, %v1012, %v1010
    %v1014 = vrsqrt.pop %v914
    %v1015 = vmul.f32 %v914, %v1014
    %vm1016 = vcmp.eq.f32.partialorder %v914, inf
    %v1017 = vsel %vm1016, %v914, %v1015
    %vm1018 = vcmp.eq.f32.partialorder %v914, 0.0
    %v1019 = vand.u32 %v914, 2147483648
    %v1020 = vsel %vm1018, %v1019, %v1017
    %v1021 = vrsqrt.pop %v915
    %v1022 = vmul.f32 %v915, %v1021
    %vm1023 = vcmp.eq.f32.partialorder %v915, inf
    %v1024 = vsel %vm1023, %v915, %v1022
    %vm1025 = vcmp.eq.f32.partialorder %v915, 0.0
    %v1026 = vand.u32 %v915, 2147483648
    %v1027 = vsel %vm1025, %v1026, %v1024
    %1028 = vst.msk [vmem:[%s4] sm:$0xff] %vm832, %v922
    %1029 = vst.msk [vmem:[%s4 + $0x8] sm:$0xff] %vm832, %v929
    %1030 = vst.msk [vmem:[%s4 + $0x10] sm:$0xff] %vm832, %v936
    %1031 = vst.msk [vmem:[%s4 + $0x18] sm:$0xff] %vm832, %v943
    %1032 = vst.msk [vmem:[%s4 + $0x20] sm:$0xff] %vm832, %v950
    %1033 = vst.msk [vmem:[%s4 + $0x28] sm:$0xff] %vm832, %v957
    %1034 = vst.msk [vmem:[%s4 + $0x30] sm:$0xff] %vm832, %v964
    %1035 = vst.msk [vmem:[%s4 + $0x38] sm:$0xff] %vm832, %v971
    %1036 = vst.msk [vmem:[%s4 + $0x40] sm:$0xff] %vm832, %v978
    %1037 = vst.msk [vmem:[%s4 + $0x48] sm:$0xff] %vm832, %v985
    %1038 = vst.msk [vmem:[%s4 + $0x50] sm:$0xff] %vm832, %v992
    %1039 = vst.msk [vmem:[%s4 + $0x58] sm:$0xff] %vm832, %v999
    %1040 = vst.msk [vmem:[%s4 + $0x60] sm:$0xff] %vm832, %v1006
    %1041 = vst.msk [vmem:[%s4 + $0x68] sm:$0xff] %vm832, %v1013
    %1042 = vst.msk [vmem:[%s4 + $0x70] sm:$0xff] %vm832, %v1020
    %1043 = vst.msk [vmem:[%s4 + $0x78] sm:$0xff] %vm832, %v1027
    %v1044 = vld [vmem:[#allocation3] sm:$0xff]
    %v1045 = vld [vmem:[#allocation3 + $0x8] sm:$0xff]
    %v1046 = vld [vmem:[#allocation3 + $0x10] sm:$0xff]
    %v1047 = vld [vmem:[#allocation3 + $0x18] sm:$0xff]
    %v1048 = vld [vmem:[#allocation3 + $0x20] sm:$0xff]
    %v1049 = vld [vmem:[#allocation3 + $0x28] sm:$0xff]
    %v1050 = vld [vmem:[#allocation3 + $0x30] sm:$0xff]
    %v1051 = vld [vmem:[#allocation3 + $0x38] sm:$0xff]
    %v1052 = vld [vmem:[#allocation3 + $0x40] sm:$0xff]
    %v1053 = vld [vmem:[#allocation3 + $0x48] sm:$0xff]
    %v1054 = vld [vmem:[#allocation3 + $0x50] sm:$0xff]
    %v1055 = vld [vmem:[#allocation3 + $0x58] sm:$0xff]
    %v1056 = vld [vmem:[#allocation3 + $0x60] sm:$0xff]
    %v1057 = vld [vmem:[#allocation3 + $0x68] sm:$0xff]
    %v1058 = vld [vmem:[#allocation3 + $0x70] sm:$0xff]
    %v1059 = vld [vmem:[#allocation3 + $0x78] sm:$0xff]
    %1060 = vst.msk [vmem:[%s5] sm:$0xff] %vm832, %v1044
    %1061 = vst.msk [vmem:[%s5 + $0x8] sm:$0xff] %vm832, %v1045
    %1062 = vst.msk [vmem:[%s5 + $0x10] sm:$0xff] %vm832, %v1046
    %1063 = vst.msk [vmem:[%s5 + $0x18] sm:$0xff] %vm832, %v1047
    %1064 = vst.msk [vmem:[%s5 + $0x20] sm:$0xff] %vm832, %v1048
    %1065 = vst.msk [vmem:[%s5 + $0x28] sm:$0xff] %vm832, %v1049
    %1066 = vst.msk [vmem:[%s5 + $0x30] sm:$0xff] %vm832, %v1050
    %1067 = vst.msk [vmem:[%s5 + $0x38] sm:$0xff] %vm832, %v1051
    %1068 = vst.msk [vmem:[%s5 + $0x40] sm:$0xff] %vm832, %v1052
    %1069 = vst.msk [vmem:[%s5 + $0x48] sm:$0xff] %vm832, %v1053
    %1070 = vst.msk [vmem:[%s5 + $0x50] sm:$0xff] %vm832, %v1054
    %1071 = vst.msk [vmem:[%s5 + $0x58] sm:$0xff] %vm832, %v1055
    %1072 = vst.msk [vmem:[%s5 + $0x60] sm:$0xff] %vm832, %v1056
    %1073 = vst.msk [vmem:[%s5 + $0x68] sm:$0xff] %vm832, %v1057
    %1074 = vst.msk [vmem:[%s5 + $0x70] sm:$0xff] %vm832, %v1058
    %1075 = vst.msk [vmem:[%s5 + $0x78] sm:$0xff] %vm832, %v1059
  $region25: #{_lambda_.7} parent=0 // pred_fallthru
    _
  // Predicated region
  $region26: #{_lambda_.7} parent=0 // pred_check
    _
  $region27: #{_lambda_.7} parent=0 // pred_check_branch
    %1077 = sbr.rel (0) target = $region29
  $region28: #{_lambda_.7} parent=0 // pred_region
    _
  $region29: #{_lambda_.7} parent=0 // pred_fallthru
    _
  // Predicated region
  $region30: #{_lambda_.7} parent=0 // pred_check
    _
  $region31: #{_lambda_.7} parent=0 // pred_check_branch
    %1079 = sbr.rel (0) target = $region33
  $region32: #{_lambda_.7} parent=0 // pred_region
    _
  $region33: #{_lambda_.7} parent=0 // pred_fallthru
    _
  // Predicated region
  $region34: #{_lambda_.7} parent=0 // pred_check
    _
  $region35: #{_lambda_.7} parent=0 // pred_check_branch
    %1081 = sbr.rel (0) target = $region37
  $region36: #{_lambda_.7} parent=0 // pred_region
    _
  $region37: #{_lambda_.7} parent=0 // pred_fallthru
    _
  // Predicated region
  $region38: #{_lambda_.7} parent=0 // pred_check
    _
  $region39: #{_lambda_.7} parent=0 // pred_check_branch
    %1083 = sbr.rel (0) target = $region41
  $region40: #{_lambda_.7} parent=0 // pred_region
    _
  $region41: #{_lambda_.7} parent=0 // pred_fallthru
    _

// kernel: _lambda_.8
$region0: #{_lambda_.8}
  #allocation0 [shape = 'u32[]', space=smem, size = 0x4, offset = 0x4, fixed_abs, tag = 'smem constant byte address 0x4 - core index']
  #allocation1 [shape = 'u32[144,128]{1,0:T(1,128)}', space=vmem, size = 0x12000, scoped, tag = 'internal scratch']
  #allocation2 [shape = 'f32[2,73]{1,0:T(2,128)}', space=vmem, size = 0x400, scoped, tag = 'scratch operand']
  #allocation3 [shape = 's32[2,73]{1,0:T(2,128)}', space=vmem, size = 0x400, scoped, tag = 'scratch operand']
  %s0 = inlined_call_operand.vmem [shape: bf16[2,48], index: 0, kind: input, shape index: {}]
  %s1 = inlined_call_operand.vmem [shape: bf16[64,48], index: 1, kind: input, shape index: {}]
  %s2 = inlined_call_operand.vmem [shape: f32[2,1], index: 2, kind: input, shape index: {}]
  %s3 = inlined_call_operand.vmem [shape: f32[1,64], index: 3, kind: input, shape index: {}]
  %s4 = inlined_call_operand.vmem [shape: s32[2,9], index: 4, kind: output, shape index: {}]
  %s5 = sld [smem:[#allocation0]]
  $region34: #{_lambda_.8} parent=0
    _
  %s7 = ssub.s32 1, %s5
  %s8 = scalar_select 0, %s7, %s5
  // Predicated region
  $region2: #{_lambda_.8} parent=0 // pred_check
    _
  $region3: #{_lambda_.8} parent=0 // pred_check_branch
    %10 = sbr.rel (0) target = $region5
  $region4: #{_lambda_.8} parent=0 // pred_region
    _
  $region5: #{_lambda_.8} parent=0 // pred_fallthru
    _
  // Predicated region
  $region6: #{_lambda_.8} parent=0 // pred_check
    _
  $region7: #{_lambda_.8} parent=0 // pred_check_branch
    %12 = sbr.rel (0) target = $region9
  $region8: #{_lambda_.8} parent=0 // pred_region
    _
  $region9: #{_lambda_.8} parent=0 // pred_fallthru
    _
  // Predicated region
  $region10: #{_lambda_.8} parent=0 // pred_check
    _
  $region11: #{_lambda_.8} parent=0 // pred_check_branch
    %14 = sbr.rel (0) target = $region13
  $region12: #{_lambda_.8} parent=0 // pred_region
    _
  $region13: #{_lambda_.8} parent=0 // pred_fallthru
    _
  // Predicated region
  $region14: #{_lambda_.8} parent=0 // pred_check
    _
  $region15: #{_lambda_.8} parent=0 // pred_check_branch
    %16 = sbr.rel (0) target = $region17
  $region16: #{_lambda_.8} parent=0 // pred_region
    _
  $region17: #{_lambda_.8} parent=0 // pred_fallthru
    _
  %p18 = scmp.eq.s32.totalorder 0, 0
  // Predicated region
  $region18: #{_lambda_.8} parent=0 // pred_check
    %p19 = pneg %p18
  $region19: #{_lambda_.8} parent=0 // pred_check_branch
    %21 = sbr.rel (%p19) target = $region21
  $region20: #{_lambda_.8} parent=0 // pred_region
    %vm22 = vcmask 590848
    %23 = vst.msk [vmem:[#allocation2] sm:$0x3] %vm22, inf
    %24 = vst.msk [vmem:[#allocation3] sm:$0x3] %vm22, 0
  $region21: #{_lambda_.8} parent=0 // pred_fallthru
    _
  %v25 = vld [vmem:[%s0] sm:$0x1]
  %v26 = vld [vmem:[%s1] sm:$0xf]
  %v27 = vld [vmem:[%s1 + $0x4] sm:$0xf]
  %v28 = vld [vmem:[%s1 + $0x8] sm:$0xf]
  %v29 = vld [vmem:[%s1 + $0xc] sm:$0xf]
  %v30 = vld [vmem:[%s1 + $0x10] sm:$0xf]
  %v31 = vld [vmem:[%s1 + $0x14] sm:$0xf]
  %v32 = vld [vmem:[%s1 + $0x18] sm:$0xf]
  %v33 = vld [vmem:[%s1 + $0x1c] sm:$0xf]
  %v42 = vunpack.c.l.b16 %v26
  %v43 = vunpack.c.l.b16 %v27
  %v44 = vunpack.c.l.b16 %v28
  %v45 = vunpack.c.l.b16 %v29
  %v46 = vunpack.c.l.b16 %v30
  %v47 = vunpack.c.l.b16 %v31
  %v48 = vunpack.c.l.b16 %v32
  %v49 = vunpack.c.l.b16 %v33
  %v50 = vpack.c.b16 %v43, %v42
  %v51 = vpack.c.b16 %v45, %v44
  %v52 = vpack.c.b16 %v47, %v46
  %v53 = vpack.c.b16 %v49, %v48
  %vm54 = vcmask 392192
  %v56 = vsel %vm54, %v25, 0
  %v59 = vsel %vm54, %v50, 0
  %v62 = vsel %vm54, %v51, 0
  %v65 = vsel %vm54, %v52, 0
  %v68 = vsel %vm54, %v53, 0
  %70 = vmatprep.subr.bf16.mxu0 0
  %71 = vmatpush1.bf16.xpose.msra.mxu0 %v59
  %72 = vmatprep.subr.bf16.mxu0 0
  %73 = vmatpush1.bf16.xpose.msra.mxu0 %v62
  %74 = vmatprep.subr.bf16.mxu0 0
  %75 = vmatpush1.bf16.xpose.msra.mxu0 %v65
  %76 = vmatprep.subr.bf16.mxu0 0
  %77 = vmatpush1.bf16.xpose.msra.mxu0 %v68
  %78 = vmatprep.subr.bf16.mxu0 0
  %79 = vmatpush1.bf16.xpose.msra.mxu0 0
  %80 = vmatprep.subr.bf16.mxu0 0
  %81 = vmatpush1.bf16.xpose.msra.mxu0 0
  %82 = vmatprep.subr.bf16.mxu0 0
  %83 = vmatpush1.bf16.xpose.msra.mxu0 0
  %84 = vmatprep.subr.bf16.mxu0 0
  %85 = vmatpush1.bf16.xpose.msra.mxu0 0
  %86 = vmatprep.subr.bf16.mxu0 0
  %87 = vmatpush1.bf16.xpose.msra.mxu0 0
  %88 = vmatprep.subr.bf16.mxu0 0
  %89 = vmatpush1.bf16.xpose.msra.mxu0 0
  %90 = vmatprep.subr.bf16.mxu0 0
  %91 = vmatpush1.bf16.xpose.msra.mxu0 0
  %92 = vmatprep.subr.bf16.mxu0 0
  %93 = vmatpush1.bf16.xpose.msra.mxu0 0
  %94 = vmatprep.subr.bf16.mxu0 0
  %95 = vmatpush1.bf16.xpose.msra.mxu0 0
  %96 = vmatprep.subr.bf16.mxu0 0
  %97 = vmatpush1.bf16.xpose.msra.mxu0 0
  %98 = vmatprep.subr.bf16.mxu0 0
  %99 = vmatpush1.bf16.xpose.msra.mxu0 0
  %100 = vmatprep.subr.bf16.mxu0 0
  %101 = vmatpush1.bf16.xpose.msra.mxu0 0
  %102 = vmatprep.mubr.bf16.mxu0 0
  %103 = vmatmul.mubr.bf16.gmra.mrb[0].mxu0 %v56
  %v104 = vpop.f32.mrb[0].mxu0
  %v105 = vadd.f32 0.0, %v104
  %v106 = vpop.f32.mrb[0].mxu0
  %v107 = vpop.f32.mrb[0].mxu0
  %v108 = vpop.f32.mrb[0].mxu0
  %109 = vdwg.mxu0
  %v110 = vld [vmem:[%s2] sm:$0x3]
  %v111 = vld [vmem:[%s3] sm:$0x1]
  %113 = vset.pattern.permute.xlu0 0
  %114 = vperm.xlu0 %113, %v110
  %v115 = vpop.permute.xlu0 %114
  %v118 = vlaneseq
  %v119 = vshrl.u32 %v118, 7
  %v120 = vsub.s32 0, %v119
  %v121 = vrot.slane %v111, %v120
  %v123 = vadd.f32 %v115, %v121
  %v124 = vmul.f32 %v105, 2.0
  %v125 = vsub.f32 %v123, %v124
  %v126 = vmax.f32 %v125, 0.0
  %v127 = vlaneseq
  %v128 = vand.u32 %v127, 127
  %s129 = smul.u32 0, 64
  %v130 = vstv %s129
  %v131 = vadd.s32 %v128, %v130
  %133 = vrot.lane.b32.xlu0 %v126, 9
  %v134 = vpop.permute.xlu0 %133
  %vm136 = vcmask 590920
  %137 = vst.msk [vmem:[#allocation2] sm:$0x3] %vm136, %v134
  %138 = vrot.lane.b32.xlu0 %v131, 9
  %v139 = vpop.permute.xlu0 %138
  %140 = vst.msk [vmem:[#allocation3] sm:$0x3] %vm136, %v139
  %v141 = vld [vmem:[#allocation2] sm:$0x3]
  %v142 = vld [vmem:[#allocation3] sm:$0x3]
  %vm143 = vcmask 590848
  %v144 = vsel %vm143, %v141, inf
  %145 = vmin.xlane.f32.xlu0 %v144
  %v146 = vpop.xlane.xlu0 %145
  %vm147 = vcmp.le.f32.partialorder %v141, %v146
  %v148 = vsel %vm147, %v128, 2147483647
  %v149 = vsel %vm143, %v148, 2147483647
  %v150 = vand.u32 %v149, 65535
  %v151 = vshra.s32 %v149, 16
  %v152 = vcvt.s32.f32 %v150
  %v153 = vcvt.s32.f32 %v151
  %154 = vmin.xlane.f32.xlu0 %v153
  %v155 = vpop.xlane.xlu0 %154
  %vm156 = vcmp.eq.f32.partialorder %v153, %v155
  %v157 = vsel %vm156, %v152, inf
  %158 = vmin.xlane.f32.xlu0 %v157
  %v159 = vpop.xlane.xlu0 %158
  %v160 = vcvt.f32.s32 %v159
  %v161 = vcvt.f32.s32 %v155
  %v162 = vshll.u32 %v161, 16
  %v163 = vadd.s32 %v162, %v160
  %vm164 = vcmp.eq.s32.totalorder %v128, %v163
  %v165 = vsel %vm164, %v142, 0
  %v166 = vsel %vm143, %v165, 0
  %v167 = vand.u32 %v166, 65535
  %v168 = vshrl.u32 %v166, 16
  %v169 = vcvt.s32.f32 %v167
  %v170 = vcvt.s32.f32 %v168
  %171 = vadd.xlane.f32.xlu0 %v169
  %v172 = vpop.xlane.xlu0 %171
  %173 = vadd.xlane.f32.xlu0 %v170
  %v174 = vpop.xlane.xlu0 %173
  %v175 = vcvt.f32.s32 %v172
  %v176 = vcvt.f32.s32 %v174
  %v177 = vshll.u32 %v176, 16
  %v178 = vadd.s32 %v177, %v175
  %vm179 = vcmask 1024
  %180 = vst.msk [vmem:[#allocation2] sm:$0x3] %vm179, %v146
  %181 = vst.msk [vmem:[#allocation3] sm:$0x3] %vm179, %v178
  %v182 = vsel %vm164, inf, %v141
  %v183 = vsel %vm143, %v182, inf
  %184 = vmin.xlane.f32.xlu0 %v183
  %v185 = vpop.xlane.xlu0 %184
  %vm186 = vcmp.le.f32.partialorder %v182, %v185
  %v187 = vsel %vm186, %v128, 2147483647
  %v188 = vsel %vm143, %v187, 2147483647
  %v189 = vand.u32 %v188, 65535
  %v190 = vshra.s32 %v188, 16
  %v191 = vcvt.s32.f32 %v189
  %v192 = vcvt.s32.f32 %v190
  %193 = vmin.xlane.f32.xlu0 %v192
  %v194 = vpop.xlane.xlu0 %193
  %vm195 = vcmp.eq.f32.partialorder %v192, %v194
  %v196 = vsel %vm195, %v191, inf
  %197 = vmin.xlane.f32.xlu0 %v196
  %v198 = vpop.xlane.xlu0 %197
  %v199 = vcvt.f32.s32 %v198
  %v200 = vcvt.f32.s32 %v194
  %v201 = vshll.u32 %v200, 16
  %v202 = vadd.s32 %v201, %v199
  %vm203 = vcmp.eq.s32.totalorder %v128, %v202
  %v204 = vsel %vm203, %v142, 0
  %v205 = vsel %vm143, %v204, 0
  %v206 = vand.u32 %v205, 65535
  %v207 = vshrl.u32 %v205, 16
  %v208 = vcvt.s32.f32 %v206
  %v209 = vcvt.s32.f32 %v207
  %210 = vadd.xlane.f32.xlu0 %v208
  %v211 = vpop.xlane.xlu0 %210
  %212 = vadd.xlane.f32.xlu0 %v209
  %v213 = vpop.xlane.xlu0 %212
  %v214 = vcvt.f32.s32 %v211
  %v215 = vcvt.f32.s32 %v213
  %v216 = vshll.u32 %v215, 16
  %v217 = vadd.s32 %v216, %v214
  %vm218 = vcmask 9224
  %219 = vst.msk [vmem:[#allocation2] sm:$0x3] %vm218, %v185
  %220 = vst.msk [vmem:[#allocation3] sm:$0x3] %vm218, %v217
  %v221 = vsel %vm203, inf, %v182
  %v222 = vsel %vm143, %v221, inf
  %223 = vmin.xlane.f32.xlu0 %v222
  %v224 = vpop.xlane.xlu0 %223
  %vm225 = vcmp.le.f32.partialorder %v221, %v224
  %v226 = vsel %vm225, %v128, 2147483647
  %v227 = vsel %vm143, %v226, 2147483647
  %v228 = vand.u32 %v227, 65535
  %v229 = vshra.s32 %v227, 16
  %v230 = vcvt.s32.f32 %v228
  %v231 = vcvt.s32.f32 %v229
  %232 = vmin.xlane.f32.xlu0 %v231
  %v233 = vpop.xlane.xlu0 %232
  %vm234 = vcmp.eq.f32.partialorder %v231, %v233
  %v235 = vsel %vm234, %v230, inf
  %236 = vmin.xlane.f32.xlu0 %v235
  %v237 = vpop.xlane.xlu0 %236
  %v238 = vcvt.f32.s32 %v237
  %v239 = vcvt.f32.s32 %v233
  %v240 = vshll.u32 %v239, 16
  %v241 = vadd.s32 %v240, %v238
  %vm242 = vcmp.eq.s32.totalorder %v128, %v241
  %v243 = vsel %vm242, %v142, 0
  %v244 = vsel %vm143, %v243, 0
  %v245 = vand.u32 %v244, 65535
  %v246 = vshrl.u32 %v244, 16
  %v247 = vcvt.s32.f32 %v245
  %v248 = vcvt.s32.f32 %v246
  %249 = vadd.xlane.f32.xlu0 %v247
  %v250 = vpop.xlane.xlu0 %249
  %251 = vadd.xlane.f32.xlu0 %v248
  %v252 = vpop.xlane.xlu0 %251
  %v253 = vcvt.f32.s32 %v250
  %v254 = vcvt.f32.s32 %v252
  %v255 = vshll.u32 %v254, 16
  %v256 = vadd.s32 %v255, %v253
  %vm257 = vcmask 17424
  %258 = vst.msk [vmem:[#allocation2] sm:$0x3] %vm257, %v224
  %259 = vst.msk [vmem:[#allocation3] sm:$0x3] %vm257, %v256
  %v260 = vsel %vm242, inf, %v221
  %v261 = vsel %vm143, %v260, inf
  %262 = vmin.xlane.f32.xlu0 %v261
  %v263 = vpop.xlane.xlu0 %262
  %vm264 = vcmp.le.f32.partialorder %v260, %v263
  %v265 = vsel %vm264, %v128, 2147483647
  %v266 = vsel %vm143, %v265, 2147483647
  %v267 = vand.u32 %v266, 65535
  %v268 = vshra.s32 %v266, 16
  %v269 = vcvt.s32.f32 %v267
  %v270 = vcvt.s32.f32 %v268
  %271 = vmin.xlane.f32.xlu0 %v270
  %v272 = vpop.xlane.xlu0 %271
  %vm273 = vcmp.eq.f32.partialorder %v270, %v272
  %v274 = vsel %vm273, %v269, inf
  %275 = vmin.xlane.f32.xlu0 %v274
  %v276 = vpop.xlane.xlu0 %275
  %v277 = vcvt.f32.s32 %v276
  %v278 = vcvt.f32.s32 %v272
  %v279 = vshll.u32 %v278, 16
  %v280 = vadd.s32 %v279, %v277
  %vm281 = vcmp.eq.s32.totalorder %v128, %v280
  %v282 = vsel %vm281, %v142, 0
  %v283 = vsel %vm143, %v282, 0
  %v284 = vand.u32 %v283, 65535
  %v285 = vshrl.u32 %v283, 16
  %v286 = vcvt.s32.f32 %v284
  %v287 = vcvt.s32.f32 %v285
  %288 = vadd.xlane.f32.xlu0 %v286
  %v289 = vpop.xlane.xlu0 %288
  %290 = vadd.xlane.f32.xlu0 %v287
  %v291 = vpop.xlane.xlu0 %290
  %v292 = vcvt.f32.s32 %v289
  %v293 = vcvt.f32.s32 %v291
  %v294 = vshll.u32 %v293, 16
  %v295 = vadd.s32 %v294, %v292
  %vm296 = vcmask 25624
  %297 = vst.msk [vmem:[#allocation2] sm:$0x3] %vm296, %v263
  %298 = vst.msk [vmem:[#allocation3] sm:$0x3] %vm296, %v295
  %v299 = vsel %vm281, inf, %v260
  %v300 = vsel %vm143, %v299, inf
  %301 = vmin.xlane.f32.xlu0 %v300
  %v302 = vpop.xlane.xlu0 %301
  %vm303 = vcmp.le.f32.partialorder %v299, %v302
  %v304 = vsel %vm303, %v128, 2147483647
  %v305 = vsel %vm143, %v304, 2147483647
  %v306 = vand.u32 %v305, 65535
  %v307 = vshra.s32 %v305, 16
  %v308 = vcvt.s32.f32 %v306
  %v309 = vcvt.s32.f32 %v307
  %310 = vmin.xlane.f32.xlu0 %v309
  %v311 = vpop.xlane.xlu0 %310
  %vm312 = vcmp.eq.f32.partialorder %v309, %v311
  %v313 = vsel %vm312, %v308, inf
  %314 = vmin.xlane.f32.xlu0 %v313
  %v315 = vpop.xlane.xlu0 %314
  %v316 = vcvt.f32.s32 %v315
  %v317 = vcvt.f32.s32 %v311
  %v318 = vshll.u32 %v317, 16
  %v319 = vadd.s32 %v318, %v316
  %vm320 = vcmp.eq.s32.totalorder %v128, %v319
  %v321 = vsel %vm320, %v142, 0
  %v322 = vsel %vm143, %v321, 0
  %v323 = vand.u32 %v322, 65535
  %v324 = vshrl.u32 %v322, 16
  %v325 = vcvt.s32.f32 %v323
  %v326 = vcvt.s32.f32 %v324
  %327 = vadd.xlane.f32.xlu0 %v325
  %v328 = vpop.xlane.xlu0 %327
  %329 = vadd.xlane.f32.xlu0 %v326
  %v330 = vpop.xlane.xlu0 %329
  %v331 = vcvt.f32.s32 %v328
  %v332 = vcvt.f32.s32 %v330
  %v333 = vshll.u32 %v332, 16
  %v334 = vadd.s32 %v333, %v331
  %vm335 = vcmask 33824
  %336 = vst.msk [vmem:[#allocation2] sm:$0x3] %vm335, %v302
  %337 = vst.msk [vmem:[#allocation3] sm:$0x3] %vm335, %v334
  %v338 = vsel %vm320, inf, %v299
  %v339 = vsel %vm143, %v338, inf
  %340 = vmin.xlane.f32.xlu0 %v339
  %v341 = vpop.xlane.xlu0 %340
  %vm342 = vcmp.le.f32.partialorder %v338, %v341
  %v343 = vsel %vm342, %v128, 2147483647
  %v344 = vsel %vm143, %v343, 2147483647
  %v345 = vand.u32 %v344, 65535
  %v346 = vshra.s32 %v344, 16
  %v347 = vcvt.s32.f32 %v345
  %v348 = vcvt.s32.f32 %v346
  %349 = vmin.xlane.f32.xlu0 %v348
  %v350 = vpop.xlane.xlu0 %349
  %vm351 = vcmp.eq.f32.partialorder %v348, %v350
  %v352 = vsel %vm351, %v347, inf
  %353 = vmin.xlane.f32.xlu0 %v352
  %v354 = vpop.xlane.xlu0 %353
  %v355 = vcvt.f32.s32 %v354
  %v356 = vcvt.f32.s32 %v350
  %v357 = vshll.u32 %v356, 16
  %v358 = vadd.s32 %v357, %v355
  %vm359 = vcmp.eq.s32.totalorder %v128, %v358
  %v360 = vsel %vm359, %v142, 0
  %v361 = vsel %vm143, %v360, 0
  %v362 = vand.u32 %v361, 65535
  %v363 = vshrl.u32 %v361, 16
  %v364 = vcvt.s32.f32 %v362
  %v365 = vcvt.s32.f32 %v363
  %366 = vadd.xlane.f32.xlu0 %v364
  %v367 = vpop.xlane.xlu0 %366
  %368 = vadd.xlane.f32.xlu0 %v365
  %v369 = vpop.xlane.xlu0 %368
  %v370 = vcvt.f32.s32 %v367
  %v371 = vcvt.f32.s32 %v369
  %v372 = vshll.u32 %v371, 16
  %v373 = vadd.s32 %v372, %v370
  %vm374 = vcmask 42024
  %375 = vst.msk [vmem:[#allocation2] sm:$0x3] %vm374, %v341
  %376 = vst.msk [vmem:[#allocation3] sm:$0x3] %vm374, %v373
  %v377 = vsel %vm359, inf, %v338
  %v378 = vsel %vm143, %v377, inf
  %379 = vmin.xlane.f32.xlu0 %v378
  %v380 = vpop.xlane.xlu0 %379
  %vm381 = vcmp.le.f32.partialorder %v377, %v380
  %v382 = vsel %vm381, %v128, 2147483647
  %v383 = vsel %vm143, %v382, 2147483647
  %v384 = vand.u32 %v383, 65535
  %v385 = vshra.s32 %v383, 16
  %v386 = vcvt.s32.f32 %v384
  %v387 = vcvt.s32.f32 %v385
  %388 = vmin.xlane.f32.xlu0 %v387
  %v389 = vpop.xlane.xlu0 %388
  %vm390 = vcmp.eq.f32.partialorder %v387, %v389
  %v391 = vsel %vm390, %v386, inf
  %392 = vmin.xlane.f32.xlu0 %v391
  %v393 = vpop.xlane.xlu0 %392
  %v394 = vcvt.f32.s32 %v393
  %v395 = vcvt.f32.s32 %v389
  %v396 = vshll.u32 %v395, 16
  %v397 = vadd.s32 %v396, %v394
  %vm398 = vcmp.eq.s32.totalorder %v128, %v397
  %v399 = vsel %vm398, %v142, 0
  %v400 = vsel %vm143, %v399, 0
  %v401 = vand.u32 %v400, 65535
  %v402 = vshrl.u32 %v400, 16
  %v403 = vcvt.s32.f32 %v401
  %v404 = vcvt.s32.f32 %v402
  %405 = vadd.xlane.f32.xlu0 %v403
  %v406 = vpop.xlane.xlu0 %405
  %407 = vadd.xlane.f32.xlu0 %v404
  %v408 = vpop.xlane.xlu0 %407
  %v409 = vcvt.f32.s32 %v406
  %v410 = vcvt.f32.s32 %v408
  %v411 = vshll.u32 %v410, 16
  %v412 = vadd.s32 %v411, %v409
  %vm413 = vcmask 50224
  %414 = vst.msk [vmem:[#allocation2] sm:$0x3] %vm413, %v380
  %415 = vst.msk [vmem:[#allocation3] sm:$0x3] %vm413, %v412
  %v416 = vsel %vm398, inf, %v377
  %v417 = vsel %vm143, %v416, inf
  %418 = vmin.xlane.f32.xlu0 %v417
  %v419 = vpop.xlane.xlu0 %418
  %vm420 = vcmp.le.f32.partialorder %v416, %v419
  %v421 = vsel %vm420, %v128, 2147483647
  %v422 = vsel %vm143, %v421, 2147483647
  %v423 = vand.u32 %v422, 65535
  %v424 = vshra.s32 %v422, 16
  %v425 = vcvt.s32.f32 %v423
  %v426 = vcvt.s32.f32 %v424
  %427 = vmin.xlane.f32.xlu0 %v426
  %v428 = vpop.xlane.xlu0 %427
  %vm429 = vcmp.eq.f32.partialorder %v426, %v428
  %v430 = vsel %vm429, %v425, inf
  %431 = vmin.xlane.f32.xlu0 %v430
  %v432 = vpop.xlane.xlu0 %431
  %v433 = vcvt.f32.s32 %v432
  %v434 = vcvt.f32.s32 %v428
  %v435 = vshll.u32 %v434, 16
  %v436 = vadd.s32 %v435, %v433
  %vm437 = vcmp.eq.s32.totalorder %v128, %v436
  %v438 = vsel %vm437, %v142, 0
  %v439 = vsel %vm143, %v438, 0
  %v440 = vand.u32 %v439, 65535
  %v441 = vshrl.u32 %v439, 16
  %v442 = vcvt.s32.f32 %v440
  %v443 = vcvt.s32.f32 %v441
  %444 = vadd.xlane.f32.xlu0 %v442
  %v445 = vpop.xlane.xlu0 %444
  %446 = vadd.xlane.f32.xlu0 %v443
  %v447 = vpop.xlane.xlu0 %446
  %v448 = vcvt.f32.s32 %v445
  %v449 = vcvt.f32.s32 %v447
  %v450 = vshll.u32 %v449, 16
  %v451 = vadd.s32 %v450, %v448
  %vm452 = vcmask 58424
  %453 = vst.msk [vmem:[#allocation2] sm:$0x3] %vm452, %v419
  %454 = vst.msk [vmem:[#allocation3] sm:$0x3] %vm452, %v451
  %v455 = vsel %vm437, inf, %v416
  %v456 = vsel %vm143, %v455, inf
  %457 = vmin.xlane.f32.xlu0 %v456
  %v458 = vpop.xlane.xlu0 %457
  %vm459 = vcmp.le.f32.partialorder %v455, %v458
  %v460 = vsel %vm459, %v128, 2147483647
  %v461 = vsel %vm143, %v460, 2147483647
  %v462 = vand.u32 %v461, 65535
  %v463 = vshra.s32 %v461, 16
  %v464 = vcvt.s32.f32 %v462
  %v465 = vcvt.s32.f32 %v463
  %466 = vmin.xlane.f32.xlu0 %v465
  %v467 = vpop.xlane.xlu0 %466
  %vm468 = vcmp.eq.f32.partialorder %v465, %v467
  %v469 = vsel %vm468, %v464, inf
  %470 = vmin.xlane.f32.xlu0 %v469
  %v471 = vpop.xlane.xlu0 %470
  %v472 = vcvt.f32.s32 %v471
  %v473 = vcvt.f32.s32 %v467
  %v474 = vshll.u32 %v473, 16
  %v475 = vadd.s32 %v474, %v472
  %vm476 = vcmp.eq.s32.totalorder %v128, %v475
  %v477 = vsel %vm476, %v142, 0
  %v478 = vsel %vm143, %v477, 0
  %v479 = vand.u32 %v478, 65535
  %v480 = vshrl.u32 %v478, 16
  %v481 = vcvt.s32.f32 %v479
  %v482 = vcvt.s32.f32 %v480
  %483 = vadd.xlane.f32.xlu0 %v481
  %v484 = vpop.xlane.xlu0 %483
  %485 = vadd.xlane.f32.xlu0 %v482
  %v486 = vpop.xlane.xlu0 %485
  %v487 = vcvt.f32.s32 %v484
  %v488 = vcvt.f32.s32 %v486
  %v489 = vshll.u32 %v488, 16
  %v490 = vadd.s32 %v489, %v487
  %vm491 = vcmask 66624
  %492 = vst.msk [vmem:[#allocation2] sm:$0x3] %vm491, %v458
  %493 = vst.msk [vmem:[#allocation3] sm:$0x3] %vm491, %v490
  // Predicated region
  $region22: #{_lambda_.8} parent=0 // pred_check
    %p494 = pneg %p18
  $region23: #{_lambda_.8} parent=0 // pred_check_branch
    %496 = sbr.rel (%p494) target = $region25
  $region24: #{_lambda_.8} parent=0 // pred_region
    %v497 = vld [vmem:[#allocation3] sm:$0x3]
    %vm498 = vcmask 66560
    %499 = vst.msk [vmem:[%s4] sm:$0x3] %vm498, %v497
  $region25: #{_lambda_.8} parent=0 // pred_fallthru
    _
  // Predicated region
  $region26: #{_lambda_.8} parent=0 // pred_check
    _
  $region27: #{_lambda_.8} parent=0 // pred_check_branch
    %501 = sbr.rel (0) target = $region29
  $region28: #{_lambda_.8} parent=0 // pred_region
    _
  $region29: #{_lambda_.8} parent=0 // pred_fallthru
    _
  // Predicated region
  $region30: #{_lambda_.8} parent=0 // pred_check
    _
  $region31: #{_lambda_.8} parent=0 // pred_check_branch
    %503 = sbr.rel (0) target = $region33
  $region32: #{_lambda_.8} parent=0 // pred_region
    _
  $region33: #{_lambda_.8} parent=0 // pred_fallthru
    _

// kernel: _lambda_.9
$region0: #{_lambda_.9}
  #allocation0 [shape = 'u32[]', space=smem, size = 0x4, offset = 0x4, fixed_abs, tag = 'smem constant byte address 0x4 - core index']
  #allocation1 [shape = 'u32[144,128]{1,0:T(1,128)}', space=vmem, size = 0x12000, scoped, tag = 'internal scratch']
  %s0 = inlined_call_operand.vmem [shape: f32[8,16], index: 0, kind: input, shape index: {}]
  %s1 = inlined_call_operand.vmem [shape: f32[64,8], index: 1, kind: input, shape index: {}]
  %s2 = inlined_call_operand.vmem [shape: f32[16,128], index: 2, kind: input, shape index: {}]
  %s3 = inlined_call_operand.vmem [shape: f32[64,128], index: 3, kind: output, shape index: {}]
  %s4 = sld [smem:[#allocation0]]
  $region22: #{_lambda_.9} parent=0
    _
  %s6 = ssub.s32 1, %s4
  %s7 = scalar_select 0, %s6, %s4
  // Predicated region
  $region2: #{_lambda_.9} parent=0 // pred_check
    _
  $region3: #{_lambda_.9} parent=0 // pred_check_branch
    %9 = sbr.rel (0) target = $region5
  $region4: #{_lambda_.9} parent=0 // pred_region
    _
  $region5: #{_lambda_.9} parent=0 // pred_fallthru
    _
  // Predicated region
  $region6: #{_lambda_.9} parent=0 // pred_check
    _
  $region7: #{_lambda_.9} parent=0 // pred_check_branch
    %11 = sbr.rel (0) target = $region9
  $region8: #{_lambda_.9} parent=0 // pred_region
    _
  $region9: #{_lambda_.9} parent=0 // pred_fallthru
    _
  // Predicated region
  $region10: #{_lambda_.9} parent=0 // pred_check
    _
  $region11: #{_lambda_.9} parent=0 // pred_check_branch
    %13 = sbr.rel (0) target = $region13
  $region12: #{_lambda_.9} parent=0 // pred_region
    _
  $region13: #{_lambda_.9} parent=0 // pred_fallthru
    _
  %v14 = vld [vmem:[%s1] sm:$0xff]
  %v15 = vld [vmem:[%s1 + $0x8] sm:$0xff]
  %v16 = vld [vmem:[%s1 + $0x10] sm:$0xff]
  %v17 = vld [vmem:[%s1 + $0x18] sm:$0xff]
  %v18 = vld [vmem:[%s1 + $0x20] sm:$0xff]
  %v19 = vld [vmem:[%s1 + $0x28] sm:$0xff]
  %v20 = vld [vmem:[%s1 + $0x30] sm:$0xff]
  %v21 = vld [vmem:[%s1 + $0x38] sm:$0xff]
  %v22 = vld [vmem:[%s0] sm:$0xff]
  %vm23 = vcmask 64512
  %v25 = vsel %vm23, %v14, 0
  %v28 = vsel %vm23, %v15, 0
  %v31 = vsel %vm23, %v16, 0
  %v34 = vsel %vm23, %v17, 0
  %v37 = vsel %vm23, %v18, 0
  %v40 = vsel %vm23, %v19, 0
  %v43 = vsel %vm23, %v20, 0
  %v46 = vsel %vm23, %v21, 0
  %48 = vmatprep.subr.mxu0 0.0
  %49 = vmatpush1.msra.mxu0 %v22
  %50 = vmatprep.subr.mxu0 0.0
  %51 = vmatpush1.msra.mxu0 0.0
  %52 = vmatprep.subr.mxu0 0.0
  %53 = vmatpush1.msra.mxu0 0.0
  %54 = vmatprep.subr.mxu0 0.0
  %55 = vmatpush1.msra.mxu0 0.0
  %56 = vmatprep.subr.mxu0 0.0
  %57 = vmatpush1.msra.mxu0 0.0
  %58 = vmatprep.subr.mxu0 0.0
  %59 = vmatpush1.msra.mxu0 0.0
  %60 = vmatprep.subr.mxu0 0.0
  %61 = vmatpush1.msra.mxu0 0.0
  %62 = vmatprep.subr.mxu0 0.0
  %63 = vmatpush1.msra.mxu0 0.0
  %64 = vmatprep.subr.mxu0 0.0
  %65 = vmatpush1.msra.mxu0 0.0
  %66 = vmatprep.subr.mxu0 0.0
  %67 = vmatpush1.msra.mxu0 0.0
  %68 = vmatprep.subr.mxu0 0.0
  %69 = vmatpush1.msra.mxu0 0.0
  %70 = vmatprep.subr.mxu0 0.0
  %71 = vmatpush1.msra.mxu0 0.0
  %72 = vmatprep.subr.mxu0 0.0
  %73 = vmatpush1.msra.mxu0 0.0
  %74 = vmatprep.subr.mxu0 0.0
  %75 = vmatpush1.msra.mxu0 0.0
  %76 = vmatprep.subr.mxu0 0.0
  %77 = vmatpush1.msra.mxu0 0.0
  %78 = vmatprep.subr.mxu0 0.0
  %79 = vmatpush1.msra.mxu0 0.0
  %80 = vmatprep.subr.mxu0 0.0
  %81 = vmatpush1.msra.mxu0 0.0
  %82 = vmatprep.subr.mxu0 0.0
  %83 = vmatpush1.msra.mxu0 0.0
  %84 = vmatprep.subr.mxu0 0.0
  %85 = vmatpush1.msra.mxu0 0.0
  %86 = vmatprep.subr.mxu0 0.0
  %87 = vmatpush1.msra.mxu0 0.0
  %88 = vmatprep.subr.mxu0 0.0
  %89 = vmatpush1.msra.mxu0 0.0
  %90 = vmatprep.subr.mxu0 0.0
  %91 = vmatpush1.msra.mxu0 0.0
  %92 = vmatprep.subr.mxu0 0.0
  %93 = vmatpush1.msra.mxu0 0.0
  %94 = vmatprep.subr.mxu0 0.0
  %95 = vmatpush1.msra.mxu0 0.0
  %96 = vmatprep.subr.mxu0 0.0
  %97 = vmatpush1.msra.mxu0 0.0
  %98 = vmatprep.subr.mxu0 0.0
  %99 = vmatpush1.msra.mxu0 0.0
  %100 = vmatprep.subr.mxu0 0.0
  %101 = vmatpush1.msra.mxu0 0.0
  %102 = vmatprep.subr.mxu0 0.0
  %103 = vmatpush1.msra.mxu0 0.0
  %104 = vmatprep.subr.mxu0 0.0
  %105 = vmatpush1.msra.mxu0 0.0
  %106 = vmatprep.subr.mxu0 0.0
  %107 = vmatpush1.msra.mxu0 0.0
  %108 = vmatprep.subr.mxu0 0.0
  %109 = vmatpush1.msra.mxu0 0.0
  %110 = vmatprep.subr.mxu0 0.0
  %111 = vmatpush1.msra.mxu0 0.0
  %112 = vmatprep.mubr.f32.mxu0 0.0
  %113 = vmatmul.mubr.f32.gmra.mrb[0].mxu0 %v25
  %v114 = vpop.f32.mrb[0].mxu0
  %v115 = vadd.f32 0.0, %v114
  %v116 = vpop.f32.mrb[0].mxu0
  %117 = vmatprep.mubr.f32.mxu0 0.0
  %118 = vmatmul.mubr.f32.gmra.mrb[0].mxu0 %v28
  %v119 = vpop.f32.mrb[0].mxu0
  %v120 = vadd.f32 0.0, %v119
  %v121 = vpop.f32.mrb[0].mxu0
  %122 = vmatprep.mubr.f32.mxu0 0.0
  %123 = vmatmul.mubr.f32.gmra.mrb[0].mxu0 %v31
  %v124 = vpop.f32.mrb[0].mxu0
  %v125 = vadd.f32 0.0, %v124
  %v126 = vpop.f32.mrb[0].mxu0
  %127 = vmatprep.mubr.f32.mxu0 0.0
  %128 = vmatmul.mubr.f32.gmra.mrb[0].mxu0 %v34
  %v129 = vpop.f32.mrb[0].mxu0
  %v130 = vadd.f32 0.0, %v129
  %v131 = vpop.f32.mrb[0].mxu0
  %132 = vmatprep.mubr.f32.mxu0 0.0
  %133 = vmatmul.mubr.f32.gmra.mrb[0].mxu0 %v37
  %v134 = vpop.f32.mrb[0].mxu0
  %v135 = vadd.f32 0.0, %v134
  %v136 = vpop.f32.mrb[0].mxu0
  %137 = vmatprep.mubr.f32.mxu0 0.0
  %138 = vmatmul.mubr.f32.gmra.mrb[0].mxu0 %v40
  %v139 = vpop.f32.mrb[0].mxu0
  %v140 = vadd.f32 0.0, %v139
  %v141 = vpop.f32.mrb[0].mxu0
  %142 = vmatprep.mubr.f32.mxu0 0.0
  %143 = vmatmul.mubr.f32.gmra.mrb[0].mxu0 %v43
  %v144 = vpop.f32.mrb[0].mxu0
  %v145 = vadd.f32 0.0, %v144
  %v146 = vpop.f32.mrb[0].mxu0
  %147 = vmatprep.mubr.f32.mxu0 0.0
  %148 = vmatmul.mubr.f32.gmra.mrb[0].mxu0 %v46
  %v149 = vpop.f32.mrb[0].mxu0
  %v150 = vadd.f32 0.0, %v149
  %v151 = vpop.f32.mrb[0].mxu0
  %152 = vdwg.mxu0
  %v153 = vld [vmem:[%s2] sm:$0xff]
  %v154 = vld [vmem:[%s2 + $0x8] sm:$0xff]
  %vm155 = vcmask 130048
  %v157 = vsel %vm155, %v115, 0
  %v160 = vsel %vm155, %v120, 0
  %v163 = vsel %vm155, %v125, 0
  %v166 = vsel %vm155, %v130, 0
  %v169 = vsel %vm155, %v135, 0
  %v172 = vsel %vm155, %v140, 0
  %v175 = vsel %vm155, %v145, 0
  %v178 = vsel %vm155, %v150, 0
  %180 = vmatprep.subr.mxu0 0.0
  %181 = vmatpush1.msra.mxu0 %v153
  %182 = vmatprep.subr.mxu0 0.0
  %183 = vmatpush1.msra.mxu0 %v154
  %184 = vmatprep.subr.mxu0 0.0
  %185 = vmatpush1.msra.mxu0 0.0
  %186 = vmatprep.subr.mxu0 0.0
  %187 = vmatpush1.msra.mxu0 0.0
  %188 = vmatprep.subr.mxu0 0.0
  %189 = vmatpush1.msra.mxu0 0.0
  %190 = vmatprep.subr.mxu0 0.0
  %191 = vmatpush1.msra.mxu0 0.0
  %192 = vmatprep.subr.mxu0 0.0
  %193 = vmatpush1.msra.mxu0 0.0
  %194 = vmatprep.subr.mxu0 0.0
  %195 = vmatpush1.msra.mxu0 0.0
  %196 = vmatprep.subr.mxu0 0.0
  %197 = vmatpush1.msra.mxu0 0.0
  %198 = vmatprep.subr.mxu0 0.0
  %199 = vmatpush1.msra.mxu0 0.0
  %200 = vmatprep.subr.mxu0 0.0
  %201 = vmatpush1.msra.mxu0 0.0
  %202 = vmatprep.subr.mxu0 0.0
  %203 = vmatpush1.msra.mxu0 0.0
  %204 = vmatprep.subr.mxu0 0.0
  %205 = vmatpush1.msra.mxu0 0.0
  %206 = vmatprep.subr.mxu0 0.0
  %207 = vmatpush1.msra.mxu0 0.0
  %208 = vmatprep.subr.mxu0 0.0
  %209 = vmatpush1.msra.mxu0 0.0
  %210 = vmatprep.subr.mxu0 0.0
  %211 = vmatpush1.msra.mxu0 0.0
  %212 = vmatprep.subr.mxu0 0.0
  %213 = vmatpush1.msra.mxu0 0.0
  %214 = vmatprep.subr.mxu0 0.0
  %215 = vmatpush1.msra.mxu0 0.0
  %216 = vmatprep.subr.mxu0 0.0
  %217 = vmatpush1.msra.mxu0 0.0
  %218 = vmatprep.subr.mxu0 0.0
  %219 = vmatpush1.msra.mxu0 0.0
  %220 = vmatprep.subr.mxu0 0.0
  %221 = vmatpush1.msra.mxu0 0.0
  %222 = vmatprep.subr.mxu0 0.0
  %223 = vmatpush1.msra.mxu0 0.0
  %224 = vmatprep.subr.mxu0 0.0
  %225 = vmatpush1.msra.mxu0 0.0
  %226 = vmatprep.subr.mxu0 0.0
  %227 = vmatpush1.msra.mxu0 0.0
  %228 = vmatprep.subr.mxu0 0.0
  %229 = vmatpush1.msra.mxu0 0.0
  %230 = vmatprep.subr.mxu0 0.0
  %231 = vmatpush1.msra.mxu0 0.0
  %232 = vmatprep.subr.mxu0 0.0
  %233 = vmatpush1.msra.mxu0 0.0
  %234 = vmatprep.subr.mxu0 0.0
  %235 = vmatpush1.msra.mxu0 0.0
  %236 = vmatprep.subr.mxu0 0.0
  %237 = vmatpush1.msra.mxu0 0.0
  %238 = vmatprep.subr.mxu0 0.0
  %239 = vmatpush1.msra.mxu0 0.0
  %240 = vmatprep.subr.mxu0 0.0
  %241 = vmatpush1.msra.mxu0 0.0
  %242 = vmatprep.subr.mxu0 0.0
  %243 = vmatpush1.msra.mxu0 0.0
  %244 = vmatprep.mubr.f32.mxu0 0.0
  %245 = vmatmul.mubr.f32.gmra.mrb[0].mxu0 %v157
  %v246 = vpop.f32.mrb[0].mxu0
  %v247 = vadd.f32 0.0, %v246
  %v248 = vpop.f32.mrb[0].mxu0
  %249 = vmatprep.mubr.f32.mxu0 0.0
  %250 = vmatmul.mubr.f32.gmra.mrb[0].mxu0 %v160
  %v251 = vpop.f32.mrb[0].mxu0
  %v252 = vadd.f32 0.0, %v251
  %v253 = vpop.f32.mrb[0].mxu0
  %254 = vmatprep.mubr.f32.mxu0 0.0
  %255 = vmatmul.mubr.f32.gmra.mrb[0].mxu0 %v163
  %v256 = vpop.f32.mrb[0].mxu0
  %v257 = vadd.f32 0.0, %v256
  %v258 = vpop.f32.mrb[0].mxu0
  %259 = vmatprep.mubr.f32.mxu0 0.0
  %260 = vmatmul.mubr.f32.gmra.mrb[0].mxu0 %v166
  %v261 = vpop.f32.mrb[0].mxu0
  %v262 = vadd.f32 0.0, %v261
  %v263 = vpop.f32.mrb[0].mxu0
  %264 = vmatprep.mubr.f32.mxu0 0.0
  %265 = vmatmul.mubr.f32.gmra.mrb[0].mxu0 %v169
  %v266 = vpop.f32.mrb[0].mxu0
  %v267 = vadd.f32 0.0, %v266
  %v268 = vpop.f32.mrb[0].mxu0
  %269 = vmatprep.mubr.f32.mxu0 0.0
  %270 = vmatmul.mubr.f32.gmra.mrb[0].mxu0 %v172
  %v271 = vpop.f32.mrb[0].mxu0
  %v272 = vadd.f32 0.0, %v271
  %v273 = vpop.f32.mrb[0].mxu0
  %274 = vmatprep.mubr.f32.mxu0 0.0
  %275 = vmatmul.mubr.f32.gmra.mrb[0].mxu0 %v175
  %v276 = vpop.f32.mrb[0].mxu0
  %v277 = vadd.f32 0.0, %v276
  %v278 = vpop.f32.mrb[0].mxu0
  %279 = vmatprep.mubr.f32.mxu0 0.0
  %280 = vmatmul.mubr.f32.gmra.mrb[0].mxu0 %v178
  %v281 = vpop.f32.mrb[0].mxu0
  %v282 = vadd.f32 0.0, %v281
  %v283 = vpop.f32.mrb[0].mxu0
  %284 = vdwg.mxu0
  %285 = vst [vmem:[%s3] sm:$0xff] %v247
  %286 = vst [vmem:[%s3 + $0x8] sm:$0xff] %v252
  %287 = vst [vmem:[%s3 + $0x10] sm:$0xff] %v257
  %288 = vst [vmem:[%s3 + $0x18] sm:$0xff] %v262
  %289 = vst [vmem:[%s3 + $0x20] sm:$0xff] %v267
  %290 = vst [vmem:[%s3 + $0x28] sm:$0xff] %v272
  %291 = vst [vmem:[%s3 + $0x30] sm:$0xff] %v277
  %292 = vst [vmem:[%s3 + $0x38] sm:$0xff] %v282
  // Predicated region
  $region14: #{_lambda_.9} parent=0 // pred_check
    _
  $region15: #{_lambda_.9} parent=0 // pred_check_branch
    %294 = sbr.rel (0) target = $region17
  $region16: #{_lambda_.9} parent=0 // pred_region
    _
  $region17: #{_lambda_.9} parent=0 // pred_fallthru
    _
  // Predicated region
  $region18: #{_lambda_.9} parent=0 // pred_check
    _
  $region19: #{_lambda_.9} parent=0 // pred_check_branch
    %296 = sbr.rel (0) target = $region21
  $region20: #{_lambda_.9} parent=0 // pred_region
    _
  $region21: #{_lambda_.9} parent=0 // pred_fallthru
    _

</llo_original>
